<compile_context>
chip_gen: v7x
topology: tpu7x:2x2x1
jax: 0.10.0
libtpu: 0.0.40
codegen_flags: <defaults>
</compile_context>

<pallas_src>
import functools

import jax
import jax.numpy as jnp
from jax.experimental import pallas as pl
from jax.experimental.pallas import tpu as pltpu

EPS = 1e-4          # nn.BatchNorm2d(..., eps=0.0001)
NEG_SLOPE = 0.01    # F.leaky_relu default negative slope


# ----------------------------- Pallas kernels ------------------------------

def _conv_bn_lrelu_pool_kernel(w_ref, p_ref, o_ref, *, inv_m):
    """Fused conv(matmul) + BatchNorm(batch stats) + LeakyReLU + 2x2 maxpool.

    w_ref: (Cblk, K)   bf16  conv weights for this output-channel block
    p_ref: (4, K, Q)   bf16  im2col patches; axis 0 = (hp, wp) pool parity
    o_ref: (Cblk, Q)   f32   pooled activations, channel-major, Q = N*Hp*Wp
    inv_m = 1 / (4*Q) = 1 / (N*Ho*Wo)
    """
    w = w_ref[...]
    # Four MXU matmuls, one per corner of the 2x2 pooling window.
    y0 = jnp.dot(w, p_ref[0], preferred_element_type=jnp.float32)
    y1 = jnp.dot(w, p_ref[1], preferred_element_type=jnp.float32)
    y2 = jnp.dot(w, p_ref[2], preferred_element_type=jnp.float32)
    y3 = jnp.dot(w, p_ref[3], preferred_element_type=jnp.float32)

    # Per-channel batch statistics over the FULL pre-pool conv output
    # (biased variance, matching PyTorch training-mode BatchNorm).
    mean = (jnp.sum(y0, axis=1, keepdims=True)
            + jnp.sum(y1, axis=1, keepdims=True)
            + jnp.sum(y2, axis=1, keepdims=True)
            + jnp.sum(y3, axis=1, keepdims=True)) * inv_m
    d0 = y0 - mean
    d1 = y1 - mean
    d2 = y2 - mean
    d3 = y3 - mean
    var = (jnp.sum(d0 * d0, axis=1, keepdims=True)
           + jnp.sum(d1 * d1, axis=1, keepdims=True)
           + jnp.sum(d2 * d2, axis=1, keepdims=True)
           + jnp.sum(d3 * d3, axis=1, keepdims=True)) * inv_m

    # Pool first (max commutes with the monotone per-channel BN scale and
    # LeakyReLU), then normalize only the pooled quarter of the data.
    pooled = jnp.maximum(jnp.maximum(y0, y1), jnp.maximum(y2, y3))
    xn = (pooled - mean) * jax.lax.rsqrt(var + EPS)
    o_ref[...] = jnp.where(xn >= 0, xn, NEG_SLOPE * xn)


def conv_bn_lrelu_pool(p4, w2d, *, c_block):
    """p4: (4, K, Q) bf16, w2d: (Cout, K) bf16 -> (Cout, Q) f32."""
    _, k_dim, q_dim = p4.shape
    cout = w2d.shape[0]
    assert cout % c_block == 0 and c_block % 8 == 0
    kernel = functools.partial(_conv_bn_lrelu_pool_kernel,
                               inv_m=1.0 / (4.0 * q_dim))
    return pl.pallas_call(
        kernel,
        out_shape=jax.ShapeDtypeStruct((cout, q_dim), jnp.float32),
        grid=(cout // c_block,),
        in_specs=[
            pl.BlockSpec((c_block, k_dim), lambda i: (i, 0)),
            pl.BlockSpec((4, k_dim, q_dim), lambda i: (0, 0, 0)),
        ],
        out_specs=pl.BlockSpec((c_block, q_dim), lambda i: (i, 0)),
        compiler_params=pltpu.CompilerParams(
            dimension_semantics=("parallel",)),
    )(w2d, p4)


def _matmul_bias_kernel(x_ref, w_ref, b_ref, o_ref):
    o_ref[...] = (
        jnp.dot(x_ref[...], w_ref[...], preferred_element_type=jnp.float32)
        + b_ref[...]
    )


def linear(x, w, b):
    """x: (M, K) @ w: (K, Nout) + b: (1, Nout) -> (M, Nout) f32 (bf16 MXU ops)."""
    m_dim, k_dim = x.shape
    n_out = w.shape[1]
    return pl.pallas_call(
        _matmul_bias_kernel,
        out_shape=jax.ShapeDtypeStruct((m_dim, n_out), jnp.float32),
        in_specs=[
            pl.BlockSpec((m_dim, k_dim), lambda: (0, 0)),
            pl.BlockSpec((k_dim, n_out), lambda: (0, 0)),
            pl.BlockSpec((1, n_out), lambda: (0, 0)),
        ],
        out_specs=pl.BlockSpec((m_dim, n_out), lambda: (0, 0)),
    )(x.astype(jnp.bfloat16), w.astype(jnp.bfloat16), b)


# ------------------------------- Glue (XLA) ---------------------------------

def _pool_parity_patches(x_nchw, kh, kw):
    """im2col patches grouped by 2x2-pool parity.

    Returns (p, Hp, Wp) with p of shape (4, Cin*kh*kw, N*Hp*Wp), axis 0 ordered
    (hp, wp) of the pooling window, columns ordered (n, ho2, wo2).  The K axis
    is ordered (cin, kh, kw), matching PyTorch's weight.view(Cout, -1).
    """
    n, c, h, w = x_nchw.shape
    ho, wo = h - kh + 1, w - kw + 1
    hp, wp = ho // 2, wo // 2
    k = c * kh * kw
    patches = jax.lax.conv_general_dilated_patches(
        x_nchw, (kh, kw), (1, 1), "VALID")            # (N, K, Ho, Wo)
    p = patches.reshape(n, k, hp, 2, wp, 2)           # split (ho2,hp),(wo2,wp)
    p = jnp.transpose(p, (3, 5, 1, 0, 2, 4))          # (hp, wp, K, N, Hp, Wp)
    return p.reshape(4, k, n * hp * wp), hp, wp


def encoder_forward(x, params):
    n = x.shape[0]

    # layer 1: conv(3->64, 5x5) + bn1 + leaky_relu + maxpool(2,2)  (one kernel)
    p1, hp1, wp1 = _pool_parity_patches(x.astype(jnp.bfloat16), 5, 5)
    w1 = params["w1"].reshape(64, -1).astype(jnp.bfloat16)
    y1 = conv_bn_lrelu_pool(p1, w1, c_block=32)       # (64, N*14*14)

    # layer 2: conv(64->32, 5x5) + bn2 + leaky_relu + maxpool(2,2) (one kernel)
    x2 = jnp.transpose(
        y1.astype(jnp.bfloat16).reshape(64, n, hp1, wp1), (1, 0, 2, 3))  # NCHW
    p2, hp2, wp2 = _pool_parity_patches(x2, 5, 5)
    w2 = params["w2"].reshape(32, -1).astype(jnp.bfloat16)
    y2 = conv_bn_lrelu_pool(p2, w2, c_block=16)       # (32, N*5*5)

    # flatten in PyTorch NCHW order, then Linear(800 -> 128)
    flat = jnp.transpose(
        y2.reshape(32, n, hp2, wp2), (1, 0, 2, 3)).reshape(n, -1)   # (N, 800)
    return linear(flat, params["wl"], params["bl"].reshape(1, -1))  # (N, 128)


def init_params(key):
    # Deterministic init mimicking PyTorch default: U(-1/sqrt(fan_in), +1/sqrt(fan_in)).
    ks = jax.random.split(key, 6)

    def u(k, shape, fan_in):
        bound = 1.0 / float(fan_in) ** 0.5
        return jax.random.uniform(k, shape, jnp.float32, -bound, bound)

    return dict(
        w1=u(ks[0], (64, 3, 5, 5), 3 * 25),
        b1=u(ks[1], (64,), 3 * 25),     # unused: cancels under no-affine batch-stat BN
        w2=u(ks[2], (32, 64, 5, 5), 64 * 25),
        b2=u(ks[3], (32,), 64 * 25),    # unused: cancels under no-affine batch-stat BN
        wl=u(ks[4], (800, 128), 800),
        bl=u(ks[5], (128,), 800),
    )


if __name__ == "__main__":
    key = jax.random.PRNGKey(0)
    pkey, xkey = jax.random.split(key)
    params = init_params(pkey)

    # CIFAR10-shaped input (32x32 spatial is required by Linear(800, 128)); batch=2.
    x = jax.random.normal(xkey, (2, 3, 32, 32), jnp.float32)

    fwd = jax.jit(lambda inp: encoder_forward(inp, params))
    out = fwd(x)
    jax.block_until_ready(out)
    assert out.shape == (2, 128) and out.dtype == jnp.float32
    print("KERNEL_OK")
</pallas_src>

<mosaic_0001>
module attributes {stable_mosaic.version = 11 : i64} {
  func.func @_conv_bn_lrelu_pool_kernel(%arg0: i32, %arg1: memref<32x75xbf16, #tpu.memory_space<vmem>>, %arg2: memref<4x75x392xbf16, #tpu.memory_space<vmem>>, %arg3: memref<32x392xf32, #tpu.memory_space<vmem>>) attributes {dimension_semantics = [#tpu.dimension_semantics<parallel>], iteration_bounds = array<i64: 2>, scalar_prefetch = 0 : i64, scratch_operands = 0 : i64, tpu.core_type = #tpu.core_type<tc>, window_params = [{transform_indices = @transform_0, window_bounds = array<i64: 32, 75>}, {pipeline_mode = #tpu.pipeline_mode<synchronous>, transform_indices = @transform_1, window_bounds = array<i64: 4, 75, 392>}, {transform_indices = @transform_2, window_bounds = array<i64: 32, 392>}]} {
    %c0 = arith.constant 0 : index
    %c0_0 = arith.constant 0 : index
    %0 = vector.load %arg1[%c0, %c0_0] : memref<32x75xbf16, #tpu.memory_space<vmem>>, vector<32x75xbf16>
    %c0_1 = arith.constant 0 : index
    %c0_2 = arith.constant 0 : index
    %c0_3 = arith.constant 0 : index
    %1 = vector.load %arg2[%c0_1, %c0_2, %c0_3] : memref<4x75x392xbf16, #tpu.memory_space<vmem>>, vector<1x75x392xbf16>
    %2 = vector.shape_cast %1 : vector<1x75x392xbf16> to vector<75x392xbf16>
    %cst = arith.constant dense<0.000000e+00> : vector<32x392xf32>
    %3 = tpu.matmul %0, %2, %cst {dimension_numbers = #tpu.dot_dimension_numbers<[1], [0], [0], [1], [0, 0, 1, 1], [], []>} : vector<32x75xbf16>, vector<75x392xbf16>, vector<32x392xf32> -> vector<32x392xf32>
    %c1 = arith.constant 1 : index
    %c0_4 = arith.constant 0 : index
    %c0_5 = arith.constant 0 : index
    %4 = vector.load %arg2[%c1, %c0_4, %c0_5] : memref<4x75x392xbf16, #tpu.memory_space<vmem>>, vector<1x75x392xbf16>
    %5 = vector.shape_cast %4 : vector<1x75x392xbf16> to vector<75x392xbf16>
    %cst_6 = arith.constant dense<0.000000e+00> : vector<32x392xf32>
    %6 = tpu.matmul %0, %5, %cst_6 {dimension_numbers = #tpu.dot_dimension_numbers<[1], [0], [0], [1], [0, 0, 1, 1], [], []>} : vector<32x75xbf16>, vector<75x392xbf16>, vector<32x392xf32> -> vector<32x392xf32>
    %c2 = arith.constant 2 : index
    %c0_7 = arith.constant 0 : index
    %c0_8 = arith.constant 0 : index
    %7 = vector.load %arg2[%c2, %c0_7, %c0_8] : memref<4x75x392xbf16, #tpu.memory_space<vmem>>, vector<1x75x392xbf16>
    %8 = vector.shape_cast %7 : vector<1x75x392xbf16> to vector<75x392xbf16>
    %cst_9 = arith.constant dense<0.000000e+00> : vector<32x392xf32>
    %9 = tpu.matmul %0, %8, %cst_9 {dimension_numbers = #tpu.dot_dimension_numbers<[1], [0], [0], [1], [0, 0, 1, 1], [], []>} : vector<32x75xbf16>, vector<75x392xbf16>, vector<32x392xf32> -> vector<32x392xf32>
    %c3 = arith.constant 3 : index
    %c0_10 = arith.constant 0 : index
    %c0_11 = arith.constant 0 : index
    %10 = vector.load %arg2[%c3, %c0_10, %c0_11] : memref<4x75x392xbf16, #tpu.memory_space<vmem>>, vector<1x75x392xbf16>
    %11 = vector.shape_cast %10 : vector<1x75x392xbf16> to vector<75x392xbf16>
    %cst_12 = arith.constant dense<0.000000e+00> : vector<32x392xf32>
    %12 = tpu.matmul %0, %11, %cst_12 {dimension_numbers = #tpu.dot_dimension_numbers<[1], [0], [0], [1], [0, 0, 1, 1], [], []>} : vector<32x75xbf16>, vector<75x392xbf16>, vector<32x392xf32> -> vector<32x392xf32>
    %cst_13 = arith.constant dense<0.000000e+00> : vector<32xf32>
    %13 = vector.multi_reduction <add>, %3, %cst_13 [1] : vector<32x392xf32> to vector<32xf32>
    %14 = vector.shape_cast %13 : vector<32xf32> to vector<32x1xf32>
    %cst_14 = arith.constant dense<0.000000e+00> : vector<32xf32>
    %15 = vector.multi_reduction <add>, %6, %cst_14 [1] : vector<32x392xf32> to vector<32xf32>
    %16 = vector.shape_cast %15 : vector<32xf32> to vector<32x1xf32>
    %17 = arith.addf %14, %16 : vector<32x1xf32>
    %cst_15 = arith.constant dense<0.000000e+00> : vector<32xf32>
    %18 = vector.multi_reduction <add>, %9, %cst_15 [1] : vector<32x392xf32> to vector<32xf32>
    %19 = vector.shape_cast %18 : vector<32xf32> to vector<32x1xf32>
    %20 = arith.addf %17, %19 : vector<32x1xf32>
    %cst_16 = arith.constant dense<0.000000e+00> : vector<32xf32>
    %21 = vector.multi_reduction <add>, %12, %cst_16 [1] : vector<32x392xf32> to vector<32xf32>
    %22 = vector.shape_cast %21 : vector<32xf32> to vector<32x1xf32>
    %23 = arith.addf %20, %22 : vector<32x1xf32>
    %cst_17 = arith.constant 6.37755089E-4 : f32
    %24 = vector.broadcast %cst_17 : f32 to vector<32x1xf32>
    %25 = arith.mulf %23, %24 : vector<32x1xf32>
    %26 = vector.broadcast %25 : vector<32x1xf32> to vector<32x392xf32>
    %27 = arith.subf %3, %26 : vector<32x392xf32>
    %28 = vector.broadcast %25 : vector<32x1xf32> to vector<32x392xf32>
    %29 = arith.subf %6, %28 : vector<32x392xf32>
    %30 = vector.broadcast %25 : vector<32x1xf32> to vector<32x392xf32>
    %31 = arith.subf %9, %30 : vector<32x392xf32>
    %32 = vector.broadcast %25 : vector<32x1xf32> to vector<32x392xf32>
    %33 = arith.subf %12, %32 : vector<32x392xf32>
    %34 = arith.mulf %27, %27 : vector<32x392xf32>
    %cst_18 = arith.constant dense<0.000000e+00> : vector<32xf32>
    %35 = vector.multi_reduction <add>, %34, %cst_18 [1] : vector<32x392xf32> to vector<32xf32>
    %36 = vector.shape_cast %35 : vector<32xf32> to vector<32x1xf32>
    %37 = arith.mulf %29, %29 : vector<32x392xf32>
    %cst_19 = arith.constant dense<0.000000e+00> : vector<32xf32>
    %38 = vector.multi_reduction <add>, %37, %cst_19 [1] : vector<32x392xf32> to vector<32xf32>
    %39 = vector.shape_cast %38 : vector<32xf32> to vector<32x1xf32>
    %40 = arith.addf %36, %39 : vector<32x1xf32>
    %41 = arith.mulf %31, %31 : vector<32x392xf32>
    %cst_20 = arith.constant dense<0.000000e+00> : vector<32xf32>
    %42 = vector.multi_reduction <add>, %41, %cst_20 [1] : vector<32x392xf32> to vector<32xf32>
    %43 = vector.shape_cast %42 : vector<32xf32> to vector<32x1xf32>
    %44 = arith.addf %40, %43 : vector<32x1xf32>
    %45 = arith.mulf %33, %33 : vector<32x392xf32>
    %cst_21 = arith.constant dense<0.000000e+00> : vector<32xf32>
    %46 = vector.multi_reduction <add>, %45, %cst_21 [1] : vector<32x392xf32> to vector<32xf32>
    %47 = vector.shape_cast %46 : vector<32xf32> to vector<32x1xf32>
    %48 = arith.addf %44, %47 : vector<32x1xf32>
    %cst_22 = arith.constant 6.37755089E-4 : f32
    %49 = vector.broadcast %cst_22 : f32 to vector<32x1xf32>
    %50 = arith.mulf %48, %49 : vector<32x1xf32>
    %51 = arith.maximumf %3, %6 : vector<32x392xf32>
    %52 = arith.maximumf %9, %12 : vector<32x392xf32>
    %53 = arith.maximumf %51, %52 : vector<32x392xf32>
    %54 = vector.broadcast %25 : vector<32x1xf32> to vector<32x392xf32>
    %55 = arith.subf %53, %54 : vector<32x392xf32>
    %cst_23 = arith.constant 9.99999974E-5 : f32
    %56 = vector.broadcast %cst_23 : f32 to vector<32x1xf32>
    %57 = arith.addf %50, %56 : vector<32x1xf32>
    %58 = math.rsqrt %57 : vector<32x1xf32>
    %59 = vector.broadcast %58 : vector<32x1xf32> to vector<32x392xf32>
    %60 = arith.mulf %55, %59 : vector<32x392xf32>
    %cst_24 = arith.constant 0.000000e+00 : f32
    %61 = vector.broadcast %cst_24 : f32 to vector<32x392xf32>
    %62 = arith.cmpf oge, %60, %61 : vector<32x392xf32>
    %cst_25 = arith.constant 0.00999999977 : f32
    %63 = vector.broadcast %cst_25 : f32 to vector<32x392xf32>
    %64 = arith.mulf %63, %60 : vector<32x392xf32>
    %65 = arith.select %62, %60, %64 : vector<32x392xi1>, vector<32x392xf32>
    %c0_26 = arith.constant 0 : index
    %c0_27 = arith.constant 0 : index
    %66 = vector.load %arg3[%c0_26, %c0_27] : memref<32x392xf32, #tpu.memory_space<vmem>>, vector<32x392xf32>
    tpu.vector_store %arg3[%c0_26, %c0_27], %65 {strides = array<i32>} : memref<32x392xf32, #tpu.memory_space<vmem>>, vector<32x392xf32>,
    return
  }
  func.func @transform_0(%arg0: i32) -> (i32, i32) {
    %c0_i32 = arith.constant 0 : i32
    %c0_i32_0 = arith.constant 0 : i32
    return %arg0, %c0_i32 : i32, i32
  }
  func.func @transform_1(%arg0: i32) -> (i32, i32, i32) {
    %c0_i32 = arith.constant 0 : i32
    %c0_i32_0 = arith.constant 0 : i32
    %c0_i32_1 = arith.constant 0 : i32
    %c0_i32_2 = arith.constant 0 : i32
    return %c0_i32, %c0_i32_0, %c0_i32_1 : i32, i32, i32
  }
  func.func @transform_2(%arg0: i32) -> (i32, i32) {
    %c0_i32 = arith.constant 0 : i32
    %c0_i32_0 = arith.constant 0 : i32
    return %arg0, %c0_i32 : i32, i32
  }
}

module attributes {stable_mosaic.version = 11 : i64} {
  func.func @_conv_bn_lrelu_pool_kernel(%arg0: i32, %arg1: memref<16x1600xbf16, #tpu.memory_space<vmem>>, %arg2: memref<4x1600x50xbf16, #tpu.memory_space<vmem>>, %arg3: memref<16x50xf32, #tpu.memory_space<vmem>>) attributes {dimension_semantics = [#tpu.dimension_semantics<parallel>], iteration_bounds = array<i64: 2>, scalar_prefetch = 0 : i64, scratch_operands = 0 : i64, tpu.core_type = #tpu.core_type<tc>, window_params = [{transform_indices = @transform_0, window_bounds = array<i64: 16, 1600>}, {pipeline_mode = #tpu.pipeline_mode<synchronous>, transform_indices = @transform_1, window_bounds = array<i64: 4, 1600, 50>}, {transform_indices = @transform_2, window_bounds = array<i64: 16, 50>}]} {
    %c0 = arith.constant 0 : index
    %c0_0 = arith.constant 0 : index
    %0 = vector.load %arg1[%c0, %c0_0] : memref<16x1600xbf16, #tpu.memory_space<vmem>>, vector<16x1600xbf16>
    %c0_1 = arith.constant 0 : index
    %c0_2 = arith.constant 0 : index
    %c0_3 = arith.constant 0 : index
    %1 = vector.load %arg2[%c0_1, %c0_2, %c0_3] : memref<4x1600x50xbf16, #tpu.memory_space<vmem>>, vector<1x1600x50xbf16>
    %2 = vector.shape_cast %1 : vector<1x1600x50xbf16> to vector<1600x50xbf16>
    %cst = arith.constant dense<0.000000e+00> : vector<16x50xf32>
    %3 = tpu.matmul %0, %2, %cst {dimension_numbers = #tpu.dot_dimension_numbers<[1], [0], [0], [1], [0, 0, 1, 1], [], []>} : vector<16x1600xbf16>, vector<1600x50xbf16>, vector<16x50xf32> -> vector<16x50xf32>
    %c1 = arith.constant 1 : index
    %c0_4 = arith.constant 0 : index
    %c0_5 = arith.constant 0 : index
    %4 = vector.load %arg2[%c1, %c0_4, %c0_5] : memref<4x1600x50xbf16, #tpu.memory_space<vmem>>, vector<1x1600x50xbf16>
    %5 = vector.shape_cast %4 : vector<1x1600x50xbf16> to vector<1600x50xbf16>
    %cst_6 = arith.constant dense<0.000000e+00> : vector<16x50xf32>
    %6 = tpu.matmul %0, %5, %cst_6 {dimension_numbers = #tpu.dot_dimension_numbers<[1], [0], [0], [1], [0, 0, 1, 1], [], []>} : vector<16x1600xbf16>, vector<1600x50xbf16>, vector<16x50xf32> -> vector<16x50xf32>
    %c2 = arith.constant 2 : index
    %c0_7 = arith.constant 0 : index
    %c0_8 = arith.constant 0 : index
    %7 = vector.load %arg2[%c2, %c0_7, %c0_8] : memref<4x1600x50xbf16, #tpu.memory_space<vmem>>, vector<1x1600x50xbf16>
    %8 = vector.shape_cast %7 : vector<1x1600x50xbf16> to vector<1600x50xbf16>
    %cst_9 = arith.constant dense<0.000000e+00> : vector<16x50xf32>
    %9 = tpu.matmul %0, %8, %cst_9 {dimension_numbers = #tpu.dot_dimension_numbers<[1], [0], [0], [1], [0, 0, 1, 1], [], []>} : vector<16x1600xbf16>, vector<1600x50xbf16>, vector<16x50xf32> -> vector<16x50xf32>
    %c3 = arith.constant 3 : index
    %c0_10 = arith.constant 0 : index
    %c0_11 = arith.constant 0 : index
    %10 = vector.load %arg2[%c3, %c0_10, %c0_11] : memref<4x1600x50xbf16, #tpu.memory_space<vmem>>, vector<1x1600x50xbf16>
    %11 = vector.shape_cast %10 : vector<1x1600x50xbf16> to vector<1600x50xbf16>
    %cst_12 = arith.constant dense<0.000000e+00> : vector<16x50xf32>
    %12 = tpu.matmul %0, %11, %cst_12 {dimension_numbers = #tpu.dot_dimension_numbers<[1], [0], [0], [1], [0, 0, 1, 1], [], []>} : vector<16x1600xbf16>, vector<1600x50xbf16>, vector<16x50xf32> -> vector<16x50xf32>
    %cst_13 = arith.constant dense<0.000000e+00> : vector<16xf32>
    %13 = vector.multi_reduction <add>, %3, %cst_13 [1] : vector<16x50xf32> to vector<16xf32>
    %14 = vector.shape_cast %13 : vector<16xf32> to vector<16x1xf32>
    %cst_14 = arith.constant dense<0.000000e+00> : vector<16xf32>
    %15 = vector.multi_reduction <add>, %6, %cst_14 [1] : vector<16x50xf32> to vector<16xf32>
    %16 = vector.shape_cast %15 : vector<16xf32> to vector<16x1xf32>
    %17 = arith.addf %14, %16 : vector<16x1xf32>
    %cst_15 = arith.constant dense<0.000000e+00> : vector<16xf32>
    %18 = vector.multi_reduction <add>, %9, %cst_15 [1] : vector<16x50xf32> to vector<16xf32>
    %19 = vector.shape_cast %18 : vector<16xf32> to vector<16x1xf32>
    %20 = arith.addf %17, %19 : vector<16x1xf32>
    %cst_16 = arith.constant dense<0.000000e+00> : vector<16xf32>
    %21 = vector.multi_reduction <add>, %12, %cst_16 [1] : vector<16x50xf32> to vector<16xf32>
    %22 = vector.shape_cast %21 : vector<16xf32> to vector<16x1xf32>
    %23 = arith.addf %20, %22 : vector<16x1xf32>
    %cst_17 = arith.constant 5.000000e-03 : f32
    %24 = vector.broadcast %cst_17 : f32 to vector<16x1xf32>
    %25 = arith.mulf %23, %24 : vector<16x1xf32>
    %26 = vector.broadcast %25 : vector<16x1xf32> to vector<16x50xf32>
    %27 = arith.subf %3, %26 : vector<16x50xf32>
    %28 = vector.broadcast %25 : vector<16x1xf32> to vector<16x50xf32>
    %29 = arith.subf %6, %28 : vector<16x50xf32>
    %30 = vector.broadcast %25 : vector<16x1xf32> to vector<16x50xf32>
    %31 = arith.subf %9, %30 : vector<16x50xf32>
    %32 = vector.broadcast %25 : vector<16x1xf32> to vector<16x50xf32>
    %33 = arith.subf %12, %32 : vector<16x50xf32>
    %34 = arith.mulf %27, %27 : vector<16x50xf32>
    %cst_18 = arith.constant dense<0.000000e+00> : vector<16xf32>
    %35 = vector.multi_reduction <add>, %34, %cst_18 [1] : vector<16x50xf32> to vector<16xf32>
    %36 = vector.shape_cast %35 : vector<16xf32> to vector<16x1xf32>
    %37 = arith.mulf %29, %29 : vector<16x50xf32>
    %cst_19 = arith.constant dense<0.000000e+00> : vector<16xf32>
    %38 = vector.multi_reduction <add>, %37, %cst_19 [1] : vector<16x50xf32> to vector<16xf32>
    %39 = vector.shape_cast %38 : vector<16xf32> to vector<16x1xf32>
    %40 = arith.addf %36, %39 : vector<16x1xf32>
    %41 = arith.mulf %31, %31 : vector<16x50xf32>
    %cst_20 = arith.constant dense<0.000000e+00> : vector<16xf32>
    %42 = vector.multi_reduction <add>, %41, %cst_20 [1] : vector<16x50xf32> to vector<16xf32>
    %43 = vector.shape_cast %42 : vector<16xf32> to vector<16x1xf32>
    %44 = arith.addf %40, %43 : vector<16x1xf32>
    %45 = arith.mulf %33, %33 : vector<16x50xf32>
    %cst_21 = arith.constant dense<0.000000e+00> : vector<16xf32>
    %46 = vector.multi_reduction <add>, %45, %cst_21 [1] : vector<16x50xf32> to vector<16xf32>
    %47 = vector.shape_cast %46 : vector<16xf32> to vector<16x1xf32>
    %48 = arith.addf %44, %47 : vector<16x1xf32>
    %cst_22 = arith.constant 5.000000e-03 : f32
    %49 = vector.broadcast %cst_22 : f32 to vector<16x1xf32>
    %50 = arith.mulf %48, %49 : vector<16x1xf32>
    %51 = arith.maximumf %3, %6 : vector<16x50xf32>
    %52 = arith.maximumf %9, %12 : vector<16x50xf32>
    %53 = arith.maximumf %51, %52 : vector<16x50xf32>
    %54 = vector.broadcast %25 : vector<16x1xf32> to vector<16x50xf32>
    %55 = arith.subf %53, %54 : vector<16x50xf32>
    %cst_23 = arith.constant 9.99999974E-5 : f32
    %56 = vector.broadcast %cst_23 : f32 to vector<16x1xf32>
    %57 = arith.addf %50, %56 : vector<16x1xf32>
    %58 = math.rsqrt %57 : vector<16x1xf32>
    %59 = vector.broadcast %58 : vector<16x1xf32> to vector<16x50xf32>
    %60 = arith.mulf %55, %59 : vector<16x50xf32>
    %cst_24 = arith.constant 0.000000e+00 : f32
    %61 = vector.broadcast %cst_24 : f32 to vector<16x50xf32>
    %62 = arith.cmpf oge, %60, %61 : vector<16x50xf32>
    %cst_25 = arith.constant 0.00999999977 : f32
    %63 = vector.broadcast %cst_25 : f32 to vector<16x50xf32>
    %64 = arith.mulf %63, %60 : vector<16x50xf32>
    %65 = arith.select %62, %60, %64 : vector<16x50xi1>, vector<16x50xf32>
    %c0_26 = arith.constant 0 : index
    %c0_27 = arith.constant 0 : index
    %66 = vector.load %arg3[%c0_26, %c0_27] : memref<16x50xf32, #tpu.memory_space<vmem>>, vector<16x50xf32>
    tpu.vector_store %arg3[%c0_26, %c0_27], %65 {strides = array<i32>} : memref<16x50xf32, #tpu.memory_space<vmem>>, vector<16x50xf32>,
    return
  }
  func.func @transform_0(%arg0: i32) -> (i32, i32) {
    %c0_i32 = arith.constant 0 : i32
    %c0_i32_0 = arith.constant 0 : i32
    return %arg0, %c0_i32 : i32, i32
  }
  func.func @transform_1(%arg0: i32) -> (i32, i32, i32) {
    %c0_i32 = arith.constant 0 : i32
    %c0_i32_0 = arith.constant 0 : i32
    %c0_i32_1 = arith.constant 0 : i32
    %c0_i32_2 = arith.constant 0 : i32
    return %c0_i32, %c0_i32_0, %c0_i32_1 : i32, i32, i32
  }
  func.func @transform_2(%arg0: i32) -> (i32, i32) {
    %c0_i32 = arith.constant 0 : i32
    %c0_i32_0 = arith.constant 0 : i32
    return %arg0, %c0_i32 : i32, i32
  }
}

module attributes {stable_mosaic.version = 11 : i64} {
  func.func @_matmul_bias_kernel(%arg0: memref<2x800xbf16, #tpu.memory_space<vmem>>, %arg1: memref<800x128xbf16, #tpu.memory_space<vmem>>, %arg2: memref<1x128xf32, #tpu.memory_space<vmem>>, %arg3: memref<2x128xf32, #tpu.memory_space<vmem>>) attributes {dimension_semantics = [], scalar_prefetch = 0 : i64, scratch_operands = 0 : i64, tpu.core_type = #tpu.core_type<tc>} {
    %c0 = arith.constant 0 : index
    %c0_0 = arith.constant 0 : index
    %0 = vector.load %arg0[%c0, %c0_0] : memref<2x800xbf16, #tpu.memory_space<vmem>>, vector<2x800xbf16>
    %c0_1 = arith.constant 0 : index
    %c0_2 = arith.constant 0 : index
    %1 = vector.load %arg1[%c0_1, %c0_2] : memref<800x128xbf16, #tpu.memory_space<vmem>>, vector<800x128xbf16>
    %cst = arith.constant dense<0.000000e+00> : vector<2x128xf32>
    %2 = tpu.matmul %0, %1, %cst {dimension_numbers = #tpu.dot_dimension_numbers<[1], [0], [0], [1], [0, 0, 1, 1], [], []>} : vector<2x800xbf16>, vector<800x128xbf16>, vector<2x128xf32> -> vector<2x128xf32>
    %c0_3 = arith.constant 0 : index
    %c0_4 = arith.constant 0 : index
    %3 = vector.load %arg2[%c0_3, %c0_4] : memref<1x128xf32, #tpu.memory_space<vmem>>, vector<1x128xf32>
    %4 = vector.broadcast %3 : vector<1x128xf32> to vector<2x128xf32>
    %5 = arith.addf %2, %4 : vector<2x128xf32>
    %c0_5 = arith.constant 0 : index
    %c0_6 = arith.constant 0 : index
    %6 = vector.load %arg3[%c0_5, %c0_6] : memref<2x128xf32, #tpu.memory_space<vmem>>, vector<2x128xf32>
    tpu.vector_store %arg3[%c0_5, %c0_6], %5 {strides = array<i32>} : memref<2x128xf32, #tpu.memory_space<vmem>>, vector<2x128xf32>,
    return
  }
}

</mosaic_0001>

<llo_original>
// kernel: _lambda_.3
$region0: #{_lambda_.3}
  #allocation0 [shape = 'u32[]', space=smem, size = 0x4, offset = 0x4, fixed_abs, tag = 'smem constant byte address 0x4 - core index']
  #allocation1 [shape = 'u32[144,128]{1,0:T(1,128)}', space=vmem, size = 0x12000, scoped, tag = 'internal scratch']
  %s0 = inlined_call_operand.vmem [shape: bf16[64,75], index: 0, kind: input, shape index: {}]
  %s1 = inlined_call_operand.vmem [shape: bf16[4,75,392], index: 1, kind: input, shape index: {}]
  %s2 = inlined_call_operand.vmem [shape: f32[64,392], index: 2, kind: output, shape index: {}]
  %s3 = sld [smem:[#allocation0]]
  $region41: #{_lambda_.3} parent=0
    _
  %s5 = ssub.s32 1, %s3
  %s6 = scalar_select 0, %s5, %s3
  loop: start=0, step=1, limit=4
  $region2: #{_lambda_.3} parent=0 // loop_pre_header
    _
  $region3: #{_lambda_.3} parent=0 // loop_header
    %s8 = sphi 0, %s12
    %p9 = scmp.ge.s32.totalorder %s8, 4
    %s18 = sphi 0, %s20
    %s21 = sphi 0, %s18
    %s22 = sphi 0, %s21
    %s38 = sphi 0, %s22
    %s42 = sphi 0, %s42
    %s44 = sphi 0, %s42
    %s45 = sphi 0, %s44
    %s59 = sphi 0, %s45
    %s65 = sphi 0, %s67
    %s68 = sphi 0, %s65
    %s69 = sphi 0, %s68
    %s85 = sphi 0, %s69
  $region4: #{_lambda_.3} parent=0 // loop_header_branch
    %11 = sbr.rel (%p9) target = $region8
  $region5: #{_lambda_.3} parent=0 // loop_body
    %s13 = ssub.s32 %s8, 1
    %s14 = ssub.s32 %s8, 2
    %s15 = sadd.s32 %s8, 1
    %s16 = ssub.s32 %s8, %s15
    %p17 = scmp.eq.s32.totalorder %s16, 0
    %s19 = sadd.s32 %s18, 1
    %s20 = scalar_select %p17, %s18, %s19
    %p23 = pneg %p17
    %p24 = scmp.eq.s32.totalorder %s8, 1
    %p25 = por %p23, %p24
    %p26 = scmp.ne.s32.totalorder %s18, %s21
    %p27 = scmp.eq.s32.totalorder %s8, 0
    %p28 = por %p26, %p27
    %p29 = scmp.ne.s32.totalorder %s18, %s21
    %p30 = scmp.eq.s32.totalorder %s13, 1
    %p31 = por %p29, %p30
    %p32 = scmp.ne.s32.totalorder %s21, %s22
    %p33 = scmp.eq.s32.totalorder %s13, 0
    %p34 = por %p32, %p33
    %p35 = scmp.ne.s32.totalorder %s21, %s22
    %p36 = scmp.eq.s32.totalorder %s14, 1
    %p37 = por %p35, %p36
    %p39 = scmp.ne.s32.totalorder %s22, %s38
    %p40 = scmp.eq.s32.totalorder %s14, 0
    %p41 = por %p39, %p40
    %s43 = sadd.s32 %s42, 1
    %p46 = scmp.eq.s32.totalorder %s8, 1
    %p47 = scmp.ne.s32.totalorder %s42, %s44
    %p48 = scmp.eq.s32.totalorder %s8, 0
    %p49 = por %p47, %p48
    %p50 = scmp.ne.s32.totalorder %s42, %s44
    %p51 = scmp.eq.s32.totalorder %s13, 1
    %p52 = por %p50, %p51
    %p53 = scmp.ne.s32.totalorder %s44, %s45
    %p54 = scmp.eq.s32.totalorder %s13, 0
    %p55 = por %p53, %p54
    %p56 = scmp.ne.s32.totalorder %s44, %s45
    %p57 = scmp.eq.s32.totalorder %s14, 1
    %p58 = por %p56, %p57
    %p60 = scmp.ne.s32.totalorder %s45, %s59
    %p61 = scmp.eq.s32.totalorder %s14, 0
    %p62 = por %p60, %p61
    %s63 = ssub.s32 %s8, %s15
    %p64 = scmp.eq.s32.totalorder %s63, 0
    %s66 = sadd.s32 %s65, 1
    %s67 = scalar_select %p64, %s65, %s66
    %p70 = pneg %p64
    %p71 = scmp.eq.s32.totalorder %s8, 1
    %p72 = por %p70, %p71
    %p73 = scmp.ne.s32.totalorder %s65, %s68
    %p74 = scmp.eq.s32.totalorder %s8, 0
    %p75 = por %p73, %p74
    %p76 = scmp.ne.s32.totalorder %s65, %s68
    %p77 = scmp.eq.s32.totalorder %s13, 1
    %p78 = por %p76, %p77
    %p79 = scmp.ne.s32.totalorder %s68, %s69
    %p80 = scmp.eq.s32.totalorder %s13, 0
    %p81 = por %p79, %p80
    %p82 = scmp.ne.s32.totalorder %s68, %s69
    %p83 = scmp.eq.s32.totalorder %s14, 1
    %p84 = por %p82, %p83
    %p86 = scmp.ne.s32.totalorder %s69, %s85
    %p87 = scmp.eq.s32.totalorder %s14, 0
    %p88 = por %p86, %p87
    %p89 = scmp.le.s32.totalorder 1, %s8
    %p90 = scmp.lt.s32.totalorder %s8, 3
    %p91 = pnand %p89, %p90
    %p92 = pneg %p91
    // Predicated region
    $region9: #{_lambda_.3} parent=5 // pred_check
      _
    $region10: #{_lambda_.3} parent=5 // pred_check_branch
      %94 = sbr.rel (%p91) target = $region12
    $region11: #{_lambda_.3} parent=5 // pred_region
      %s95 = ssub.s32 %s8, 1
      // Predicated region
      $region13: #{_lambda_.3} parent=11 // pred_check
        %p96 = pneg %p55
      $region14: #{_lambda_.3} parent=11 // pred_check_branch
        %98 = sbr.rel (%p96) target = $region16
      $region15: #{_lambda_.3} parent=11 // pred_region
        _
      $region16: #{_lambda_.3} parent=11 // pred_fallthru
        _
    $region12: #{_lambda_.3} parent=5 // pred_fallthru
      _
    %p99 = scmp.lt.s32.totalorder %s8, 2
    // Predicated region
    $region17: #{_lambda_.3} parent=5 // pred_check
      %p100 = pneg %p99
    $region18: #{_lambda_.3} parent=5 // pred_check_branch
      %102 = sbr.rel (%p100) target = $region20
    $region19: #{_lambda_.3} parent=5 // pred_region
      // Predicated region
      $region21: #{_lambda_.3} parent=19 // pred_check
        %p103 = pneg %p28
      $region22: #{_lambda_.3} parent=19 // pred_check_branch
        %105 = sbr.rel (%p103) target = $region24
      $region23: #{_lambda_.3} parent=19 // pred_region
        %s106 = smul.u32 4, %s8
        %p107 = scmp.lt.s32.totalorder %s106, 7
        %s108 = scalar_select %p107, %s106, 7
        %s109 = smul.addr %s108, 4
        %s110 = scalar_lea.vmem %s0, %s109
        %s111 = smul.u32 4, %s8
      $region24: #{_lambda_.3} parent=19 // pred_fallthru
        _
    $region20: #{_lambda_.3} parent=5 // pred_fallthru
      _
    %p112 = scmp.le.s32.totalorder 1, %s8
    %p113 = scmp.lt.s32.totalorder %s8, 3
    %p114 = pnand %p112, %p113
    %p115 = pneg %p114
    // Predicated region
    $region25: #{_lambda_.3} parent=5 // pred_check
      _
    $region26: #{_lambda_.3} parent=5 // pred_check_branch
      %117 = sbr.rel (%p114) target = $region28
    $region27: #{_lambda_.3} parent=5 // pred_region
      %s118 = ssub.s32 %s8, 1
      %s119 = smul.u32 4, %s13
      %p120 = scmp.lt.s32.totalorder %s119, 7
      %s121 = scalar_select %p120, %s119, 7
      %s122 = smul.addr %s121, 4
      %s123 = scalar_lea.vmem %s0, %s122
      %p124 = pneg %p34
      %p125 = pneg %p31
      %p126 = pneg %p55
      %p127 = pneg %p52
      %p128 = pneg %p81
      %p129 = pneg %p78
      %s130 = smul.u32 4, %s13
      %p131 = scmp.lt.s32.totalorder %s130, 7
      %s132 = scalar_select %p131, %s130, 7
      %s133 = smul.addr %s132, 4
      %s134 = smul.addr %s133, 8
      %s135 = scalar_lea.vmem %s2, %s134
      %s136 = smul.u32 4, %s13
      %p137 = scmp.lt.s32.totalorder %s136, 7
      %s138 = scalar_select %p137, %s136, 7
      %s139 = smul.addr %s138, 4
      %s140 = scalar_lea.vmem %s0, %s139
      %s141 = smul.u32 4, %s13
      %s142 = smul.u32 4, %s13
      %p143 = scmp.lt.s32.totalorder %s142, 7
      %s144 = scalar_select %p143, %s142, 7
      %s145 = smul.addr %s144, 4
      %s146 = smul.addr %s145, 8
      %s147 = scalar_lea.vmem %s2, %s146
      %s148 = smul.u32 4, %s13
      %v150 = vld [vmem:[%s140] sm:$0xf]
      %v151 = vld [vmem:[%s140 + $0x4] sm:$0xf]
      %v152 = vld [vmem:[%s140 + $0x8] sm:$0xf]
      %v153 = vld [vmem:[%s140 + $0xc] sm:$0xf]
      %v154 = vld [vmem:[%s1] sm:$0xff]
      %v155 = vld [vmem:[%s1 + $0x8] sm:$0xff]
      %v156 = vld [vmem:[%s1 + $0x10] sm:$0xff]
      %v157 = vld [vmem:[%s1 + $0x18] sm:$0xff]
      %v158 = vld [vmem:[%s1 + $0x20] sm:$0xff]
      %v159 = vld [vmem:[%s1 + $0x28] sm:$0xff]
      %v160 = vld [vmem:[%s1 + $0x30] sm:$0xff]
      %v161 = vld [vmem:[%s1 + $0x38] sm:$0xff]
      %v162 = vld [vmem:[%s1 + $0x40] sm:$0xff]
      %v163 = vld [vmem:[%s1 + $0x48] sm:$0xff]
      %v164 = vld [vmem:[%s1 + $0x50] sm:$0xff]
      %v165 = vld [vmem:[%s1 + $0x58] sm:$0xff]
      %v166 = vld [vmem:[%s1 + $0x60] sm:$0xff]
      %v167 = vld [vmem:[%s1 + $0x68] sm:$0xff]
      %v168 = vld [vmem:[%s1 + $0x70] sm:$0xff]
      %v169 = vld [vmem:[%s1 + $0x78] sm:$0xff]
      %v170 = vld [vmem:[%s1 + $0x80] sm:$0xff]
      %v171 = vld [vmem:[%s1 + $0x88] sm:$0xff]
      %v172 = vld [vmem:[%s1 + $0x90] sm:$0x33]
      %v173 = vld [vmem:[%s1 + $0x98] sm:$0x33]
      %v178 = vunpack.c.l.b16 %v150
      %v179 = vunpack.c.l.b16 %v151
      %v180 = vunpack.c.l.b16 %v152
      %v181 = vunpack.c.l.b16 %v153
      %v182 = vpack.c.b16 %v179, %v178
      %v183 = vpack.c.b16 %v181, %v180
      %v204 = vunpack.c.l.b16 %v154
      %v205 = vunpack.c.h.b16 %v154
      %v206 = vunpack.c.l.b16 %v155
      %v207 = vunpack.c.h.b16 %v155
      %v208 = vunpack.c.l.b16 %v156
      %v209 = vunpack.c.h.b16 %v156
      %v210 = vunpack.c.l.b16 %v157
      %v211 = vunpack.c.h.b16 %v157
      %v212 = vunpack.c.l.b16 %v158
      %v213 = vunpack.c.h.b16 %v158
      %v214 = vunpack.c.l.b16 %v159
      %v215 = vunpack.c.h.b16 %v159
      %v216 = vunpack.c.l.b16 %v160
      %v217 = vunpack.c.h.b16 %v160
      %v218 = vunpack.c.l.b16 %v161
      %v219 = vunpack.c.h.b16 %v161
      %v220 = vunpack.c.l.b16 %v162
      %v221 = vunpack.c.h.b16 %v162
      %v222 = vunpack.c.l.b16 %v163
      %v223 = vunpack.c.h.b16 %v163
      %v224 = vunpack.c.l.b16 %v164
      %v225 = vunpack.c.h.b16 %v164
      %v226 = vunpack.c.l.b16 %v165
      %v227 = vunpack.c.h.b16 %v165
      %v228 = vunpack.c.l.b16 %v166
      %v229 = vunpack.c.h.b16 %v166
      %v230 = vunpack.c.l.b16 %v167
      %v231 = vunpack.c.h.b16 %v167
      %v232 = vunpack.c.l.b16 %v168
      %v233 = vunpack.c.h.b16 %v168
      %v234 = vunpack.c.l.b16 %v169
      %v235 = vunpack.c.h.b16 %v169
      %v236 = vunpack.c.l.b16 %v170
      %v237 = vunpack.c.h.b16 %v170
      %v238 = vunpack.c.l.b16 %v171
      %v239 = vunpack.c.h.b16 %v171
      %v240 = vunpack.c.l.b16 %v172
      %v241 = vunpack.c.h.b16 %v172
      %v242 = vunpack.c.l.b16 %v173
      %v243 = vunpack.c.h.b16 %v173
      %v244 = vpack.c.b16 %v208, %v204
      %v245 = vpack.c.b16 %v209, %v205
      %v246 = vpack.c.b16 %v210, %v206
      %v247 = vpack.c.b16 %v211, %v207
      %v248 = vpack.c.b16 %v216, %v212
      %v249 = vpack.c.b16 %v217, %v213
      %v250 = vpack.c.b16 %v218, %v214
      %v251 = vpack.c.b16 %v219, %v215
      %v252 = vpack.c.b16 %v224, %v220
      %v253 = vpack.c.b16 %v225, %v221
      %v254 = vpack.c.b16 %v226, %v222
      %v255 = vpack.c.b16 %v227, %v223
      %v256 = vpack.c.b16 %v232, %v228
      %v257 = vpack.c.b16 %v233, %v229
      %v258 = vpack.c.b16 %v234, %v230
      %v259 = vpack.c.b16 %v235, %v231
      %v260 = vpack.c.b16 %v240, %v236
      %v261 = vpack.c.b16 %v241, %v237
      %v262 = vpack.c.b16 %v242, %v238
      %v263 = vpack.c.b16 %v243, %v239
      %vm280 = vcmask 613376
      %v282 = vsel %vm280, %v182, 0
      %v285 = vsel %vm280, %v183, 0
      %vm287 = vcmask 1044480
      %vm288 = vcmask 1045504
      %v289 = vsel %vm287, 4294967295, 65535
      %v290 = vsel %vm288, %v289, 0
      %v292 = vand.u32 %v260, %v290
      %v295 = vand.u32 %v261, %v290
      %v298 = vand.u32 %v262, %v290
      %v301 = vand.u32 %v263, %v290
      %303 = vmatprep.subr.bf16.mxu0 %v245
      %304 = vmatpush1.bf16.msra.mxu0 %v244
      %305 = vmatprep.subr.bf16.mxu0 %v249
      %306 = vmatpush1.bf16.msra.mxu0 %v248
      %307 = vmatprep.subr.bf16.mxu0 %v253
      %308 = vmatpush1.bf16.msra.mxu0 %v252
      %309 = vmatprep.subr.bf16.mxu0 %v257
      %310 = vmatpush1.bf16.msra.mxu0 %v256
      %311 = vmatprep.subr.bf16.mxu0 %v295
      %312 = vmatpush1.bf16.msra.mxu0 %v292
      %313 = vmatprep.subr.bf16.mxu0 0
      %314 = vmatpush1.bf16.msra.mxu0 0
      %315 = vmatprep.subr.bf16.mxu0 0
      %316 = vmatpush1.bf16.msra.mxu0 0
      %317 = vmatprep.subr.bf16.mxu0 0
      %318 = vmatpush1.bf16.msra.mxu0 0
      %319 = vmatprep.subr.bf16.mxu0 0
      %320 = vmatpush1.bf16.msra.mxu0 0
      %321 = vmatprep.subr.bf16.mxu0 0
      %322 = vmatpush1.bf16.msra.mxu0 0
      %323 = vmatprep.subr.bf16.mxu0 0
      %324 = vmatpush1.bf16.msra.mxu0 0
      %325 = vmatprep.subr.bf16.mxu0 0
      %326 = vmatpush1.bf16.msra.mxu0 0
      %327 = vmatprep.subr.bf16.mxu0 0
      %328 = vmatpush1.bf16.msra.mxu0 0
      %329 = vmatprep.subr.bf16.mxu0 0
      %330 = vmatpush1.bf16.msra.mxu0 0
      %331 = vmatprep.subr.bf16.mxu0 0
      %332 = vmatpush1.bf16.msra.mxu0 0
      %333 = vmatprep.subr.bf16.mxu0 0
      %334 = vmatpush1.bf16.msra.mxu0 0
      %335 = vmatprep.mubr.bf16.mxu0 0
      %336 = vmatmul.mubr.bf16.gmra.mrb[0].mxu0 %v282
      %v337 = vpop.f32.mrb[0].mxu0
      %v338 = vadd.f32 0.0, %v337
      %v339 = vpop.f32.mrb[0].mxu0
      %v340 = vadd.f32 0.0, %v339
      %v341 = vpop.f32.mrb[0].mxu0
      %v342 = vadd.f32 0.0, %v341
      %v343 = vpop.f32.mrb[0].mxu0
      %v344 = vadd.f32 0.0, %v343
      %345 = vmatprep.mubr.bf16.mxu0 0
      %346 = vmatmul.mubr.bf16.gmra.mrb[0].mxu0 %v285
      %v347 = vpop.f32.mrb[0].mxu0
      %v348 = vadd.f32 0.0, %v347
      %v349 = vpop.f32.mrb[0].mxu0
      %v350 = vadd.f32 0.0, %v349
      %v351 = vpop.f32.mrb[0].mxu0
      %v352 = vadd.f32 0.0, %v351
      %v353 = vpop.f32.mrb[0].mxu0
      %v354 = vadd.f32 0.0, %v353
      %355 = vdwg.mxu0
      %356 = vmatprep.subr.bf16.mxu0 %v247
      %357 = vmatpush1.bf16.msra.mxu0 %v246
      %358 = vmatprep.subr.bf16.mxu0 %v251
      %359 = vmatpush1.bf16.msra.mxu0 %v250
      %360 = vmatprep.subr.bf16.mxu0 %v255
      %361 = vmatpush1.bf16.msra.mxu0 %v254
      %362 = vmatprep.subr.bf16.mxu0 %v259
      %363 = vmatpush1.bf16.msra.mxu0 %v258
      %364 = vmatprep.subr.bf16.mxu0 %v301
      %365 = vmatpush1.bf16.msra.mxu0 %v298
      %366 = vmatprep.subr.bf16.mxu0 0
      %367 = vmatpush1.bf16.msra.mxu0 0
      %368 = vmatprep.subr.bf16.mxu0 0
      %369 = vmatpush1.bf16.msra.mxu0 0
      %370 = vmatprep.subr.bf16.mxu0 0
      %371 = vmatpush1.bf16.msra.mxu0 0
      %372 = vmatprep.subr.bf16.mxu0 0
      %373 = vmatpush1.bf16.msra.mxu0 0
      %374 = vmatprep.subr.bf16.mxu0 0
      %375 = vmatpush1.bf16.msra.mxu0 0
      %376 = vmatprep.subr.bf16.mxu0 0
      %377 = vmatpush1.bf16.msra.mxu0 0
      %378 = vmatprep.subr.bf16.mxu0 0
      %379 = vmatpush1.bf16.msra.mxu0 0
      %380 = vmatprep.subr.bf16.mxu0 0
      %381 = vmatpush1.bf16.msra.mxu0 0
      %382 = vmatprep.subr.bf16.mxu0 0
      %383 = vmatpush1.bf16.msra.mxu0 0
      %384 = vmatprep.subr.bf16.mxu0 0
      %385 = vmatpush1.bf16.msra.mxu0 0
      %386 = vmatprep.subr.bf16.mxu0 0
      %387 = vmatpush1.bf16.msra.mxu0 0
      %388 = vmatprep.mubr.bf16.mxu0 0
      %389 = vmatmul.mubr.bf16.gmra.mrb[0].mxu0 %v282
      %v390 = vpop.f32.mrb[0].mxu0
      %v391 = vadd.f32 0.0, %v390
      %v392 = vpop.f32.mrb[0].mxu0
      %v393 = vadd.f32 0.0, %v392
      %v394 = vpop.f32.mrb[0].mxu0
      %v395 = vadd.f32 0.0, %v394
      %v396 = vpop.f32.mrb[0].mxu0
      %v397 = vadd.f32 0.0, %v396
      %398 = vmatprep.mubr.bf16.mxu0 0
      %399 = vmatmul.mubr.bf16.gmra.mrb[0].mxu0 %v285
      %v400 = vpop.f32.mrb[0].mxu0
      %v401 = vadd.f32 0.0, %v400
      %v402 = vpop.f32.mrb[0].mxu0
      %v403 = vadd.f32 0.0, %v402
      %v404 = vpop.f32.mrb[0].mxu0
      %v405 = vadd.f32 0.0, %v404
      %v406 = vpop.f32.mrb[0].mxu0
      %v407 = vadd.f32 0.0, %v406
      %408 = vdwg.mxu0
      %s409 = scalar_lea.vmem %s1, 160
      %v410 = vld [vmem:[%s409] sm:$0xff]
      %v411 = vld [vmem:[%s409 + $0x8] sm:$0xff]
      %v412 = vld [vmem:[%s409 + $0x10] sm:$0xff]
      %v413 = vld [vmem:[%s409 + $0x18] sm:$0xff]
      %v414 = vld [vmem:[%s409 + $0x20] sm:$0xff]
      %v415 = vld [vmem:[%s409 + $0x28] sm:$0xff]
      %v416 = vld [vmem:[%s409 + $0x30] sm:$0xff]
      %v417 = vld [vmem:[%s409 + $0x38] sm:$0xff]
      %v418 = vld [vmem:[%s409 + $0x40] sm:$0xff]
      %v419 = vld [vmem:[%s409 + $0x48] sm:$0xff]
      %v420 = vld [vmem:[%s409 + $0x50] sm:$0xff]
      %v421 = vld [vmem:[%s409 + $0x58] sm:$0xff]
      %v422 = vld [vmem:[%s409 + $0x60] sm:$0xff]
      %v423 = vld [vmem:[%s409 + $0x68] sm:$0xff]
      %v424 = vld [vmem:[%s409 + $0x70] sm:$0xff]
      %v425 = vld [vmem:[%s409 + $0x78] sm:$0xff]
      %v426 = vld [vmem:[%s409 + $0x80] sm:$0xff]
      %v427 = vld [vmem:[%s409 + $0x88] sm:$0xff]
      %v428 = vld [vmem:[%s409 + $0x90] sm:$0x33]
      %v429 = vld [vmem:[%s409 + $0x98] sm:$0x33]
      %v450 = vunpack.c.l.b16 %v410
      %v451 = vunpack.c.h.b16 %v410
      %v452 = vunpack.c.l.b16 %v411
      %v453 = vunpack.c.h.b16 %v411
      %v454 = vunpack.c.l.b16 %v412
      %v455 = vunpack.c.h.b16 %v412
      %v456 = vunpack.c.l.b16 %v413
      %v457 = vunpack.c.h.b16 %v413
      %v458 = vunpack.c.l.b16 %v414
      %v459 = vunpack.c.h.b16 %v414
      %v460 = vunpack.c.l.b16 %v415
      %v461 = vunpack.c.h.b16 %v415
      %v462 = vunpack.c.l.b16 %v416
      %v463 = vunpack.c.h.b16 %v416
      %v464 = vunpack.c.l.b16 %v417
      %v465 = vunpack.c.h.b16 %v417
      %v466 = vunpack.c.l.b16 %v418
      %v467 = vunpack.c.h.b16 %v418
      %v468 = vunpack.c.l.b16 %v419
      %v469 = vunpack.c.h.b16 %v419
      %v470 = vunpack.c.l.b16 %v420
      %v471 = vunpack.c.h.b16 %v420
      %v472 = vunpack.c.l.b16 %v421
      %v473 = vunpack.c.h.b16 %v421
      %v474 = vunpack.c.l.b16 %v422
      %v475 = vunpack.c.h.b16 %v422
      %v476 = vunpack.c.l.b16 %v423
      %v477 = vunpack.c.h.b16 %v423
      %v478 = vunpack.c.l.b16 %v424
      %v479 = vunpack.c.h.b16 %v424
      %v480 = vunpack.c.l.b16 %v425
      %v481 = vunpack.c.h.b16 %v425
      %v482 = vunpack.c.l.b16 %v426
      %v483 = vunpack.c.h.b16 %v426
      %v484 = vunpack.c.l.b16 %v427
      %v485 = vunpack.c.h.b16 %v427
      %v486 = vunpack.c.l.b16 %v428
      %v487 = vunpack.c.h.b16 %v428
      %v488 = vunpack.c.l.b16 %v429
      %v489 = vunpack.c.h.b16 %v429
      %v490 = vpack.c.b16 %v454, %v450
      %v491 = vpack.c.b16 %v455, %v451
      %v492 = vpack.c.b16 %v456, %v452
      %v493 = vpack.c.b16 %v457, %v453
      %v494 = vpack.c.b16 %v462, %v458
      %v495 = vpack.c.b16 %v463, %v459
      %v496 = vpack.c.b16 %v464, %v460
      %v497 = vpack.c.b16 %v465, %v461
      %v498 = vpack.c.b16 %v470, %v466
      %v499 = vpack.c.b16 %v471, %v467
      %v500 = vpack.c.b16 %v472, %v468
      %v501 = vpack.c.b16 %v473, %v469
      %v502 = vpack.c.b16 %v478, %v474
      %v503 = vpack.c.b16 %v479, %v475
      %v504 = vpack.c.b16 %v480, %v476
      %v505 = vpack.c.b16 %v481, %v477
      %v506 = vpack.c.b16 %v486, %v482
      %v507 = vpack.c.b16 %v487, %v483
      %v508 = vpack.c.b16 %v488, %v484
      %v509 = vpack.c.b16 %v489, %v485
      %v527 = vand.u32 %v506, %v290
      %v530 = vand.u32 %v507, %v290
      %v533 = vand.u32 %v508, %v290
      %v536 = vand.u32 %v509, %v290
      %538 = vmatprep.subr.bf16.mxu0 %v491
      %539 = vmatpush1.bf16.msra.mxu0 %v490
      %540 = vmatprep.subr.bf16.mxu0 %v495
      %541 = vmatpush1.bf16.msra.mxu0 %v494
      %542 = vmatprep.subr.bf16.mxu0 %v499
      %543 = vmatpush1.bf16.msra.mxu0 %v498
      %544 = vmatprep.subr.bf16.mxu0 %v503
      %545 = vmatpush1.bf16.msra.mxu0 %v502
      %546 = vmatprep.subr.bf16.mxu0 %v530
      %547 = vmatpush1.bf16.msra.mxu0 %v527
      %548 = vmatprep.subr.bf16.mxu0 0
      %549 = vmatpush1.bf16.msra.mxu0 0
      %550 = vmatprep.subr.bf16.mxu0 0
      %551 = vmatpush1.bf16.msra.mxu0 0
      %552 = vmatprep.subr.bf16.mxu0 0
      %553 = vmatpush1.bf16.msra.mxu0 0
      %554 = vmatprep.subr.bf16.mxu0 0
      %555 = vmatpush1.bf16.msra.mxu0 0
      %556 = vmatprep.subr.bf16.mxu0 0
      %557 = vmatpush1.bf16.msra.mxu0 0
      %558 = vmatprep.subr.bf16.mxu0 0
      %559 = vmatpush1.bf16.msra.mxu0 0
      %560 = vmatprep.subr.bf16.mxu0 0
      %561 = vmatpush1.bf16.msra.mxu0 0
      %562 = vmatprep.subr.bf16.mxu0 0
      %563 = vmatpush1.bf16.msra.mxu0 0
      %564 = vmatprep.subr.bf16.mxu0 0
      %565 = vmatpush1.bf16.msra.mxu0 0
      %566 = vmatprep.subr.bf16.mxu0 0
      %567 = vmatpush1.bf16.msra.mxu0 0
      %568 = vmatprep.subr.bf16.mxu0 0
      %569 = vmatpush1.bf16.msra.mxu0 0
      %570 = vmatprep.mubr.bf16.mxu0 0
      %571 = vmatmul.mubr.bf16.gmra.mrb[0].mxu0 %v282
      %v572 = vpop.f32.mrb[0].mxu0
      %v573 = vadd.f32 0.0, %v572
      %v574 = vpop.f32.mrb[0].mxu0
      %v575 = vadd.f32 0.0, %v574
      %v576 = vpop.f32.mrb[0].mxu0
      %v577 = vadd.f32 0.0, %v576
      %v578 = vpop.f32.mrb[0].mxu0
      %v579 = vadd.f32 0.0, %v578
      %580 = vmatprep.mubr.bf16.mxu0 0
      %581 = vmatmul.mubr.bf16.gmra.mrb[0].mxu0 %v285
      %v582 = vpop.f32.mrb[0].mxu0
      %v583 = vadd.f32 0.0, %v582
      %v584 = vpop.f32.mrb[0].mxu0
      %v585 = vadd.f32 0.0, %v584
      %v586 = vpop.f32.mrb[0].mxu0
      %v587 = vadd.f32 0.0, %v586
      %v588 = vpop.f32.mrb[0].mxu0
      %v589 = vadd.f32 0.0, %v588
      %590 = vdwg.mxu0
      %591 = vmatprep.subr.bf16.mxu0 %v493
      %592 = vmatpush1.bf16.msra.mxu0 %v492
      %593 = vmatprep.subr.bf16.mxu0 %v497
      %594 = vmatpush1.bf16.msra.mxu0 %v496
      %595 = vmatprep.subr.bf16.mxu0 %v501
      %596 = vmatpush1.bf16.msra.mxu0 %v500
      %597 = vmatprep.subr.bf16.mxu0 %v505
      %598 = vmatpush1.bf16.msra.mxu0 %v504
      %599 = vmatprep.subr.bf16.mxu0 %v536
      %600 = vmatpush1.bf16.msra.mxu0 %v533
      %601 = vmatprep.subr.bf16.mxu0 0
      %602 = vmatpush1.bf16.msra.mxu0 0
      %603 = vmatprep.subr.bf16.mxu0 0
      %604 = vmatpush1.bf16.msra.mxu0 0
      %605 = vmatprep.subr.bf16.mxu0 0
      %606 = vmatpush1.bf16.msra.mxu0 0
      %607 = vmatprep.subr.bf16.mxu0 0
      %608 = vmatpush1.bf16.msra.mxu0 0
      %609 = vmatprep.subr.bf16.mxu0 0
      %610 = vmatpush1.bf16.msra.mxu0 0
      %611 = vmatprep.subr.bf16.mxu0 0
      %612 = vmatpush1.bf16.msra.mxu0 0
      %613 = vmatprep.subr.bf16.mxu0 0
      %614 = vmatpush1.bf16.msra.mxu0 0
      %615 = vmatprep.subr.bf16.mxu0 0
      %616 = vmatpush1.bf16.msra.mxu0 0
      %617 = vmatprep.subr.bf16.mxu0 0
      %618 = vmatpush1.bf16.msra.mxu0 0
      %619 = vmatprep.subr.bf16.mxu0 0
      %620 = vmatpush1.bf16.msra.mxu0 0
      %621 = vmatprep.subr.bf16.mxu0 0
      %622 = vmatpush1.bf16.msra.mxu0 0
      %623 = vmatprep.mubr.bf16.mxu0 0
      %624 = vmatmul.mubr.bf16.gmra.mrb[0].mxu0 %v282
      %v625 = vpop.f32.mrb[0].mxu0
      %v626 = vadd.f32 0.0, %v625
      %v627 = vpop.f32.mrb[0].mxu0
      %v628 = vadd.f32 0.0, %v627
      %v629 = vpop.f32.mrb[0].mxu0
      %v630 = vadd.f32 0.0, %v629
      %v631 = vpop.f32.mrb[0].mxu0
      %v632 = vadd.f32 0.0, %v631
      %633 = vmatprep.mubr.bf16.mxu0 0
      %634 = vmatmul.mubr.bf16.gmra.mrb[0].mxu0 %v285
      %v635 = vpop.f32.mrb[0].mxu0
      %v636 = vadd.f32 0.0, %v635
      %v637 = vpop.f32.mrb[0].mxu0
      %v638 = vadd.f32 0.0, %v637
      %v639 = vpop.f32.mrb[0].mxu0
      %v640 = vadd.f32 0.0, %v639
      %v641 = vpop.f32.mrb[0].mxu0
      %v642 = vadd.f32 0.0, %v641
      %643 = vdwg.mxu0
      %s644 = scalar_lea.vmem %s1, 320
      %v645 = vld [vmem:[%s644] sm:$0xff]
      %v646 = vld [vmem:[%s644 + $0x8] sm:$0xff]
      %v647 = vld [vmem:[%s644 + $0x10] sm:$0xff]
      %v648 = vld [vmem:[%s644 + $0x18] sm:$0xff]
      %v649 = vld [vmem:[%s644 + $0x20] sm:$0xff]
      %v650 = vld [vmem:[%s644 + $0x28] sm:$0xff]
      %v651 = vld [vmem:[%s644 + $0x30] sm:$0xff]
      %v652 = vld [vmem:[%s644 + $0x38] sm:$0xff]
      %v653 = vld [vmem:[%s644 + $0x40] sm:$0xff]
      %v654 = vld [vmem:[%s644 + $0x48] sm:$0xff]
      %v655 = vld [vmem:[%s644 + $0x50] sm:$0xff]
      %v656 = vld [vmem:[%s644 + $0x58] sm:$0xff]
      %v657 = vld [vmem:[%s644 + $0x60] sm:$0xff]
      %v658 = vld [vmem:[%s644 + $0x68] sm:$0xff]
      %v659 = vld [vmem:[%s644 + $0x70] sm:$0xff]
      %v660 = vld [vmem:[%s644 + $0x78] sm:$0xff]
      %v661 = vld [vmem:[%s644 + $0x80] sm:$0xff]
      %v662 = vld [vmem:[%s644 + $0x88] sm:$0xff]
      %v663 = vld [vmem:[%s644 + $0x90] sm:$0x33]
      %v664 = vld [vmem:[%s644 + $0x98] sm:$0x33]
      %v685 = vunpack.c.l.b16 %v645
      %v686 = vunpack.c.h.b16 %v645
      %v687 = vunpack.c.l.b16 %v646
      %v688 = vunpack.c.h.b16 %v646
      %v689 = vunpack.c.l.b16 %v647
      %v690 = vunpack.c.h.b16 %v647
      %v691 = vunpack.c.l.b16 %v648
      %v692 = vunpack.c.h.b16 %v648
      %v693 = vunpack.c.l.b16 %v649
      %v694 = vunpack.c.h.b16 %v649
      %v695 = vunpack.c.l.b16 %v650
      %v696 = vunpack.c.h.b16 %v650
      %v697 = vunpack.c.l.b16 %v651
      %v698 = vunpack.c.h.b16 %v651
      %v699 = vunpack.c.l.b16 %v652
      %v700 = vunpack.c.h.b16 %v652
      %v701 = vunpack.c.l.b16 %v653
      %v702 = vunpack.c.h.b16 %v653
      %v703 = vunpack.c.l.b16 %v654
      %v704 = vunpack.c.h.b16 %v654
      %v705 = vunpack.c.l.b16 %v655
      %v706 = vunpack.c.h.b16 %v655
      %v707 = vunpack.c.l.b16 %v656
      %v708 = vunpack.c.h.b16 %v656
      %v709 = vunpack.c.l.b16 %v657
      %v710 = vunpack.c.h.b16 %v657
      %v711 = vunpack.c.l.b16 %v658
      %v712 = vunpack.c.h.b16 %v658
      %v713 = vunpack.c.l.b16 %v659
      %v714 = vunpack.c.h.b16 %v659
      %v715 = vunpack.c.l.b16 %v660
      %v716 = vunpack.c.h.b16 %v660
      %v717 = vunpack.c.l.b16 %v661
      %v718 = vunpack.c.h.b16 %v661
      %v719 = vunpack.c.l.b16 %v662
      %v720 = vunpack.c.h.b16 %v662
      %v721 = vunpack.c.l.b16 %v663
      %v722 = vunpack.c.h.b16 %v663
      %v723 = vunpack.c.l.b16 %v664
      %v724 = vunpack.c.h.b16 %v664
      %v725 = vpack.c.b16 %v689, %v685
      %v726 = vpack.c.b16 %v690, %v686
      %v727 = vpack.c.b16 %v691, %v687
      %v728 = vpack.c.b16 %v692, %v688
      %v729 = vpack.c.b16 %v697, %v693
      %v730 = vpack.c.b16 %v698, %v694
      %v731 = vpack.c.b16 %v699, %v695
      %v732 = vpack.c.b16 %v700, %v696
      %v733 = vpack.c.b16 %v705, %v701
      %v734 = vpack.c.b16 %v706, %v702
      %v735 = vpack.c.b16 %v707, %v703
      %v736 = vpack.c.b16 %v708, %v704
      %v737 = vpack.c.b16 %v713, %v709
      %v738 = vpack.c.b16 %v714, %v710
      %v739 = vpack.c.b16 %v715, %v711
      %v740 = vpack.c.b16 %v716, %v712
      %v741 = vpack.c.b16 %v721, %v717
      %v742 = vpack.c.b16 %v722, %v718
      %v743 = vpack.c.b16 %v723, %v719
      %v744 = vpack.c.b16 %v724, %v720
      %v762 = vand.u32 %v741, %v290
      %v765 = vand.u32 %v742, %v290
      %v768 = vand.u32 %v743, %v290
      %v771 = vand.u32 %v744, %v290
      %773 = vmatprep.subr.bf16.mxu0 %v726
      %774 = vmatpush1.bf16.msra.mxu0 %v725
      %775 = vmatprep.subr.bf16.mxu0 %v730
      %776 = vmatpush1.bf16.msra.mxu0 %v729
      %777 = vmatprep.subr.bf16.mxu0 %v734
      %778 = vmatpush1.bf16.msra.mxu0 %v733
      %779 = vmatprep.subr.bf16.mxu0 %v738
      %780 = vmatpush1.bf16.msra.mxu0 %v737
      %781 = vmatprep.subr.bf16.mxu0 %v765
      %782 = vmatpush1.bf16.msra.mxu0 %v762
      %783 = vmatprep.subr.bf16.mxu0 0
      %784 = vmatpush1.bf16.msra.mxu0 0
      %785 = vmatprep.subr.bf16.mxu0 0
      %786 = vmatpush1.bf16.msra.mxu0 0
      %787 = vmatprep.subr.bf16.mxu0 0
      %788 = vmatpush1.bf16.msra.mxu0 0
      %789 = vmatprep.subr.bf16.mxu0 0
      %790 = vmatpush1.bf16.msra.mxu0 0
      %791 = vmatprep.subr.bf16.mxu0 0
      %792 = vmatpush1.bf16.msra.mxu0 0
      %793 = vmatprep.subr.bf16.mxu0 0
      %794 = vmatpush1.bf16.msra.mxu0 0
      %795 = vmatprep.subr.bf16.mxu0 0
      %796 = vmatpush1.bf16.msra.mxu0 0
      %797 = vmatprep.subr.bf16.mxu0 0
      %798 = vmatpush1.bf16.msra.mxu0 0
      %799 = vmatprep.subr.bf16.mxu0 0
      %800 = vmatpush1.bf16.msra.mxu0 0
      %801 = vmatprep.subr.bf16.mxu0 0
      %802 = vmatpush1.bf16.msra.mxu0 0
      %803 = vmatprep.subr.bf16.mxu0 0
      %804 = vmatpush1.bf16.msra.mxu0 0
      %805 = vmatprep.mubr.bf16.mxu0 0
      %806 = vmatmul.mubr.bf16.gmra.mrb[0].mxu0 %v282
      %v807 = vpop.f32.mrb[0].mxu0
      %v808 = vadd.f32 0.0, %v807
      %v809 = vpop.f32.mrb[0].mxu0
      %v810 = vadd.f32 0.0, %v809
      %v811 = vpop.f32.mrb[0].mxu0
      %v812 = vadd.f32 0.0, %v811
      %v813 = vpop.f32.mrb[0].mxu0
      %v814 = vadd.f32 0.0, %v813
      %815 = vmatprep.mubr.bf16.mxu0 0
      %816 = vmatmul.mubr.bf16.gmra.mrb[0].mxu0 %v285
      %v817 = vpop.f32.mrb[0].mxu0
      %v818 = vadd.f32 0.0, %v817
      %v819 = vpop.f32.mrb[0].mxu0
      %v820 = vadd.f32 0.0, %v819
      %v821 = vpop.f32.mrb[0].mxu0
      %v822 = vadd.f32 0.0, %v821
      %v823 = vpop.f32.mrb[0].mxu0
      %v824 = vadd.f32 0.0, %v823
      %825 = vdwg.mxu0
      %826 = vmatprep.subr.bf16.mxu0 %v728
      %827 = vmatpush1.bf16.msra.mxu0 %v727
      %828 = vmatprep.subr.bf16.mxu0 %v732
      %829 = vmatpush1.bf16.msra.mxu0 %v731
      %830 = vmatprep.subr.bf16.mxu0 %v736
      %831 = vmatpush1.bf16.msra.mxu0 %v735
      %832 = vmatprep.subr.bf16.mxu0 %v740
      %833 = vmatpush1.bf16.msra.mxu0 %v739
      %834 = vmatprep.subr.bf16.mxu0 %v771
      %835 = vmatpush1.bf16.msra.mxu0 %v768
      %836 = vmatprep.subr.bf16.mxu0 0
      %837 = vmatpush1.bf16.msra.mxu0 0
      %838 = vmatprep.subr.bf16.mxu0 0
      %839 = vmatpush1.bf16.msra.mxu0 0
      %840 = vmatprep.subr.bf16.mxu0 0
      %841 = vmatpush1.bf16.msra.mxu0 0
      %842 = vmatprep.subr.bf16.mxu0 0
      %843 = vmatpush1.bf16.msra.mxu0 0
      %844 = vmatprep.subr.bf16.mxu0 0
      %845 = vmatpush1.bf16.msra.mxu0 0
      %846 = vmatprep.subr.bf16.mxu0 0
      %847 = vmatpush1.bf16.msra.mxu0 0
      %848 = vmatprep.subr.bf16.mxu0 0
      %849 = vmatpush1.bf16.msra.mxu0 0
      %850 = vmatprep.subr.bf16.mxu0 0
      %851 = vmatpush1.bf16.msra.mxu0 0
      %852 = vmatprep.subr.bf16.mxu0 0
      %853 = vmatpush1.bf16.msra.mxu0 0
      %854 = vmatprep.subr.bf16.mxu0 0
      %855 = vmatpush1.bf16.msra.mxu0 0
      %856 = vmatprep.subr.bf16.mxu0 0
      %857 = vmatpush1.bf16.msra.mxu0 0
      %858 = vmatprep.mubr.bf16.mxu0 0
      %859 = vmatmul.mubr.bf16.gmra.mrb[0].mxu0 %v282
      %v860 = vpop.f32.mrb[0].mxu0
      %v861 = vadd.f32 0.0, %v860
      %v862 = vpop.f32.mrb[0].mxu0
      %v863 = vadd.f32 0.0, %v862
      %v864 = vpop.f32.mrb[0].mxu0
      %v865 = vadd.f32 0.0, %v864
      %v866 = vpop.f32.mrb[0].mxu0
      %v867 = vadd.f32 0.0, %v866
      %868 = vmatprep.mubr.bf16.mxu0 0
      %869 = vmatmul.mubr.bf16.gmra.mrb[0].mxu0 %v285
      %v870 = vpop.f32.mrb[0].mxu0
      %v871 = vadd.f32 0.0, %v870
      %v872 = vpop.f32.mrb[0].mxu0
      %v873 = vadd.f32 0.0, %v872
      %v874 = vpop.f32.mrb[0].mxu0
      %v875 = vadd.f32 0.0, %v874
      %v876 = vpop.f32.mrb[0].mxu0
      %v877 = vadd.f32 0.0, %v876
      %878 = vdwg.mxu0
      %s879 = scalar_lea.vmem %s1, 480
      %v880 = vld [vmem:[%s879] sm:$0xff]
      %v881 = vld [vmem:[%s879 + $0x8] sm:$0xff]
      %v882 = vld [vmem:[%s879 + $0x10] sm:$0xff]
      %v883 = vld [vmem:[%s879 + $0x18] sm:$0xff]
      %v884 = vld [vmem:[%s879 + $0x20] sm:$0xff]
      %v885 = vld [vmem:[%s879 + $0x28] sm:$0xff]
      %v886 = vld [vmem:[%s879 + $0x30] sm:$0xff]
      %v887 = vld [vmem:[%s879 + $0x38] sm:$0xff]
      %v888 = vld [vmem:[%s879 + $0x40] sm:$0xff]
      %v889 = vld [vmem:[%s879 + $0x48] sm:$0xff]
      %v890 = vld [vmem:[%s879 + $0x50] sm:$0xff]
      %v891 = vld [vmem:[%s879 + $0x58] sm:$0xff]
      %v892 = vld [vmem:[%s879 + $0x60] sm:$0xff]
      %v893 = vld [vmem:[%s879 + $0x68] sm:$0xff]
      %v894 = vld [vmem:[%s879 + $0x70] sm:$0xff]
      %v895 = vld [vmem:[%s879 + $0x78] sm:$0xff]
      %v896 = vld [vmem:[%s879 + $0x80] sm:$0xff]
      %v897 = vld [vmem:[%s879 + $0x88] sm:$0xff]
      %v898 = vld [vmem:[%s879 + $0x90] sm:$0x33]
      %v899 = vld [vmem:[%s879 + $0x98] sm:$0x33]
      %v920 = vunpack.c.l.b16 %v880
      %v921 = vunpack.c.h.b16 %v880
      %v922 = vunpack.c.l.b16 %v881
      %v923 = vunpack.c.h.b16 %v881
      %v924 = vunpack.c.l.b16 %v882
      %v925 = vunpack.c.h.b16 %v882
      %v926 = vunpack.c.l.b16 %v883
      %v927 = vunpack.c.h.b16 %v883
      %v928 = vunpack.c.l.b16 %v884
      %v929 = vunpack.c.h.b16 %v884
      %v930 = vunpack.c.l.b16 %v885
      %v931 = vunpack.c.h.b16 %v885
      %v932 = vunpack.c.l.b16 %v886
      %v933 = vunpack.c.h.b16 %v886
      %v934 = vunpack.c.l.b16 %v887
      %v935 = vunpack.c.h.b16 %v887
      %v936 = vunpack.c.l.b16 %v888
      %v937 = vunpack.c.h.b16 %v888
      %v938 = vunpack.c.l.b16 %v889
      %v939 = vunpack.c.h.b16 %v889
      %v940 = vunpack.c.l.b16 %v890
      %v941 = vunpack.c.h.b16 %v890
      %v942 = vunpack.c.l.b16 %v891
      %v943 = vunpack.c.h.b16 %v891
      %v944 = vunpack.c.l.b16 %v892
      %v945 = vunpack.c.h.b16 %v892
      %v946 = vunpack.c.l.b16 %v893
      %v947 = vunpack.c.h.b16 %v893
      %v948 = vunpack.c.l.b16 %v894
      %v949 = vunpack.c.h.b16 %v894
      %v950 = vunpack.c.l.b16 %v895
      %v951 = vunpack.c.h.b16 %v895
      %v952 = vunpack.c.l.b16 %v896
      %v953 = vunpack.c.h.b16 %v896
      %v954 = vunpack.c.l.b16 %v897
      %v955 = vunpack.c.h.b16 %v897
      %v956 = vunpack.c.l.b16 %v898
      %v957 = vunpack.c.h.b16 %v898
      %v958 = vunpack.c.l.b16 %v899
      %v959 = vunpack.c.h.b16 %v899
      %v960 = vpack.c.b16 %v924, %v920
      %v961 = vpack.c.b16 %v925, %v921
      %v962 = vpack.c.b16 %v926, %v922
      %v963 = vpack.c.b16 %v927, %v923
      %v964 = vpack.c.b16 %v932, %v928
      %v965 = vpack.c.b16 %v933, %v929
      %v966 = vpack.c.b16 %v934, %v930
      %v967 = vpack.c.b16 %v935, %v931
      %v968 = vpack.c.b16 %v940, %v936
      %v969 = vpack.c.b16 %v941, %v937
      %v970 = vpack.c.b16 %v942, %v938
      %v971 = vpack.c.b16 %v943, %v939
      %v972 = vpack.c.b16 %v948, %v944
      %v973 = vpack.c.b16 %v949, %v945
      %v974 = vpack.c.b16 %v950, %v946
      %v975 = vpack.c.b16 %v951, %v947
      %v976 = vpack.c.b16 %v956, %v952
      %v977 = vpack.c.b16 %v957, %v953
      %v978 = vpack.c.b16 %v958, %v954
      %v979 = vpack.c.b16 %v959, %v955
      %v997 = vand.u32 %v976, %v290
      %v1000 = vand.u32 %v977, %v290
      %v1003 = vand.u32 %v978, %v290
      %v1006 = vand.u32 %v979, %v290
      %1008 = vmatprep.subr.bf16.mxu0 %v961
      %1009 = vmatpush1.bf16.msra.mxu0 %v960
      %1010 = vmatprep.subr.bf16.mxu0 %v965
      %1011 = vmatpush1.bf16.msra.mxu0 %v964
      %1012 = vmatprep.subr.bf16.mxu0 %v969
      %1013 = vmatpush1.bf16.msra.mxu0 %v968
      %1014 = vmatprep.subr.bf16.mxu0 %v973
      %1015 = vmatpush1.bf16.msra.mxu0 %v972
      %1016 = vmatprep.subr.bf16.mxu0 %v1000
      %1017 = vmatpush1.bf16.msra.mxu0 %v997
      %1018 = vmatprep.subr.bf16.mxu0 0
      %1019 = vmatpush1.bf16.msra.mxu0 0
      %1020 = vmatprep.subr.bf16.mxu0 0
      %1021 = vmatpush1.bf16.msra.mxu0 0
      %1022 = vmatprep.subr.bf16.mxu0 0
      %1023 = vmatpush1.bf16.msra.mxu0 0
      %1024 = vmatprep.subr.bf16.mxu0 0
      %1025 = vmatpush1.bf16.msra.mxu0 0
      %1026 = vmatprep.subr.bf16.mxu0 0
      %1027 = vmatpush1.bf16.msra.mxu0 0
      %1028 = vmatprep.subr.bf16.mxu0 0
      %1029 = vmatpush1.bf16.msra.mxu0 0
      %1030 = vmatprep.subr.bf16.mxu0 0
      %1031 = vmatpush1.bf16.msra.mxu0 0
      %1032 = vmatprep.subr.bf16.mxu0 0
      %1033 = vmatpush1.bf16.msra.mxu0 0
      %1034 = vmatprep.subr.bf16.mxu0 0
      %1035 = vmatpush1.bf16.msra.mxu0 0
      %1036 = vmatprep.subr.bf16.mxu0 0
      %1037 = vmatpush1.bf16.msra.mxu0 0
      %1038 = vmatprep.subr.bf16.mxu0 0
      %1039 = vmatpush1.bf16.msra.mxu0 0
      %1040 = vmatprep.mubr.bf16.mxu0 0
      %1041 = vmatmul.mubr.bf16.gmra.mrb[0].mxu0 %v282
      %v1042 = vpop.f32.mrb[0].mxu0
      %v1043 = vadd.f32 0.0, %v1042
      %v1044 = vpop.f32.mrb[0].mxu0
      %v1045 = vadd.f32 0.0, %v1044
      %v1046 = vpop.f32.mrb[0].mxu0
      %v1047 = vadd.f32 0.0, %v1046
      %v1048 = vpop.f32.mrb[0].mxu0
      %v1049 = vadd.f32 0.0, %v1048
      %1050 = vmatprep.mubr.bf16.mxu0 0
      %1051 = vmatmul.mubr.bf16.gmra.mrb[0].mxu0 %v285
      %v1052 = vpop.f32.mrb[0].mxu0
      %v1053 = vadd.f32 0.0, %v1052
      %v1054 = vpop.f32.mrb[0].mxu0
      %v1055 = vadd.f32 0.0, %v1054
      %v1056 = vpop.f32.mrb[0].mxu0
      %v1057 = vadd.f32 0.0, %v1056
      %v1058 = vpop.f32.mrb[0].mxu0
      %v1059 = vadd.f32 0.0, %v1058
      %1060 = vdwg.mxu0
      %1061 = vmatprep.subr.bf16.mxu0 %v963
      %1062 = vmatpush1.bf16.msra.mxu0 %v962
      %1063 = vmatprep.subr.bf16.mxu0 %v967
      %1064 = vmatpush1.bf16.msra.mxu0 %v966
      %1065 = vmatprep.subr.bf16.mxu0 %v971
      %1066 = vmatpush1.bf16.msra.mxu0 %v970
      %1067 = vmatprep.subr.bf16.mxu0 %v975
      %1068 = vmatpush1.bf16.msra.mxu0 %v974
      %1069 = vmatprep.subr.bf16.mxu0 %v1006
      %1070 = vmatpush1.bf16.msra.mxu0 %v1003
      %1071 = vmatprep.subr.bf16.mxu0 0
      %1072 = vmatpush1.bf16.msra.mxu0 0
      %1073 = vmatprep.subr.bf16.mxu0 0
      %1074 = vmatpush1.bf16.msra.mxu0 0
      %1075 = vmatprep.subr.bf16.mxu0 0
      %1076 = vmatpush1.bf16.msra.mxu0 0
      %1077 = vmatprep.subr.bf16.mxu0 0
      %1078 = vmatpush1.bf16.msra.mxu0 0
      %1079 = vmatprep.subr.bf16.mxu0 0
      %1080 = vmatpush1.bf16.msra.mxu0 0
      %1081 = vmatprep.subr.bf16.mxu0 0
      %1082 = vmatpush1.bf16.msra.mxu0 0
      %1083 = vmatprep.subr.bf16.mxu0 0
      %1084 = vmatpush1.bf16.msra.mxu0 0
      %1085 = vmatprep.subr.bf16.mxu0 0
      %1086 = vmatpush1.bf16.msra.mxu0 0
      %1087 = vmatprep.subr.bf16.mxu0 0
      %1088 = vmatpush1.bf16.msra.mxu0 0
      %1089 = vmatprep.subr.bf16.mxu0 0
      %1090 = vmatpush1.bf16.msra.mxu0 0
      %1091 = vmatprep.subr.bf16.mxu0 0
      %1092 = vmatpush1.bf16.msra.mxu0 0
      %1093 = vmatprep.mubr.bf16.mxu0 0
      %1094 = vmatmul.mubr.bf16.gmra.mrb[0].mxu0 %v282
      %v1095 = vpop.f32.mrb[0].mxu0
      %v1096 = vadd.f32 0.0, %v1095
      %v1097 = vpop.f32.mrb[0].mxu0
      %v1098 = vadd.f32 0.0, %v1097
      %v1099 = vpop.f32.mrb[0].mxu0
      %v1100 = vadd.f32 0.0, %v1099
      %v1101 = vpop.f32.mrb[0].mxu0
      %v1102 = vadd.f32 0.0, %v1101
      %1103 = vmatprep.mubr.bf16.mxu0 0
      %1104 = vmatmul.mubr.bf16.gmra.mrb[0].mxu0 %v285
      %v1105 = vpop.f32.mrb[0].mxu0
      %v1106 = vadd.f32 0.0, %v1105
      %v1107 = vpop.f32.mrb[0].mxu0
      %v1108 = vadd.f32 0.0, %v1107
      %v1109 = vpop.f32.mrb[0].mxu0
      %v1110 = vadd.f32 0.0, %v1109
      %v1111 = vpop.f32.mrb[0].mxu0
      %v1112 = vadd.f32 0.0, %v1111
      %1113 = vdwg.mxu0
      %v1114 = vadd.f32 %v338, %v340
      %v1115 = vadd.f32 %v1114, %v391
      %vm1116 = vcmask 64512
      %v1117 = vsel %vm1116, %v393, 0.0
      %v1118 = vadd.f32 %v1115, %v1117
      %1119 = vadd.xlane.f32.xlu0 %v1118
      %v1120 = vpop.xlane.xlu0 %1119
      %v1121 = vadd.f32 %v342, %v344
      %v1122 = vadd.f32 %v1121, %v395
      %v1123 = vsel %vm1116, %v397, 0.0
      %v1124 = vadd.f32 %v1122, %v1123
      %1125 = vadd.xlane.f32.xlu0 %v1124
      %v1126 = vpop.xlane.xlu0 %1125
      %v1127 = vadd.f32 %v348, %v350
      %v1128 = vadd.f32 %v1127, %v401
      %v1129 = vsel %vm1116, %v403, 0.0
      %v1130 = vadd.f32 %v1128, %v1129
      %1131 = vadd.xlane.f32.xlu0 %v1130
      %v1132 = vpop.xlane.xlu0 %1131
      %v1133 = vadd.f32 %v352, %v354
      %v1134 = vadd.f32 %v1133, %v405
      %v1135 = vsel %vm1116, %v407, 0.0
      %v1136 = vadd.f32 %v1134, %v1135
      %1137 = vadd.xlane.f32.xlu0 %v1136
      %v1138 = vpop.xlane.xlu0 %1137
      %v1139 = vadd.f32 %v573, %v575
      %v1140 = vadd.f32 %v1139, %v626
      %v1141 = vsel %vm1116, %v628, 0.0
      %v1142 = vadd.f32 %v1140, %v1141
      %1143 = vadd.xlane.f32.xlu0 %v1142
      %v1144 = vpop.xlane.xlu0 %1143
      %v1145 = vadd.f32 %v577, %v579
      %v1146 = vadd.f32 %v1145, %v630
      %v1147 = vsel %vm1116, %v632, 0.0
      %v1148 = vadd.f32 %v1146, %v1147
      %1149 = vadd.xlane.f32.xlu0 %v1148
      %v1150 = vpop.xlane.xlu0 %1149
      %v1151 = vadd.f32 %v583, %v585
      %v1152 = vadd.f32 %v1151, %v636
      %v1153 = vsel %vm1116, %v638, 0.0
      %v1154 = vadd.f32 %v1152, %v1153
      %1155 = vadd.xlane.f32.xlu0 %v1154
      %v1156 = vpop.xlane.xlu0 %1155
      %v1157 = vadd.f32 %v587, %v589
      %v1158 = vadd.f32 %v1157, %v640
      %v1159 = vsel %vm1116, %v642, 0.0
      %v1160 = vadd.f32 %v1158, %v1159
      %1161 = vadd.xlane.f32.xlu0 %v1160
      %v1162 = vpop.xlane.xlu0 %1161
      %v1163 = vadd.f32 %v1120, %v1144
      %v1164 = vadd.f32 %v1126, %v1150
      %v1165 = vadd.f32 %v1132, %v1156
      %v1166 = vadd.f32 %v1138, %v1162
      %v1167 = vadd.f32 %v808, %v810
      %v1168 = vadd.f32 %v1167, %v861
      %v1169 = vsel %vm1116, %v863, 0.0
      %v1170 = vadd.f32 %v1168, %v1169
      %1171 = vadd.xlane.f32.xlu0 %v1170
      %v1172 = vpop.xlane.xlu0 %1171
      %v1173 = vadd.f32 %v812, %v814
      %v1174 = vadd.f32 %v1173, %v865
      %v1175 = vsel %vm1116, %v867, 0.0
      %v1176 = vadd.f32 %v1174, %v1175
      %1177 = vadd.xlane.f32.xlu0 %v1176
      %v1178 = vpop.xlane.xlu0 %1177
      %v1179 = vadd.f32 %v818, %v820
      %v1180 = vadd.f32 %v1179, %v871
      %v1181 = vsel %vm1116, %v873, 0.0
      %v1182 = vadd.f32 %v1180, %v1181
      %1183 = vadd.xlane.f32.xlu0 %v1182
      %v1184 = vpop.xlane.xlu0 %1183
      %v1185 = vadd.f32 %v822, %v824
      %v1186 = vadd.f32 %v1185, %v875
      %v1187 = vsel %vm1116, %v877, 0.0
      %v1188 = vadd.f32 %v1186, %v1187
      %1189 = vadd.xlane.f32.xlu0 %v1188
      %v1190 = vpop.xlane.xlu0 %1189
      %v1191 = vadd.f32 %v1163, %v1172
      %v1192 = vadd.f32 %v1164, %v1178
      %v1193 = vadd.f32 %v1165, %v1184
      %v1194 = vadd.f32 %v1166, %v1190
      %v1195 = vadd.f32 %v1043, %v1045
      %v1196 = vadd.f32 %v1195, %v1096
      %v1197 = vsel %vm1116, %v1098, 0.0
      %v1198 = vadd.f32 %v1196, %v1197
      %1199 = vadd.xlane.f32.xlu0 %v1198
      %v1200 = vpop.xlane.xlu0 %1199
      %v1201 = vadd.f32 %v1047, %v1049
      %v1202 = vadd.f32 %v1201, %v1100
      %v1203 = vsel %vm1116, %v1102, 0.0
      %v1204 = vadd.f32 %v1202, %v1203
      %1205 = vadd.xlane.f32.xlu0 %v1204
      %v1206 = vpop.xlane.xlu0 %1205
      %v1207 = vadd.f32 %v1053, %v1055
      %v1208 = vadd.f32 %v1207, %v1106
      %v1209 = vsel %vm1116, %v1108, 0.0
      %v1210 = vadd.f32 %v1208, %v1209
      %1211 = vadd.xlane.f32.xlu0 %v1210
      %v1212 = vpop.xlane.xlu0 %1211
      %v1213 = vadd.f32 %v1057, %v1059
      %v1214 = vadd.f32 %v1213, %v1110
      %v1215 = vsel %vm1116, %v1112, 0.0
      %v1216 = vadd.f32 %v1214, %v1215
      %1217 = vadd.xlane.f32.xlu0 %v1216
      %v1218 = vpop.xlane.xlu0 %1217
      %v1219 = vadd.f32 %v1191, %v1200
      %v1220 = vadd.f32 %v1192, %v1206
      %v1221 = vadd.f32 %v1193, %v1212
      %v1222 = vadd.f32 %v1194, %v1218
      %v1223 = vmul.f32 %v1219, 0.0006377551
      %v1224 = vmul.f32 %v1220, 0.0006377551
      %v1225 = vmul.f32 %v1221, 0.0006377551
      %v1226 = vmul.f32 %v1222, 0.0006377551
      %v1227 = vsub.f32 %v338, %v1223
      %v1228 = vsub.f32 %v340, %v1223
      %v1229 = vsub.f32 %v391, %v1223
      %v1230 = vsub.f32 %v393, %v1223
      %v1231 = vsub.f32 %v342, %v1224
      %v1232 = vsub.f32 %v344, %v1224
      %v1233 = vsub.f32 %v395, %v1224
      %v1234 = vsub.f32 %v397, %v1224
      %v1235 = vsub.f32 %v348, %v1225
      %v1236 = vsub.f32 %v350, %v1225
      %v1237 = vsub.f32 %v401, %v1225
      %v1238 = vsub.f32 %v403, %v1225
      %v1239 = vsub.f32 %v352, %v1226
      %v1240 = vsub.f32 %v354, %v1226
      %v1241 = vsub.f32 %v405, %v1226
      %v1242 = vsub.f32 %v407, %v1226
      %v1243 = vsub.f32 %v573, %v1223
      %v1244 = vsub.f32 %v575, %v1223
      %v1245 = vsub.f32 %v626, %v1223
      %v1246 = vsub.f32 %v628, %v1223
      %v1247 = vsub.f32 %v577, %v1224
      %v1248 = vsub.f32 %v579, %v1224
      %v1249 = vsub.f32 %v630, %v1224
      %v1250 = vsub.f32 %v632, %v1224
      %v1251 = vsub.f32 %v583, %v1225
      %v1252 = vsub.f32 %v585, %v1225
      %v1253 = vsub.f32 %v636, %v1225
      %v1254 = vsub.f32 %v638, %v1225
      %v1255 = vsub.f32 %v587, %v1226
      %v1256 = vsub.f32 %v589, %v1226
      %v1257 = vsub.f32 %v640, %v1226
      %v1258 = vsub.f32 %v642, %v1226
      %v1259 = vsub.f32 %v808, %v1223
      %v1260 = vsub.f32 %v810, %v1223
      %v1261 = vsub.f32 %v861, %v1223
      %v1262 = vsub.f32 %v863, %v1223
      %v1263 = vsub.f32 %v812, %v1224
      %v1264 = vsub.f32 %v814, %v1224
      %v1265 = vsub.f32 %v865, %v1224
      %v1266 = vsub.f32 %v867, %v1224
      %v1267 = vsub.f32 %v818, %v1225
      %v1268 = vsub.f32 %v820, %v1225
      %v1269 = vsub.f32 %v871, %v1225
      %v1270 = vsub.f32 %v873, %v1225
      %v1271 = vsub.f32 %v822, %v1226
      %v1272 = vsub.f32 %v824, %v1226
      %v1273 = vsub.f32 %v875, %v1226
      %v1274 = vsub.f32 %v877, %v1226
      %v1275 = vsub.f32 %v1043, %v1223
      %v1276 = vsub.f32 %v1045, %v1223
      %v1277 = vsub.f32 %v1096, %v1223
      %v1278 = vsub.f32 %v1098, %v1223
      %v1279 = vsub.f32 %v1047, %v1224
      %v1280 = vsub.f32 %v1049, %v1224
      %v1281 = vsub.f32 %v1100, %v1224
      %v1282 = vsub.f32 %v1102, %v1224
      %v1283 = vsub.f32 %v1053, %v1225
      %v1284 = vsub.f32 %v1055, %v1225
      %v1285 = vsub.f32 %v1106, %v1225
      %v1286 = vsub.f32 %v1108, %v1225
      %v1287 = vsub.f32 %v1057, %v1226
      %v1288 = vsub.f32 %v1059, %v1226
      %v1289 = vsub.f32 %v1110, %v1226
      %v1290 = vsub.f32 %v1112, %v1226
      %v1291 = vmul.f32 %v1227, %v1227
      %v1292 = vmul.f32 %v1228, %v1228
      %v1293 = vmul.f32 %v1229, %v1229
      %v1294 = vmul.f32 %v1230, %v1230
      %v1295 = vmul.f32 %v1231, %v1231
      %v1296 = vmul.f32 %v1232, %v1232
      %v1297 = vmul.f32 %v1233, %v1233
      %v1298 = vmul.f32 %v1234, %v1234
      %v1299 = vmul.f32 %v1235, %v1235
      %v1300 = vmul.f32 %v1236, %v1236
      %v1301 = vmul.f32 %v1237, %v1237
      %v1302 = vmul.f32 %v1238, %v1238
      %v1303 = vmul.f32 %v1239, %v1239
      %v1304 = vmul.f32 %v1240, %v1240
      %v1305 = vmul.f32 %v1241, %v1241
      %v1306 = vmul.f32 %v1242, %v1242
      %v1307 = vadd.f32 %v1291, %v1292
      %v1308 = vadd.f32 %v1307, %v1293
      %v1309 = vsel %vm1116, %v1294, 0.0
      %v1310 = vadd.f32 %v1308, %v1309
      %1311 = vadd.xlane.f32.xlu0 %v1310
      %v1312 = vpop.xlane.xlu0 %1311
      %v1313 = vadd.f32 %v1295, %v1296
      %v1314 = vadd.f32 %v1313, %v1297
      %v1315 = vsel %vm1116, %v1298, 0.0
      %v1316 = vadd.f32 %v1314, %v1315
      %1317 = vadd.xlane.f32.xlu0 %v1316
      %v1318 = vpop.xlane.xlu0 %1317
      %v1319 = vadd.f32 %v1299, %v1300
      %v1320 = vadd.f32 %v1319, %v1301
      %v1321 = vsel %vm1116, %v1302, 0.0
      %v1322 = vadd.f32 %v1320, %v1321
      %1323 = vadd.xlane.f32.xlu0 %v1322
      %v1324 = vpop.xlane.xlu0 %1323
      %v1325 = vadd.f32 %v1303, %v1304
      %v1326 = vadd.f32 %v1325, %v1305
      %v1327 = vsel %vm1116, %v1306, 0.0
      %v1328 = vadd.f32 %v1326, %v1327
      %1329 = vadd.xlane.f32.xlu0 %v1328
      %v1330 = vpop.xlane.xlu0 %1329
      %v1331 = vmul.f32 %v1243, %v1243
      %v1332 = vmul.f32 %v1244, %v1244
      %v1333 = vmul.f32 %v1245, %v1245
      %v1334 = vmul.f32 %v1246, %v1246
      %v1335 = vmul.f32 %v1247, %v1247
      %v1336 = vmul.f32 %v1248, %v1248
      %v1337 = vmul.f32 %v1249, %v1249
      %v1338 = vmul.f32 %v1250, %v1250
      %v1339 = vmul.f32 %v1251, %v1251
      %v1340 = vmul.f32 %v1252, %v1252
      %v1341 = vmul.f32 %v1253, %v1253
      %v1342 = vmul.f32 %v1254, %v1254
      %v1343 = vmul.f32 %v1255, %v1255
      %v1344 = vmul.f32 %v1256, %v1256
      %v1345 = vmul.f32 %v1257, %v1257
      %v1346 = vmul.f32 %v1258, %v1258
      %v1347 = vadd.f32 %v1331, %v1332
      %v1348 = vadd.f32 %v1347, %v1333
      %v1349 = vsel %vm1116, %v1334, 0.0
      %v1350 = vadd.f32 %v1348, %v1349
      %1351 = vadd.xlane.f32.xlu0 %v1350
      %v1352 = vpop.xlane.xlu0 %1351
      %v1353 = vadd.f32 %v1335, %v1336
      %v1354 = vadd.f32 %v1353, %v1337
      %v1355 = vsel %vm1116, %v1338, 0.0
      %v1356 = vadd.f32 %v1354, %v1355
      %1357 = vadd.xlane.f32.xlu0 %v1356
      %v1358 = vpop.xlane.xlu0 %1357
      %v1359 = vadd.f32 %v1339, %v1340
      %v1360 = vadd.f32 %v1359, %v1341
      %v1361 = vsel %vm1116, %v1342, 0.0
      %v1362 = vadd.f32 %v1360, %v1361
      %1363 = vadd.xlane.f32.xlu0 %v1362
      %v1364 = vpop.xlane.xlu0 %1363
      %v1365 = vadd.f32 %v1343, %v1344
      %v1366 = vadd.f32 %v1365, %v1345
      %v1367 = vsel %vm1116, %v1346, 0.0
      %v1368 = vadd.f32 %v1366, %v1367
      %1369 = vadd.xlane.f32.xlu0 %v1368
      %v1370 = vpop.xlane.xlu0 %1369
      %v1371 = vadd.f32 %v1312, %v1352
      %v1372 = vadd.f32 %v1318, %v1358
      %v1373 = vadd.f32 %v1324, %v1364
      %v1374 = vadd.f32 %v1330, %v1370
      %v1375 = vmul.f32 %v1259, %v1259
      %v1376 = vmul.f32 %v1260, %v1260
      %v1377 = vmul.f32 %v1261, %v1261
      %v1378 = vmul.f32 %v1262, %v1262
      %v1379 = vmul.f32 %v1263, %v1263
      %v1380 = vmul.f32 %v1264, %v1264
      %v1381 = vmul.f32 %v1265, %v1265
      %v1382 = vmul.f32 %v1266, %v1266
      %v1383 = vmul.f32 %v1267, %v1267
      %v1384 = vmul.f32 %v1268, %v1268
      %v1385 = vmul.f32 %v1269, %v1269
      %v1386 = vmul.f32 %v1270, %v1270
      %v1387 = vmul.f32 %v1271, %v1271
      %v1388 = vmul.f32 %v1272, %v1272
      %v1389 = vmul.f32 %v1273, %v1273
      %v1390 = vmul.f32 %v1274, %v1274
      %v1391 = vadd.f32 %v1375, %v1376
      %v1392 = vadd.f32 %v1391, %v1377
      %v1393 = vsel %vm1116, %v1378, 0.0
      %v1394 = vadd.f32 %v1392, %v1393
      %1395 = vadd.xlane.f32.xlu0 %v1394
      %v1396 = vpop.xlane.xlu0 %1395
      %v1397 = vadd.f32 %v1379, %v1380
      %v1398 = vadd.f32 %v1397, %v1381
      %v1399 = vsel %vm1116, %v1382, 0.0
      %v1400 = vadd.f32 %v1398, %v1399
      %1401 = vadd.xlane.f32.xlu0 %v1400
      %v1402 = vpop.xlane.xlu0 %1401
      %v1403 = vadd.f32 %v1383, %v1384
      %v1404 = vadd.f32 %v1403, %v1385
      %v1405 = vsel %vm1116, %v1386, 0.0
      %v1406 = vadd.f32 %v1404, %v1405
      %1407 = vadd.xlane.f32.xlu0 %v1406
      %v1408 = vpop.xlane.xlu0 %1407
      %v1409 = vadd.f32 %v1387, %v1388
      %v1410 = vadd.f32 %v1409, %v1389
      %v1411 = vsel %vm1116, %v1390, 0.0
      %v1412 = vadd.f32 %v1410, %v1411
      %1413 = vadd.xlane.f32.xlu0 %v1412
      %v1414 = vpop.xlane.xlu0 %1413
      %v1415 = vadd.f32 %v1371, %v1396
      %v1416 = vadd.f32 %v1372, %v1402
      %v1417 = vadd.f32 %v1373, %v1408
      %v1418 = vadd.f32 %v1374, %v1414
      %v1419 = vmul.f32 %v1275, %v1275
      %v1420 = vmul.f32 %v1276, %v1276
      %v1421 = vmul.f32 %v1277, %v1277
      %v1422 = vmul.f32 %v1278, %v1278
      %v1423 = vmul.f32 %v1279, %v1279
      %v1424 = vmul.f32 %v1280, %v1280
      %v1425 = vmul.f32 %v1281, %v1281
      %v1426 = vmul.f32 %v1282, %v1282
      %v1427 = vmul.f32 %v1283, %v1283
      %v1428 = vmul.f32 %v1284, %v1284
      %v1429 = vmul.f32 %v1285, %v1285
      %v1430 = vmul.f32 %v1286, %v1286
      %v1431 = vmul.f32 %v1287, %v1287
      %v1432 = vmul.f32 %v1288, %v1288
      %v1433 = vmul.f32 %v1289, %v1289
      %v1434 = vmul.f32 %v1290, %v1290
      %v1435 = vadd.f32 %v1419, %v1420
      %v1436 = vadd.f32 %v1435, %v1421
      %v1437 = vsel %vm1116, %v1422, 0.0
      %v1438 = vadd.f32 %v1436, %v1437
      %1439 = vadd.xlane.f32.xlu0 %v1438
      %v1440 = vpop.xlane.xlu0 %1439
      %v1441 = vadd.f32 %v1423, %v1424
      %v1442 = vadd.f32 %v1441, %v1425
      %v1443 = vsel %vm1116, %v1426, 0.0
      %v1444 = vadd.f32 %v1442, %v1443
      %1445 = vadd.xlane.f32.xlu0 %v1444
      %v1446 = vpop.xlane.xlu0 %1445
      %v1447 = vadd.f32 %v1427, %v1428
      %v1448 = vadd.f32 %v1447, %v1429
      %v1449 = vsel %vm1116, %v1430, 0.0
      %v1450 = vadd.f32 %v1448, %v1449
      %1451 = vadd.xlane.f32.xlu0 %v1450
      %v1452 = vpop.xlane.xlu0 %1451
      %v1453 = vadd.f32 %v1431, %v1432
      %v1454 = vadd.f32 %v1453, %v1433
      %v1455 = vsel %vm1116, %v1434, 0.0
      %v1456 = vadd.f32 %v1454, %v1455
      %1457 = vadd.xlane.f32.xlu0 %v1456
      %v1458 = vpop.xlane.xlu0 %1457
      %v1459 = vadd.f32 %v1415, %v1440
      %v1460 = vadd.f32 %v1416, %v1446
      %v1461 = vadd.f32 %v1417, %v1452
      %v1462 = vadd.f32 %v1418, %v1458
      %v1463 = vmul.f32 %v1459, 0.0006377551
      %v1464 = vmul.f32 %v1460, 0.0006377551
      %v1465 = vmul.f32 %v1461, 0.0006377551
      %v1466 = vmul.f32 %v1462, 0.0006377551
      %v1467 = vmax.f32 %v338, %v573
      %v1468 = vmax.f32 %v340, %v575
      %v1469 = vmax.f32 %v391, %v626
      %v1470 = vmax.f32 %v393, %v628
      %v1471 = vmax.f32 %v342, %v577
      %v1472 = vmax.f32 %v344, %v579
      %v1473 = vmax.f32 %v395, %v630
      %v1474 = vmax.f32 %v397, %v632
      %v1475 = vmax.f32 %v348, %v583
      %v1476 = vmax.f32 %v350, %v585
      %v1477 = vmax.f32 %v401, %v636
      %v1478 = vmax.f32 %v403, %v638
      %v1479 = vmax.f32 %v352, %v587
      %v1480 = vmax.f32 %v354, %v589
      %v1481 = vmax.f32 %v405, %v640
      %v1482 = vmax.f32 %v407, %v642
      %v1483 = vmax.f32 %v808, %v1043
      %v1484 = vmax.f32 %v810, %v1045
      %v1485 = vmax.f32 %v861, %v1096
      %v1486 = vmax.f32 %v863, %v1098
      %v1487 = vmax.f32 %v812, %v1047
      %v1488 = vmax.f32 %v814, %v1049
      %v1489 = vmax.f32 %v865, %v1100
      %v1490 = vmax.f32 %v867, %v1102
      %v1491 = vmax.f32 %v818, %v1053
      %v1492 = vmax.f32 %v820, %v1055
      %v1493 = vmax.f32 %v871, %v1106
      %v1494 = vmax.f32 %v873, %v1108
      %v1495 = vmax.f32 %v822, %v1057
      %v1496 = vmax.f32 %v824, %v1059
      %v1497 = vmax.f32 %v875, %v1110
      %v1498 = vmax.f32 %v877, %v1112
      %v1499 = vmax.f32 %v1467, %v1483
      %v1500 = vmax.f32 %v1468, %v1484
      %v1501 = vmax.f32 %v1469, %v1485
      %v1502 = vmax.f32 %v1470, %v1486
      %v1503 = vmax.f32 %v1471, %v1487
      %v1504 = vmax.f32 %v1472, %v1488
      %v1505 = vmax.f32 %v1473, %v1489
      %v1506 = vmax.f32 %v1474, %v1490
      %v1507 = vmax.f32 %v1475, %v1491
      %v1508 = vmax.f32 %v1476, %v1492
      %v1509 = vmax.f32 %v1477, %v1493
      %v1510 = vmax.f32 %v1478, %v1494
      %v1511 = vmax.f32 %v1479, %v1495
      %v1512 = vmax.f32 %v1480, %v1496
      %v1513 = vmax.f32 %v1481, %v1497
      %v1514 = vmax.f32 %v1482, %v1498
      %v1515 = vsub.f32 %v1499, %v1223
      %v1516 = vsub.f32 %v1500, %v1223
      %v1517 = vsub.f32 %v1501, %v1223
      %v1518 = vsub.f32 %v1502, %v1223
      %v1519 = vsub.f32 %v1503, %v1224
      %v1520 = vsub.f32 %v1504, %v1224
      %v1521 = vsub.f32 %v1505, %v1224
      %v1522 = vsub.f32 %v1506, %v1224
      %v1523 = vsub.f32 %v1507, %v1225
      %v1524 = vsub.f32 %v1508, %v1225
      %v1525 = vsub.f32 %v1509, %v1225
      %v1526 = vsub.f32 %v1510, %v1225
      %v1527 = vsub.f32 %v1511, %v1226
      %v1528 = vsub.f32 %v1512, %v1226
      %v1529 = vsub.f32 %v1513, %v1226
      %v1530 = vsub.f32 %v1514, %v1226
      %v1531 = vadd.f32 %v1463, 0.0001
      %v1532 = vadd.f32 %v1464, 0.0001
      %v1533 = vadd.f32 %v1465, 0.0001
      %v1534 = vadd.f32 %v1466, 0.0001
      %v1535 = vrsqrt.pop %v1531
      %v1536 = vrsqrt.pop %v1532
      %v1537 = vrsqrt.pop %v1533
      %v1538 = vrsqrt.pop %v1534
      %v1539 = vmul.f32 %v1515, %v1535
      %v1540 = vmul.f32 %v1516, %v1535
      %v1541 = vmul.f32 %v1517, %v1535
      %v1542 = vmul.f32 %v1518, %v1535
      %v1543 = vmul.f32 %v1519, %v1536
      %v1544 = vmul.f32 %v1520, %v1536
      %v1545 = vmul.f32 %v1521, %v1536
      %v1546 = vmul.f32 %v1522, %v1536
      %v1547 = vmul.f32 %v1523, %v1537
      %v1548 = vmul.f32 %v1524, %v1537
      %v1549 = vmul.f32 %v1525, %v1537
      %v1550 = vmul.f32 %v1526, %v1537
      %v1551 = vmul.f32 %v1527, %v1538
      %v1552 = vmul.f32 %v1528, %v1538
      %v1553 = vmul.f32 %v1529, %v1538
      %v1554 = vmul.f32 %v1530, %v1538
      %vm1555 = vcmp.ge.f32.partialorder %v1539, 0.0
      %vm1556 = vcmp.ge.f32.partialorder %v1540, 0.0
      %vm1557 = vcmp.ge.f32.partialorder %v1541, 0.0
      %vm1558 = vcmp.ge.f32.partialorder %v1542, 0.0
      %vm1559 = vcmp.ge.f32.partialorder %v1543, 0.0
      %vm1560 = vcmp.ge.f32.partialorder %v1544, 0.0
      %vm1561 = vcmp.ge.f32.partialorder %v1545, 0.0
      %vm1562 = vcmp.ge.f32.partialorder %v1546, 0.0
      %vm1563 = vcmp.ge.f32.partialorder %v1547, 0.0
      %vm1564 = vcmp.ge.f32.partialorder %v1548, 0.0
      %vm1565 = vcmp.ge.f32.partialorder %v1549, 0.0
      %vm1566 = vcmp.ge.f32.partialorder %v1550, 0.0
      %vm1567 = vcmp.ge.f32.partialorder %v1551, 0.0
      %vm1568 = vcmp.ge.f32.partialorder %v1552, 0.0
      %vm1569 = vcmp.ge.f32.partialorder %v1553, 0.0
      %vm1570 = vcmp.ge.f32.partialorder %v1554, 0.0
      %v1571 = vmul.f32 %v1539, 0.01
      %v1572 = vmul.f32 %v1540, 0.01
      %v1573 = vmul.f32 %v1541, 0.01
      %v1574 = vmul.f32 %v1542, 0.01
      %v1575 = vmul.f32 %v1543, 0.01
      %v1576 = vmul.f32 %v1544, 0.01
      %v1577 = vmul.f32 %v1545, 0.01
      %v1578 = vmul.f32 %v1546, 0.01
      %v1579 = vmul.f32 %v1547, 0.01
      %v1580 = vmul.f32 %v1548, 0.01
      %v1581 = vmul.f32 %v1549, 0.01
      %v1582 = vmul.f32 %v1550, 0.01
      %v1583 = vmul.f32 %v1551, 0.01
      %v1584 = vmul.f32 %v1552, 0.01
      %v1585 = vmul.f32 %v1553, 0.01
      %v1586 = vmul.f32 %v1554, 0.01
      %v1587 = vsel %vm1555, %v1539, %v1571
      %v1588 = vsel %vm1556, %v1540, %v1572
      %v1589 = vsel %vm1557, %v1541, %v1573
      %v1590 = vsel %vm1558, %v1542, %v1574
      %v1591 = vsel %vm1559, %v1543, %v1575
      %v1592 = vsel %vm1560, %v1544, %v1576
      %v1593 = vsel %vm1561, %v1545, %v1577
      %v1594 = vsel %vm1562, %v1546, %v1578
      %v1595 = vsel %vm1563, %v1547, %v1579
      %v1596 = vsel %vm1564, %v1548, %v1580
      %v1597 = vsel %vm1565, %v1549, %v1581
      %v1598 = vsel %vm1566, %v1550, %v1582
      %v1599 = vsel %vm1567, %v1551, %v1583
      %v1600 = vsel %vm1568, %v1552, %v1584
      %v1601 = vsel %vm1569, %v1553, %v1585
      %v1602 = vsel %vm1570, %v1554, %v1586
      %1603 = vst [vmem:[%s147] sm:$0xff] %v1587
      %1604 = vst [vmem:[%s147 + $0x8] sm:$0xff] %v1588
      %1605 = vst [vmem:[%s147 + $0x10] sm:$0xff] %v1589
      %1606 = vst.msk [vmem:[%s147 + $0x18] sm:$0xff] %vm1116, %v1590
      %1607 = vst [vmem:[%s147 + $0x20] sm:$0xff] %v1591
      %1608 = vst [vmem:[%s147 + $0x28] sm:$0xff] %v1592
      %1609 = vst [vmem:[%s147 + $0x30] sm:$0xff] %v1593
      %1610 = vst.msk [vmem:[%s147 + $0x38] sm:$0xff] %vm1116, %v1594
      %1611 = vst [vmem:[%s147 + $0x40] sm:$0xff] %v1595
      %1612 = vst [vmem:[%s147 + $0x48] sm:$0xff] %v1596
      %1613 = vst [vmem:[%s147 + $0x50] sm:$0xff] %v1597
      %1614 = vst.msk [vmem:[%s147 + $0x58] sm:$0xff] %vm1116, %v1598
      %1615 = vst [vmem:[%s147 + $0x60] sm:$0xff] %v1599
      %1616 = vst [vmem:[%s147 + $0x68] sm:$0xff] %v1600
      %1617 = vst [vmem:[%s147 + $0x70] sm:$0xff] %v1601
      %1618 = vst.msk [vmem:[%s147 + $0x78] sm:$0xff] %vm1116, %v1602
      %s1619 = smul.u32 4, %s13
      %p1620 = scmp.lt.s32.totalorder %s1619, 7
      %s1621 = scalar_select %p1620, %s1619, 7
      %s1622 = smul.addr %s1621, 4
      %s1623 = smul.addr %s1622, 8
      %s1624 = scalar_lea.vmem %s2, %s1623
      // Predicated region
      $region29: #{_lambda_.3} parent=27 // pred_check
        %p1625 = pneg %p78
      $region30: #{_lambda_.3} parent=27 // pred_check_branch
        %1627 = sbr.rel (%p1625) target = $region32
      $region31: #{_lambda_.3} parent=27 // pred_region
        %s1628 = smul.u32 4, %s13
      $region32: #{_lambda_.3} parent=27 // pred_fallthru
        _
    $region28: #{_lambda_.3} parent=5 // pred_fallthru
      _
    %p1629 = scmp.le.s32.totalorder 2, %s8
    // Predicated region
    $region33: #{_lambda_.3} parent=5 // pred_check
      %p1630 = pneg %p1629
    $region34: #{_lambda_.3} parent=5 // pred_check_branch
      %1632 = sbr.rel (%p1630) target = $region36
    $region35: #{_lambda_.3} parent=5 // pred_region
      %s1633 = ssub.s32 %s8, 2
      // Predicated region
      $region37: #{_lambda_.3} parent=35 // pred_check
        %p1634 = pneg %p84
      $region38: #{_lambda_.3} parent=35 // pred_check_branch
        %1636 = sbr.rel (%p1634) target = $region40
      $region39: #{_lambda_.3} parent=35 // pred_region
        %s1637 = smul.u32 4, %s14
        %p1638 = scmp.lt.s32.totalorder %s1637, 7
        %s1639 = scalar_select %p1638, %s1637, 7
        %s1640 = smul.addr %s1639, 4
        %s1641 = smul.addr %s1640, 8
        %s1642 = scalar_lea.vmem %s2, %s1641
      $region40: #{_lambda_.3} parent=35 // pred_fallthru
        _
    $region36: #{_lambda_.3} parent=5 // pred_fallthru
      _
  $region6: #{_lambda_.3} parent=0 // loop_footer
    %s12 = sadd.s32 1, %s8
  $region7: #{_lambda_.3} parent=0 // loop_footer_branch
    %7 = sbr.rel target = $region3
  $region8: #{_lambda_.3} parent=0 // loop_exit
    _

// kernel: _lambda_.4
$region0: #{_lambda_.4}
  #allocation0 [shape = 'u32[]', space=smem, size = 0x4, offset = 0x4, fixed_abs, tag = 'smem constant byte address 0x4 - core index']
  #allocation1 [shape = 'u32[144,128]{1,0:T(1,128)}', space=vmem, size = 0x12000, scoped, tag = 'internal scratch']
  %s0 = inlined_call_operand.vmem [shape: bf16[32,1600], index: 0, kind: input, shape index: {}]
  %s1 = inlined_call_operand.vmem [shape: bf16[4,1600,50], index: 1, kind: input, shape index: {}]
  %s2 = inlined_call_operand.vmem [shape: f32[32,50], index: 2, kind: output, shape index: {}]
  %s3 = sld [smem:[#allocation0]]
  $region41: #{_lambda_.4} parent=0
    _
  %s5 = ssub.s32 1, %s3
  %s6 = scalar_select 0, %s5, %s3
  loop: start=0, step=1, limit=4
  $region2: #{_lambda_.4} parent=0 // loop_pre_header
    _
  $region3: #{_lambda_.4} parent=0 // loop_header
    %s8 = sphi 0, %s12
    %p9 = scmp.ge.s32.totalorder %s8, 4
    %s18 = sphi 0, %s20
    %s21 = sphi 0, %s18
    %s22 = sphi 0, %s21
    %s38 = sphi 0, %s22
    %s42 = sphi 0, %s42
    %s44 = sphi 0, %s42
    %s45 = sphi 0, %s44
    %s59 = sphi 0, %s45
    %s65 = sphi 0, %s67
    %s68 = sphi 0, %s65
    %s69 = sphi 0, %s68
    %s85 = sphi 0, %s69
  $region4: #{_lambda_.4} parent=0 // loop_header_branch
    %11 = sbr.rel (%p9) target = $region8
  $region5: #{_lambda_.4} parent=0 // loop_body
    %s13 = ssub.s32 %s8, 1
    %s14 = ssub.s32 %s8, 2
    %s15 = sadd.s32 %s8, 1
    %s16 = ssub.s32 %s8, %s15
    %p17 = scmp.eq.s32.totalorder %s16, 0
    %s19 = sadd.s32 %s18, 1
    %s20 = scalar_select %p17, %s18, %s19
    %p23 = pneg %p17
    %p24 = scmp.eq.s32.totalorder %s8, 1
    %p25 = por %p23, %p24
    %p26 = scmp.ne.s32.totalorder %s18, %s21
    %p27 = scmp.eq.s32.totalorder %s8, 0
    %p28 = por %p26, %p27
    %p29 = scmp.ne.s32.totalorder %s18, %s21
    %p30 = scmp.eq.s32.totalorder %s13, 1
    %p31 = por %p29, %p30
    %p32 = scmp.ne.s32.totalorder %s21, %s22
    %p33 = scmp.eq.s32.totalorder %s13, 0
    %p34 = por %p32, %p33
    %p35 = scmp.ne.s32.totalorder %s21, %s22
    %p36 = scmp.eq.s32.totalorder %s14, 1
    %p37 = por %p35, %p36
    %p39 = scmp.ne.s32.totalorder %s22, %s38
    %p40 = scmp.eq.s32.totalorder %s14, 0
    %p41 = por %p39, %p40
    %s43 = sadd.s32 %s42, 1
    %p46 = scmp.eq.s32.totalorder %s8, 1
    %p47 = scmp.ne.s32.totalorder %s42, %s44
    %p48 = scmp.eq.s32.totalorder %s8, 0
    %p49 = por %p47, %p48
    %p50 = scmp.ne.s32.totalorder %s42, %s44
    %p51 = scmp.eq.s32.totalorder %s13, 1
    %p52 = por %p50, %p51
    %p53 = scmp.ne.s32.totalorder %s44, %s45
    %p54 = scmp.eq.s32.totalorder %s13, 0
    %p55 = por %p53, %p54
    %p56 = scmp.ne.s32.totalorder %s44, %s45
    %p57 = scmp.eq.s32.totalorder %s14, 1
    %p58 = por %p56, %p57
    %p60 = scmp.ne.s32.totalorder %s45, %s59
    %p61 = scmp.eq.s32.totalorder %s14, 0
    %p62 = por %p60, %p61
    %s63 = ssub.s32 %s8, %s15
    %p64 = scmp.eq.s32.totalorder %s63, 0
    %s66 = sadd.s32 %s65, 1
    %s67 = scalar_select %p64, %s65, %s66
    %p70 = pneg %p64
    %p71 = scmp.eq.s32.totalorder %s8, 1
    %p72 = por %p70, %p71
    %p73 = scmp.ne.s32.totalorder %s65, %s68
    %p74 = scmp.eq.s32.totalorder %s8, 0
    %p75 = por %p73, %p74
    %p76 = scmp.ne.s32.totalorder %s65, %s68
    %p77 = scmp.eq.s32.totalorder %s13, 1
    %p78 = por %p76, %p77
    %p79 = scmp.ne.s32.totalorder %s68, %s69
    %p80 = scmp.eq.s32.totalorder %s13, 0
    %p81 = por %p79, %p80
    %p82 = scmp.ne.s32.totalorder %s68, %s69
    %p83 = scmp.eq.s32.totalorder %s14, 1
    %p84 = por %p82, %p83
    %p86 = scmp.ne.s32.totalorder %s69, %s85
    %p87 = scmp.eq.s32.totalorder %s14, 0
    %p88 = por %p86, %p87
    %p89 = scmp.le.s32.totalorder 1, %s8
    %p90 = scmp.lt.s32.totalorder %s8, 3
    %p91 = pnand %p89, %p90
    %p92 = pneg %p91
    // Predicated region
    $region9: #{_lambda_.4} parent=5 // pred_check
      _
    $region10: #{_lambda_.4} parent=5 // pred_check_branch
      %94 = sbr.rel (%p91) target = $region12
    $region11: #{_lambda_.4} parent=5 // pred_region
      %s95 = ssub.s32 %s8, 1
      // Predicated region
      $region13: #{_lambda_.4} parent=11 // pred_check
        %p96 = pneg %p55
      $region14: #{_lambda_.4} parent=11 // pred_check_branch
        %98 = sbr.rel (%p96) target = $region16
      $region15: #{_lambda_.4} parent=11 // pred_region
        _
      $region16: #{_lambda_.4} parent=11 // pred_fallthru
        _
    $region12: #{_lambda_.4} parent=5 // pred_fallthru
      _
    %p99 = scmp.lt.s32.totalorder %s8, 2
    // Predicated region
    $region17: #{_lambda_.4} parent=5 // pred_check
      %p100 = pneg %p99
    $region18: #{_lambda_.4} parent=5 // pred_check_branch
      %102 = sbr.rel (%p100) target = $region20
    $region19: #{_lambda_.4} parent=5 // pred_region
      // Predicated region
      $region21: #{_lambda_.4} parent=19 // pred_check
        %p103 = pneg %p28
      $region22: #{_lambda_.4} parent=19 // pred_check_branch
        %105 = sbr.rel (%p103) target = $region24
      $region23: #{_lambda_.4} parent=19 // pred_region
        %s106 = smul.u32 2, %s8
        %p107 = scmp.lt.s32.totalorder %s106, 3
        %s108 = scalar_select %p107, %s106, 3
        %s109 = smul.addr %s108, 13
        %s110 = smul.addr %s109, 4
        %s111 = scalar_lea.vmem %s0, %s110
        %s112 = smul.u32 2, %s8
      $region24: #{_lambda_.4} parent=19 // pred_fallthru
        _
    $region20: #{_lambda_.4} parent=5 // pred_fallthru
      _
    %p113 = scmp.le.s32.totalorder 1, %s8
    %p114 = scmp.lt.s32.totalorder %s8, 3
    %p115 = pnand %p113, %p114
    %p116 = pneg %p115
    // Predicated region
    $region25: #{_lambda_.4} parent=5 // pred_check
      _
    $region26: #{_lambda_.4} parent=5 // pred_check_branch
      %118 = sbr.rel (%p115) target = $region28
    $region27: #{_lambda_.4} parent=5 // pred_region
      %s119 = ssub.s32 %s8, 1
      %s120 = smul.u32 2, %s13
      %p121 = scmp.lt.s32.totalorder %s120, 3
      %s122 = scalar_select %p121, %s120, 3
      %s123 = smul.addr %s122, 13
      %s124 = smul.addr %s123, 4
      %s125 = scalar_lea.vmem %s0, %s124
      %p126 = pneg %p34
      %p127 = pneg %p31
      %p128 = pneg %p55
      %p129 = pneg %p52
      %p130 = pneg %p81
      %p131 = pneg %p78
      %s132 = smul.u32 2, %s13
      %p133 = scmp.lt.s32.totalorder %s132, 3
      %s134 = scalar_select %p133, %s132, 3
      %s135 = smul.addr %s134, 8
      %s136 = scalar_lea.vmem %s2, %s135
      %s137 = smul.u32 2, %s13
      %p138 = scmp.lt.s32.totalorder %s137, 3
      %s139 = scalar_select %p138, %s137, 3
      %s140 = smul.addr %s139, 13
      %s141 = smul.addr %s140, 4
      %s142 = scalar_lea.vmem %s0, %s141
      %s143 = smul.u32 2, %s13
      %s144 = smul.u32 2, %s13
      %p145 = scmp.lt.s32.totalorder %s144, 3
      %s146 = scalar_select %p145, %s144, 3
      %s147 = smul.addr %s146, 8
      %s148 = scalar_lea.vmem %s2, %s147
      %s149 = smul.u32 2, %s13
      %v151 = vld [vmem:[%s142] sm:$0xff]
      %v152 = vld [vmem:[%s142 + $0x8] sm:$0xff]
      %v153 = vld [vmem:[%s142 + $0x10] sm:$0xff]
      %v154 = vld [vmem:[%s142 + $0x18] sm:$0xff]
      %v155 = vld [vmem:[%s142 + $0x20] sm:$0xff]
      %v156 = vld [vmem:[%s142 + $0x28] sm:$0xff]
      %v157 = vld [vmem:[%s142 + $0x30] sm:$0xf]
      %v158 = vld [vmem:[%s142 + $0x34] sm:$0xff]
      %v159 = vld [vmem:[%s142 + $0x3c] sm:$0xff]
      %v160 = vld [vmem:[%s142 + $0x44] sm:$0xff]
      %v161 = vld [vmem:[%s142 + $0x4c] sm:$0xff]
      %v162 = vld [vmem:[%s142 + $0x54] sm:$0xff]
      %v163 = vld [vmem:[%s142 + $0x5c] sm:$0xff]
      %v164 = vld [vmem:[%s142 + $0x64] sm:$0xf]
      %v165 = vld [vmem:[%s1] sm:$0xf]
      %v166 = vld [vmem:[%s1 + $0x4] sm:$0xf]
      %v167 = vld [vmem:[%s1 + $0x8] sm:$0xf]
      %v168 = vld [vmem:[%s1 + $0xc] sm:$0xf]
      %v169 = vld [vmem:[%s1 + $0x10] sm:$0xf]
      %v170 = vld [vmem:[%s1 + $0x14] sm:$0xf]
      %v171 = vld [vmem:[%s1 + $0x18] sm:$0xf]
      %v172 = vld [vmem:[%s1 + $0x1c] sm:$0xf]
      %v173 = vld [vmem:[%s1 + $0x20] sm:$0xf]
      %v174 = vld [vmem:[%s1 + $0x24] sm:$0xf]
      %v175 = vld [vmem:[%s1 + $0x28] sm:$0xf]
      %v176 = vld [vmem:[%s1 + $0x2c] sm:$0xf]
      %v177 = vld [vmem:[%s1 + $0x30] sm:$0xf]
      %v178 = vld [vmem:[%s1 + $0x34] sm:$0xf]
      %v179 = vld [vmem:[%s1 + $0x38] sm:$0xf]
      %v180 = vld [vmem:[%s1 + $0x3c] sm:$0xf]
      %v181 = vld [vmem:[%s1 + $0x40] sm:$0xf]
      %v182 = vld [vmem:[%s1 + $0x44] sm:$0xf]
      %v183 = vld [vmem:[%s1 + $0x48] sm:$0xf]
      %v184 = vld [vmem:[%s1 + $0x4c] sm:$0xf]
      %v185 = vld [vmem:[%s1 + $0x50] sm:$0xf]
      %v186 = vld [vmem:[%s1 + $0x54] sm:$0xf]
      %v187 = vld [vmem:[%s1 + $0x58] sm:$0xf]
      %v188 = vld [vmem:[%s1 + $0x5c] sm:$0xf]
      %v189 = vld [vmem:[%s1 + $0x60] sm:$0xf]
      %v190 = vld [vmem:[%s1 + $0x64] sm:$0xf]
      %v191 = vld [vmem:[%s1 + $0x68] sm:$0xf]
      %v192 = vld [vmem:[%s1 + $0x6c] sm:$0xf]
      %v193 = vld [vmem:[%s1 + $0x70] sm:$0xf]
      %v194 = vld [vmem:[%s1 + $0x74] sm:$0xf]
      %v195 = vld [vmem:[%s1 + $0x78] sm:$0xf]
      %v196 = vld [vmem:[%s1 + $0x7c] sm:$0xf]
      %v197 = vld [vmem:[%s1 + $0x80] sm:$0xf]
      %v198 = vld [vmem:[%s1 + $0x84] sm:$0xf]
      %v199 = vld [vmem:[%s1 + $0x88] sm:$0xf]
      %v200 = vld [vmem:[%s1 + $0x8c] sm:$0xf]
      %v201 = vld [vmem:[%s1 + $0x90] sm:$0xf]
      %v202 = vld [vmem:[%s1 + $0x94] sm:$0xf]
      %v203 = vld [vmem:[%s1 + $0x98] sm:$0xf]
      %v204 = vld [vmem:[%s1 + $0x9c] sm:$0xf]
      %v205 = vld [vmem:[%s1 + $0xa0] sm:$0xf]
      %v206 = vld [vmem:[%s1 + $0xa4] sm:$0xf]
      %v207 = vld [vmem:[%s1 + $0xa8] sm:$0xf]
      %v208 = vld [vmem:[%s1 + $0xac] sm:$0xf]
      %v209 = vld [vmem:[%s1 + $0xb0] sm:$0xf]
      %v210 = vld [vmem:[%s1 + $0xb4] sm:$0xf]
      %v211 = vld [vmem:[%s1 + $0xb8] sm:$0xf]
      %v212 = vld [vmem:[%s1 + $0xbc] sm:$0xf]
      %v213 = vld [vmem:[%s1 + $0xc0] sm:$0xf]
      %v214 = vld [vmem:[%s1 + $0xc4] sm:$0xf]
      %v215 = vld [vmem:[%s1 + $0xc8] sm:$0xf]
      %v216 = vld [vmem:[%s1 + $0xcc] sm:$0xf]
      %v217 = vld [vmem:[%s1 + $0xd0] sm:$0xf]
      %v218 = vld [vmem:[%s1 + $0xd4] sm:$0xf]
      %v219 = vld [vmem:[%s1 + $0xd8] sm:$0xf]
      %v220 = vld [vmem:[%s1 + $0xdc] sm:$0xf]
      %v221 = vld [vmem:[%s1 + $0xe0] sm:$0xf]
      %v222 = vld [vmem:[%s1 + $0xe4] sm:$0xf]
      %v223 = vld [vmem:[%s1 + $0xe8] sm:$0xf]
      %v224 = vld [vmem:[%s1 + $0xec] sm:$0xf]
      %v225 = vld [vmem:[%s1 + $0xf0] sm:$0xf]
      %v226 = vld [vmem:[%s1 + $0xf4] sm:$0xf]
      %v227 = vld [vmem:[%s1 + $0xf8] sm:$0xf]
      %v228 = vld [vmem:[%s1 + $0xfc] sm:$0xf]
      %v229 = vld [vmem:[%s1 + $0x100] sm:$0xf]
      %v230 = vld [vmem:[%s1 + $0x104] sm:$0xf]
      %v231 = vld [vmem:[%s1 + $0x108] sm:$0xf]
      %v232 = vld [vmem:[%s1 + $0x10c] sm:$0xf]
      %v233 = vld [vmem:[%s1 + $0x110] sm:$0xf]
      %v234 = vld [vmem:[%s1 + $0x114] sm:$0xf]
      %v235 = vld [vmem:[%s1 + $0x118] sm:$0xf]
      %v236 = vld [vmem:[%s1 + $0x11c] sm:$0xf]
      %v237 = vld [vmem:[%s1 + $0x120] sm:$0xf]
      %v238 = vld [vmem:[%s1 + $0x124] sm:$0xf]
      %v239 = vld [vmem:[%s1 + $0x128] sm:$0xf]
      %v240 = vld [vmem:[%s1 + $0x12c] sm:$0xf]
      %v241 = vld [vmem:[%s1 + $0x130] sm:$0xf]
      %v242 = vld [vmem:[%s1 + $0x134] sm:$0xf]
      %v243 = vld [vmem:[%s1 + $0x138] sm:$0xf]
      %v244 = vld [vmem:[%s1 + $0x13c] sm:$0xf]
      %v245 = vld [vmem:[%s1 + $0x140] sm:$0xf]
      %v246 = vld [vmem:[%s1 + $0x144] sm:$0xf]
      %v247 = vld [vmem:[%s1 + $0x148] sm:$0xf]
      %v248 = vld [vmem:[%s1 + $0x14c] sm:$0xf]
      %v249 = vld [vmem:[%s1 + $0x150] sm:$0xf]
      %v250 = vld [vmem:[%s1 + $0x154] sm:$0xf]
      %v251 = vld [vmem:[%s1 + $0x158] sm:$0xf]
      %v252 = vld [vmem:[%s1 + $0x15c] sm:$0xf]
      %v253 = vld [vmem:[%s1 + $0x160] sm:$0xf]
      %v254 = vld [vmem:[%s1 + $0x164] sm:$0xf]
      %v255 = vld [vmem:[%s1 + $0x168] sm:$0xf]
      %v256 = vld [vmem:[%s1 + $0x16c] sm:$0xf]
      %v257 = vld [vmem:[%s1 + $0x170] sm:$0xf]
      %v258 = vld [vmem:[%s1 + $0x174] sm:$0xf]
      %v259 = vld [vmem:[%s1 + $0x178] sm:$0xf]
      %v260 = vld [vmem:[%s1 + $0x17c] sm:$0xf]
      %v261 = vld [vmem:[%s1 + $0x180] sm:$0xf]
      %v262 = vld [vmem:[%s1 + $0x184] sm:$0xf]
      %v263 = vld [vmem:[%s1 + $0x188] sm:$0xf]
      %v264 = vld [vmem:[%s1 + $0x18c] sm:$0xf]
      %v265 = vld [vmem:[%s1 + $0x190] sm:$0xf]
      %v266 = vld [vmem:[%s1 + $0x194] sm:$0xf]
      %v267 = vld [vmem:[%s1 + $0x198] sm:$0xf]
      %v268 = vld [vmem:[%s1 + $0x19c] sm:$0xf]
      %v269 = vld [vmem:[%s1 + $0x1a0] sm:$0xf]
      %v270 = vld [vmem:[%s1 + $0x1a4] sm:$0xf]
      %v271 = vld [vmem:[%s1 + $0x1a8] sm:$0xf]
      %v272 = vld [vmem:[%s1 + $0x1ac] sm:$0xf]
      %v273 = vld [vmem:[%s1 + $0x1b0] sm:$0xf]
      %v274 = vld [vmem:[%s1 + $0x1b4] sm:$0xf]
      %v275 = vld [vmem:[%s1 + $0x1b8] sm:$0xf]
      %v276 = vld [vmem:[%s1 + $0x1bc] sm:$0xf]
      %v277 = vld [vmem:[%s1 + $0x1c0] sm:$0xf]
      %v278 = vld [vmem:[%s1 + $0x1c4] sm:$0xf]
      %v279 = vld [vmem:[%s1 + $0x1c8] sm:$0xf]
      %v280 = vld [vmem:[%s1 + $0x1cc] sm:$0xf]
      %v281 = vld [vmem:[%s1 + $0x1d0] sm:$0xf]
      %v282 = vld [vmem:[%s1 + $0x1d4] sm:$0xf]
      %v283 = vld [vmem:[%s1 + $0x1d8] sm:$0xf]
      %v284 = vld [vmem:[%s1 + $0x1dc] sm:$0xf]
      %v285 = vld [vmem:[%s1 + $0x1e0] sm:$0xf]
      %v286 = vld [vmem:[%s1 + $0x1e4] sm:$0xf]
      %v287 = vld [vmem:[%s1 + $0x1e8] sm:$0xf]
      %v288 = vld [vmem:[%s1 + $0x1ec] sm:$0xf]
      %v289 = vld [vmem:[%s1 + $0x1f0] sm:$0xf]
      %v290 = vld [vmem:[%s1 + $0x1f4] sm:$0xf]
      %v291 = vld [vmem:[%s1 + $0x1f8] sm:$0xf]
      %v292 = vld [vmem:[%s1 + $0x1fc] sm:$0xf]
      %v293 = vld [vmem:[%s1 + $0x200] sm:$0xf]
      %v294 = vld [vmem:[%s1 + $0x204] sm:$0xf]
      %v295 = vld [vmem:[%s1 + $0x208] sm:$0xf]
      %v296 = vld [vmem:[%s1 + $0x20c] sm:$0xf]
      %v297 = vld [vmem:[%s1 + $0x210] sm:$0xf]
      %v298 = vld [vmem:[%s1 + $0x214] sm:$0xf]
      %v299 = vld [vmem:[%s1 + $0x218] sm:$0xf]
      %v300 = vld [vmem:[%s1 + $0x21c] sm:$0xf]
      %v301 = vld [vmem:[%s1 + $0x220] sm:$0xf]
      %v302 = vld [vmem:[%s1 + $0x224] sm:$0xf]
      %v303 = vld [vmem:[%s1 + $0x228] sm:$0xf]
      %v304 = vld [vmem:[%s1 + $0x22c] sm:$0xf]
      %v305 = vld [vmem:[%s1 + $0x230] sm:$0xf]
      %v306 = vld [vmem:[%s1 + $0x234] sm:$0xf]
      %v307 = vld [vmem:[%s1 + $0x238] sm:$0xf]
      %v308 = vld [vmem:[%s1 + $0x23c] sm:$0xf]
      %v309 = vld [vmem:[%s1 + $0x240] sm:$0xf]
      %v310 = vld [vmem:[%s1 + $0x244] sm:$0xf]
      %v311 = vld [vmem:[%s1 + $0x248] sm:$0xf]
      %v312 = vld [vmem:[%s1 + $0x24c] sm:$0xf]
      %v313 = vld [vmem:[%s1 + $0x250] sm:$0xf]
      %v314 = vld [vmem:[%s1 + $0x254] sm:$0xf]
      %v315 = vld [vmem:[%s1 + $0x258] sm:$0xf]
      %v316 = vld [vmem:[%s1 + $0x25c] sm:$0xf]
      %v317 = vld [vmem:[%s1 + $0x260] sm:$0xf]
      %v318 = vld [vmem:[%s1 + $0x264] sm:$0xf]
      %v319 = vld [vmem:[%s1 + $0x268] sm:$0xf]
      %v320 = vld [vmem:[%s1 + $0x26c] sm:$0xf]
      %v321 = vld [vmem:[%s1 + $0x270] sm:$0xf]
      %v322 = vld [vmem:[%s1 + $0x274] sm:$0xf]
      %v323 = vld [vmem:[%s1 + $0x278] sm:$0xf]
      %v324 = vld [vmem:[%s1 + $0x27c] sm:$0xf]
      %v325 = vld [vmem:[%s1 + $0x280] sm:$0xf]
      %v326 = vld [vmem:[%s1 + $0x284] sm:$0xf]
      %v327 = vld [vmem:[%s1 + $0x288] sm:$0xf]
      %v328 = vld [vmem:[%s1 + $0x28c] sm:$0xf]
      %v329 = vld [vmem:[%s1 + $0x290] sm:$0xf]
      %v330 = vld [vmem:[%s1 + $0x294] sm:$0xf]
      %v331 = vld [vmem:[%s1 + $0x298] sm:$0xf]
      %v332 = vld [vmem:[%s1 + $0x29c] sm:$0xf]
      %v333 = vld [vmem:[%s1 + $0x2a0] sm:$0xf]
      %v334 = vld [vmem:[%s1 + $0x2a4] sm:$0xf]
      %v335 = vld [vmem:[%s1 + $0x2a8] sm:$0xf]
      %v336 = vld [vmem:[%s1 + $0x2ac] sm:$0xf]
      %v337 = vld [vmem:[%s1 + $0x2b0] sm:$0xf]
      %v338 = vld [vmem:[%s1 + $0x2b4] sm:$0xf]
      %v339 = vld [vmem:[%s1 + $0x2b8] sm:$0xf]
      %v340 = vld [vmem:[%s1 + $0x2bc] sm:$0xf]
      %v341 = vld [vmem:[%s1 + $0x2c0] sm:$0xf]
      %v342 = vld [vmem:[%s1 + $0x2c4] sm:$0xf]
      %v343 = vld [vmem:[%s1 + $0x2c8] sm:$0xf]
      %v344 = vld [vmem:[%s1 + $0x2cc] sm:$0xf]
      %v345 = vld [vmem:[%s1 + $0x2d0] sm:$0xf]
      %v346 = vld [vmem:[%s1 + $0x2d4] sm:$0xf]
      %v347 = vld [vmem:[%s1 + $0x2d8] sm:$0xf]
      %v348 = vld [vmem:[%s1 + $0x2dc] sm:$0xf]
      %v349 = vld [vmem:[%s1 + $0x2e0] sm:$0xf]
      %v350 = vld [vmem:[%s1 + $0x2e4] sm:$0xf]
      %v351 = vld [vmem:[%s1 + $0x2e8] sm:$0xf]
      %v352 = vld [vmem:[%s1 + $0x2ec] sm:$0xf]
      %v353 = vld [vmem:[%s1 + $0x2f0] sm:$0xf]
      %v354 = vld [vmem:[%s1 + $0x2f4] sm:$0xf]
      %v355 = vld [vmem:[%s1 + $0x2f8] sm:$0xf]
      %v356 = vld [vmem:[%s1 + $0x2fc] sm:$0xf]
      %v357 = vld [vmem:[%s1 + $0x300] sm:$0xf]
      %v358 = vld [vmem:[%s1 + $0x304] sm:$0xf]
      %v359 = vld [vmem:[%s1 + $0x308] sm:$0xf]
      %v360 = vld [vmem:[%s1 + $0x30c] sm:$0xf]
      %v361 = vld [vmem:[%s1 + $0x310] sm:$0xf]
      %v362 = vld [vmem:[%s1 + $0x314] sm:$0xf]
      %v363 = vld [vmem:[%s1 + $0x318] sm:$0xf]
      %v364 = vld [vmem:[%s1 + $0x31c] sm:$0xf]
      %v379 = vunpack.c.l.b16 %v151
      %v380 = vunpack.c.h.b16 %v151
      %v381 = vunpack.c.l.b16 %v152
      %v382 = vunpack.c.h.b16 %v152
      %v383 = vunpack.c.l.b16 %v153
      %v384 = vunpack.c.h.b16 %v153
      %v385 = vunpack.c.l.b16 %v154
      %v386 = vunpack.c.h.b16 %v154
      %v387 = vunpack.c.l.b16 %v155
      %v388 = vunpack.c.h.b16 %v155
      %v389 = vunpack.c.l.b16 %v156
      %v390 = vunpack.c.h.b16 %v156
      %v391 = vunpack.c.l.b16 %v157
      %v392 = vunpack.c.l.b16 %v158
      %v393 = vunpack.c.h.b16 %v158
      %v394 = vunpack.c.l.b16 %v159
      %v395 = vunpack.c.h.b16 %v159
      %v396 = vunpack.c.l.b16 %v160
      %v397 = vunpack.c.h.b16 %v160
      %v398 = vunpack.c.l.b16 %v161
      %v399 = vunpack.c.h.b16 %v161
      %v400 = vunpack.c.l.b16 %v162
      %v401 = vunpack.c.h.b16 %v162
      %v402 = vunpack.c.l.b16 %v163
      %v403 = vunpack.c.h.b16 %v163
      %v404 = vunpack.c.l.b16 %v164
      %v405 = vpack.c.b16 %v392, %v379
      %v406 = vpack.c.b16 %v393, %v380
      %v407 = vpack.c.b16 %v394, %v381
      %v408 = vpack.c.b16 %v395, %v382
      %v409 = vpack.c.b16 %v396, %v383
      %v410 = vpack.c.b16 %v397, %v384
      %v411 = vpack.c.b16 %v398, %v385
      %v412 = vpack.c.b16 %v399, %v386
      %v413 = vpack.c.b16 %v400, %v387
      %v414 = vpack.c.b16 %v401, %v388
      %v415 = vpack.c.b16 %v402, %v389
      %v416 = vpack.c.b16 %v403, %v390
      %v417 = vpack.c.b16 %v404, %v391
      %v630 = vunpack.c.l.b16 %v165
      %v631 = vunpack.c.l.b16 %v166
      %v632 = vunpack.c.l.b16 %v167
      %v633 = vunpack.c.l.b16 %v168
      %v634 = vunpack.c.l.b16 %v169
      %v635 = vunpack.c.l.b16 %v170
      %v636 = vunpack.c.l.b16 %v171
      %v637 = vunpack.c.l.b16 %v172
      %v638 = vunpack.c.l.b16 %v173
      %v639 = vunpack.c.l.b16 %v174
      %v640 = vunpack.c.l.b16 %v175
      %v641 = vunpack.c.l.b16 %v176
      %v642 = vunpack.c.l.b16 %v177
      %v643 = vunpack.c.l.b16 %v178
      %v644 = vunpack.c.l.b16 %v179
      %v645 = vunpack.c.l.b16 %v180
      %v646 = vunpack.c.l.b16 %v181
      %v647 = vunpack.c.l.b16 %v182
      %v648 = vunpack.c.l.b16 %v183
      %v649 = vunpack.c.l.b16 %v184
      %v650 = vunpack.c.l.b16 %v185
      %v651 = vunpack.c.l.b16 %v186
      %v652 = vunpack.c.l.b16 %v187
      %v653 = vunpack.c.l.b16 %v188
      %v654 = vunpack.c.l.b16 %v189
      %v655 = vunpack.c.l.b16 %v190
      %v656 = vunpack.c.l.b16 %v191
      %v657 = vunpack.c.l.b16 %v192
      %v658 = vunpack.c.l.b16 %v193
      %v659 = vunpack.c.l.b16 %v194
      %v660 = vunpack.c.l.b16 %v195
      %v661 = vunpack.c.l.b16 %v196
      %v662 = vunpack.c.l.b16 %v197
      %v663 = vunpack.c.l.b16 %v198
      %v664 = vunpack.c.l.b16 %v199
      %v665 = vunpack.c.l.b16 %v200
      %v666 = vunpack.c.l.b16 %v201
      %v667 = vunpack.c.l.b16 %v202
      %v668 = vunpack.c.l.b16 %v203
      %v669 = vunpack.c.l.b16 %v204
      %v670 = vunpack.c.l.b16 %v205
      %v671 = vunpack.c.l.b16 %v206
      %v672 = vunpack.c.l.b16 %v207
      %v673 = vunpack.c.l.b16 %v208
      %v674 = vunpack.c.l.b16 %v209
      %v675 = vunpack.c.l.b16 %v210
      %v676 = vunpack.c.l.b16 %v211
      %v677 = vunpack.c.l.b16 %v212
      %v678 = vunpack.c.l.b16 %v213
      %v679 = vunpack.c.l.b16 %v214
      %v680 = vunpack.c.l.b16 %v215
      %v681 = vunpack.c.l.b16 %v216
      %v682 = vunpack.c.l.b16 %v217
      %v683 = vunpack.c.l.b16 %v218
      %v684 = vunpack.c.l.b16 %v219
      %v685 = vunpack.c.l.b16 %v220
      %v686 = vunpack.c.l.b16 %v221
      %v687 = vunpack.c.l.b16 %v222
      %v688 = vunpack.c.l.b16 %v223
      %v689 = vunpack.c.l.b16 %v224
      %v690 = vunpack.c.l.b16 %v225
      %v691 = vunpack.c.l.b16 %v226
      %v692 = vunpack.c.l.b16 %v227
      %v693 = vunpack.c.l.b16 %v228
      %v694 = vunpack.c.l.b16 %v229
      %v695 = vunpack.c.l.b16 %v230
      %v696 = vunpack.c.l.b16 %v231
      %v697 = vunpack.c.l.b16 %v232
      %v698 = vunpack.c.l.b16 %v233
      %v699 = vunpack.c.l.b16 %v234
      %v700 = vunpack.c.l.b16 %v235
      %v701 = vunpack.c.l.b16 %v236
      %v702 = vunpack.c.l.b16 %v237
      %v703 = vunpack.c.l.b16 %v238
      %v704 = vunpack.c.l.b16 %v239
      %v705 = vunpack.c.l.b16 %v240
      %v706 = vunpack.c.l.b16 %v241
      %v707 = vunpack.c.l.b16 %v242
      %v708 = vunpack.c.l.b16 %v243
      %v709 = vunpack.c.l.b16 %v244
      %v710 = vunpack.c.l.b16 %v245
      %v711 = vunpack.c.l.b16 %v246
      %v712 = vunpack.c.l.b16 %v247
      %v713 = vunpack.c.l.b16 %v248
      %v714 = vunpack.c.l.b16 %v249
      %v715 = vunpack.c.l.b16 %v250
      %v716 = vunpack.c.l.b16 %v251
      %v717 = vunpack.c.l.b16 %v252
      %v718 = vunpack.c.l.b16 %v253
      %v719 = vunpack.c.l.b16 %v254
      %v720 = vunpack.c.l.b16 %v255
      %v721 = vunpack.c.l.b16 %v256
      %v722 = vunpack.c.l.b16 %v257
      %v723 = vunpack.c.l.b16 %v258
      %v724 = vunpack.c.l.b16 %v259
      %v725 = vunpack.c.l.b16 %v260
      %v726 = vunpack.c.l.b16 %v261
      %v727 = vunpack.c.l.b16 %v262
      %v728 = vunpack.c.l.b16 %v263
      %v729 = vunpack.c.l.b16 %v264
      %v730 = vunpack.c.l.b16 %v265
      %v731 = vunpack.c.l.b16 %v266
      %v732 = vunpack.c.l.b16 %v267
      %v733 = vunpack.c.l.b16 %v268
      %v734 = vunpack.c.l.b16 %v269
      %v735 = vunpack.c.l.b16 %v270
      %v736 = vunpack.c.l.b16 %v271
      %v737 = vunpack.c.l.b16 %v272
      %v738 = vunpack.c.l.b16 %v273
      %v739 = vunpack.c.l.b16 %v274
      %v740 = vunpack.c.l.b16 %v275
      %v741 = vunpack.c.l.b16 %v276
      %v742 = vunpack.c.l.b16 %v277
      %v743 = vunpack.c.l.b16 %v278
      %v744 = vunpack.c.l.b16 %v279
      %v745 = vunpack.c.l.b16 %v280
      %v746 = vunpack.c.l.b16 %v281
      %v747 = vunpack.c.l.b16 %v282
      %v748 = vunpack.c.l.b16 %v283
      %v749 = vunpack.c.l.b16 %v284
      %v750 = vunpack.c.l.b16 %v285
      %v751 = vunpack.c.l.b16 %v286
      %v752 = vunpack.c.l.b16 %v287
      %v753 = vunpack.c.l.b16 %v288
      %v754 = vunpack.c.l.b16 %v289
      %v755 = vunpack.c.l.b16 %v290
      %v756 = vunpack.c.l.b16 %v291
      %v757 = vunpack.c.l.b16 %v292
      %v758 = vunpack.c.l.b16 %v293
      %v759 = vunpack.c.l.b16 %v294
      %v760 = vunpack.c.l.b16 %v295
      %v761 = vunpack.c.l.b16 %v296
      %v762 = vunpack.c.l.b16 %v297
      %v763 = vunpack.c.l.b16 %v298
      %v764 = vunpack.c.l.b16 %v299
      %v765 = vunpack.c.l.b16 %v300
      %v766 = vunpack.c.l.b16 %v301
      %v767 = vunpack.c.l.b16 %v302
      %v768 = vunpack.c.l.b16 %v303
      %v769 = vunpack.c.l.b16 %v304
      %v770 = vunpack.c.l.b16 %v305
      %v771 = vunpack.c.l.b16 %v306
      %v772 = vunpack.c.l.b16 %v307
      %v773 = vunpack.c.l.b16 %v308
      %v774 = vunpack.c.l.b16 %v309
      %v775 = vunpack.c.l.b16 %v310
      %v776 = vunpack.c.l.b16 %v311
      %v777 = vunpack.c.l.b16 %v312
      %v778 = vunpack.c.l.b16 %v313
      %v779 = vunpack.c.l.b16 %v314
      %v780 = vunpack.c.l.b16 %v315
      %v781 = vunpack.c.l.b16 %v316
      %v782 = vunpack.c.l.b16 %v317
      %v783 = vunpack.c.l.b16 %v318
      %v784 = vunpack.c.l.b16 %v319
      %v785 = vunpack.c.l.b16 %v320
      %v786 = vunpack.c.l.b16 %v321
      %v787 = vunpack.c.l.b16 %v322
      %v788 = vunpack.c.l.b16 %v323
      %v789 = vunpack.c.l.b16 %v324
      %v790 = vunpack.c.l.b16 %v325
      %v791 = vunpack.c.l.b16 %v326
      %v792 = vunpack.c.l.b16 %v327
      %v793 = vunpack.c.l.b16 %v328
      %v794 = vunpack.c.l.b16 %v329
      %v795 = vunpack.c.l.b16 %v330
      %v796 = vunpack.c.l.b16 %v331
      %v797 = vunpack.c.l.b16 %v332
      %v798 = vunpack.c.l.b16 %v333
      %v799 = vunpack.c.l.b16 %v334
      %v800 = vunpack.c.l.b16 %v335
      %v801 = vunpack.c.l.b16 %v336
      %v802 = vunpack.c.l.b16 %v337
      %v803 = vunpack.c.l.b16 %v338
      %v804 = vunpack.c.l.b16 %v339
      %v805 = vunpack.c.l.b16 %v340
      %v806 = vunpack.c.l.b16 %v341
      %v807 = vunpack.c.l.b16 %v342
      %v808 = vunpack.c.l.b16 %v343
      %v809 = vunpack.c.l.b16 %v344
      %v810 = vunpack.c.l.b16 %v345
      %v811 = vunpack.c.l.b16 %v346
      %v812 = vunpack.c.l.b16 %v347
      %v813 = vunpack.c.l.b16 %v348
      %v814 = vunpack.c.l.b16 %v349
      %v815 = vunpack.c.l.b16 %v350
      %v816 = vunpack.c.l.b16 %v351
      %v817 = vunpack.c.l.b16 %v352
      %v818 = vunpack.c.l.b16 %v353
      %v819 = vunpack.c.l.b16 %v354
      %v820 = vunpack.c.l.b16 %v355
      %v821 = vunpack.c.l.b16 %v356
      %v822 = vunpack.c.l.b16 %v357
      %v823 = vunpack.c.l.b16 %v358
      %v824 = vunpack.c.l.b16 %v359
      %v825 = vunpack.c.l.b16 %v360
      %v826 = vunpack.c.l.b16 %v361
      %v827 = vunpack.c.l.b16 %v362
      %v828 = vunpack.c.l.b16 %v363
      %v829 = vunpack.c.l.b16 %v364
      %v830 = vpack.c.b16 %v631, %v630
      %v831 = vpack.c.b16 %v633, %v632
      %v832 = vpack.c.b16 %v635, %v634
      %v833 = vpack.c.b16 %v637, %v636
      %v834 = vpack.c.b16 %v639, %v638
      %v835 = vpack.c.b16 %v641, %v640
      %v836 = vpack.c.b16 %v643, %v642
      %v837 = vpack.c.b16 %v645, %v644
      %v838 = vpack.c.b16 %v647, %v646
      %v839 = vpack.c.b16 %v649, %v648
      %v840 = vpack.c.b16 %v651, %v650
      %v841 = vpack.c.b16 %v653, %v652
      %v842 = vpack.c.b16 %v655, %v654
      %v843 = vpack.c.b16 %v657, %v656
      %v844 = vpack.c.b16 %v659, %v658
      %v845 = vpack.c.b16 %v661, %v660
      %v846 = vpack.c.b16 %v663, %v662
      %v847 = vpack.c.b16 %v665, %v664
      %v848 = vpack.c.b16 %v667, %v666
      %v849 = vpack.c.b16 %v669, %v668
      %v850 = vpack.c.b16 %v671, %v670
      %v851 = vpack.c.b16 %v673, %v672
      %v852 = vpack.c.b16 %v675, %v674
      %v853 = vpack.c.b16 %v677, %v676
      %v854 = vpack.c.b16 %v679, %v678
      %v855 = vpack.c.b16 %v681, %v680
      %v856 = vpack.c.b16 %v683, %v682
      %v857 = vpack.c.b16 %v685, %v684
      %v858 = vpack.c.b16 %v687, %v686
      %v859 = vpack.c.b16 %v689, %v688
      %v860 = vpack.c.b16 %v691, %v690
      %v861 = vpack.c.b16 %v693, %v692
      %v862 = vpack.c.b16 %v695, %v694
      %v863 = vpack.c.b16 %v697, %v696
      %v864 = vpack.c.b16 %v699, %v698
      %v865 = vpack.c.b16 %v701, %v700
      %v866 = vpack.c.b16 %v703, %v702
      %v867 = vpack.c.b16 %v705, %v704
      %v868 = vpack.c.b16 %v707, %v706
      %v869 = vpack.c.b16 %v709, %v708
      %v870 = vpack.c.b16 %v711, %v710
      %v871 = vpack.c.b16 %v713, %v712
      %v872 = vpack.c.b16 %v715, %v714
      %v873 = vpack.c.b16 %v717, %v716
      %v874 = vpack.c.b16 %v719, %v718
      %v875 = vpack.c.b16 %v721, %v720
      %v876 = vpack.c.b16 %v723, %v722
      %v877 = vpack.c.b16 %v725, %v724
      %v878 = vpack.c.b16 %v727, %v726
      %v879 = vpack.c.b16 %v729, %v728
      %v880 = vpack.c.b16 %v731, %v730
      %v881 = vpack.c.b16 %v733, %v732
      %v882 = vpack.c.b16 %v735, %v734
      %v883 = vpack.c.b16 %v737, %v736
      %v884 = vpack.c.b16 %v739, %v738
      %v885 = vpack.c.b16 %v741, %v740
      %v886 = vpack.c.b16 %v743, %v742
      %v887 = vpack.c.b16 %v745, %v744
      %v888 = vpack.c.b16 %v747, %v746
      %v889 = vpack.c.b16 %v749, %v748
      %v890 = vpack.c.b16 %v751, %v750
      %v891 = vpack.c.b16 %v753, %v752
      %v892 = vpack.c.b16 %v755, %v754
      %v893 = vpack.c.b16 %v757, %v756
      %v894 = vpack.c.b16 %v759, %v758
      %v895 = vpack.c.b16 %v761, %v760
      %v896 = vpack.c.b16 %v763, %v762
      %v897 = vpack.c.b16 %v765, %v764
      %v898 = vpack.c.b16 %v767, %v766
      %v899 = vpack.c.b16 %v769, %v768
      %v900 = vpack.c.b16 %v771, %v770
      %v901 = vpack.c.b16 %v773, %v772
      %v902 = vpack.c.b16 %v775, %v774
      %v903 = vpack.c.b16 %v777, %v776
      %v904 = vpack.c.b16 %v779, %v778
      %v905 = vpack.c.b16 %v781, %v780
      %v906 = vpack.c.b16 %v783, %v782
      %v907 = vpack.c.b16 %v785, %v784
      %v908 = vpack.c.b16 %v787, %v786
      %v909 = vpack.c.b16 %v789, %v788
      %v910 = vpack.c.b16 %v791, %v790
      %v911 = vpack.c.b16 %v793, %v792
      %v912 = vpack.c.b16 %v795, %v794
      %v913 = vpack.c.b16 %v797, %v796
      %v914 = vpack.c.b16 %v799, %v798
      %v915 = vpack.c.b16 %v801, %v800
      %v916 = vpack.c.b16 %v803, %v802
      %v917 = vpack.c.b16 %v805, %v804
      %v918 = vpack.c.b16 %v807, %v806
      %v919 = vpack.c.b16 %v809, %v808
      %v920 = vpack.c.b16 %v811, %v810
      %v921 = vpack.c.b16 %v813, %v812
      %v922 = vpack.c.b16 %v815, %v814
      %v923 = vpack.c.b16 %v817, %v816
      %v924 = vpack.c.b16 %v819, %v818
      %v925 = vpack.c.b16 %v821, %v820
      %v926 = vpack.c.b16 %v823, %v822
      %v927 = vpack.c.b16 %v825, %v824
      %v928 = vpack.c.b16 %v827, %v826
      %v929 = vpack.c.b16 %v829, %v828
      %vm1030 = vcmask 523264
      %v1032 = vsel %vm1030, %v417, 0
      %1034 = vmatprep.subr.bf16.mxu0 0
      %1035 = vmatpush1.bf16.msra.mxu0 %v830
      %1036 = vmatprep.subr.bf16.mxu0 0
      %1037 = vmatpush1.bf16.msra.mxu0 %v831
      %1038 = vmatprep.subr.bf16.mxu0 0
      %1039 = vmatpush1.bf16.msra.mxu0 %v832
      %1040 = vmatprep.subr.bf16.mxu0 0
      %1041 = vmatpush1.bf16.msra.mxu0 %v833
      %1042 = vmatprep.subr.bf16.mxu0 0
      %1043 = vmatpush1.bf16.msra.mxu0 %v834
      %1044 = vmatprep.subr.bf16.mxu0 0
      %1045 = vmatpush1.bf16.msra.mxu0 %v835
      %1046 = vmatprep.subr.bf16.mxu0 0
      %1047 = vmatpush1.bf16.msra.mxu0 %v836
      %1048 = vmatprep.subr.bf16.mxu0 0
      %1049 = vmatpush1.bf16.msra.mxu0 %v837
      %1050 = vmatprep.subr.bf16.mxu0 0
      %1051 = vmatpush1.bf16.msra.mxu0 %v838
      %1052 = vmatprep.subr.bf16.mxu0 0
      %1053 = vmatpush1.bf16.msra.mxu0 %v839
      %1054 = vmatprep.subr.bf16.mxu0 0
      %1055 = vmatpush1.bf16.msra.mxu0 %v840
      %1056 = vmatprep.subr.bf16.mxu0 0
      %1057 = vmatpush1.bf16.msra.mxu0 %v841
      %1058 = vmatprep.subr.bf16.mxu0 0
      %1059 = vmatpush1.bf16.msra.mxu0 %v842
      %1060 = vmatprep.subr.bf16.mxu0 0
      %1061 = vmatpush1.bf16.msra.mxu0 %v843
      %1062 = vmatprep.subr.bf16.mxu0 0
      %1063 = vmatpush1.bf16.msra.mxu0 %v844
      %1064 = vmatprep.subr.bf16.mxu0 0
      %1065 = vmatpush1.bf16.msra.mxu0 %v845
      %1066 = vmatprep.mubr.bf16.mxu0 %v406
      %1067 = vmatmul.mubr.bf16.gmra.mrb[0].mxu0 %v405
      %v1068 = vpop.f32.mrb[0].mxu0
      %v1069 = vadd.f32 0.0, %v1068
      %v1070 = vpop.f32.mrb[0].mxu0
      %v1071 = vpop.f32.mrb[0].mxu0
      %v1072 = vadd.f32 0.0, %v1071
      %v1073 = vpop.f32.mrb[0].mxu0
      %1074 = vdwg.mxu0
      %1075 = vmatprep.subr.bf16.mxu0 0
      %1076 = vmatpush1.bf16.msra.mxu0 %v846
      %1077 = vmatprep.subr.bf16.mxu0 0
      %1078 = vmatpush1.bf16.msra.mxu0 %v847
      %1079 = vmatprep.subr.bf16.mxu0 0
      %1080 = vmatpush1.bf16.msra.mxu0 %v848
      %1081 = vmatprep.subr.bf16.mxu0 0
      %1082 = vmatpush1.bf16.msra.mxu0 %v849
      %1083 = vmatprep.subr.bf16.mxu0 0
      %1084 = vmatpush1.bf16.msra.mxu0 %v850
      %1085 = vmatprep.subr.bf16.mxu0 0
      %1086 = vmatpush1.bf16.msra.mxu0 %v851
      %1087 = vmatprep.subr.bf16.mxu0 0
      %1088 = vmatpush1.bf16.msra.mxu0 %v852
      %1089 = vmatprep.subr.bf16.mxu0 0
      %1090 = vmatpush1.bf16.msra.mxu0 %v853
      %1091 = vmatprep.subr.bf16.mxu0 0
      %1092 = vmatpush1.bf16.msra.mxu0 %v854
      %1093 = vmatprep.subr.bf16.mxu0 0
      %1094 = vmatpush1.bf16.msra.mxu0 %v855
      %1095 = vmatprep.subr.bf16.mxu0 0
      %1096 = vmatpush1.bf16.msra.mxu0 %v856
      %1097 = vmatprep.subr.bf16.mxu0 0
      %1098 = vmatpush1.bf16.msra.mxu0 %v857
      %1099 = vmatprep.subr.bf16.mxu0 0
      %1100 = vmatpush1.bf16.msra.mxu0 %v858
      %1101 = vmatprep.subr.bf16.mxu0 0
      %1102 = vmatpush1.bf16.msra.mxu0 %v859
      %1103 = vmatprep.subr.bf16.mxu0 0
      %1104 = vmatpush1.bf16.msra.mxu0 %v860
      %1105 = vmatprep.subr.bf16.mxu0 0
      %1106 = vmatpush1.bf16.msra.mxu0 %v861
      %1107 = vmatprep.mubr.bf16.mxu0 %v408
      %1108 = vmatmul.mubr.bf16.gmra.mrb[0].mxu0 %v407
      %v1109 = vpop.f32.mrb[0].mxu0
      %v1110 = vadd.f32 %v1069, %v1109
      %v1111 = vpop.f32.mrb[0].mxu0
      %v1112 = vpop.f32.mrb[0].mxu0
      %v1113 = vadd.f32 %v1072, %v1112
      %v1114 = vpop.f32.mrb[0].mxu0
      %1115 = vdwg.mxu0
      %1116 = vmatprep.subr.bf16.mxu0 0
      %1117 = vmatpush1.bf16.msra.mxu0 %v862
      %1118 = vmatprep.subr.bf16.mxu0 0
      %1119 = vmatpush1.bf16.msra.mxu0 %v863
      %1120 = vmatprep.subr.bf16.mxu0 0
      %1121 = vmatpush1.bf16.msra.mxu0 %v864
      %1122 = vmatprep.subr.bf16.mxu0 0
      %1123 = vmatpush1.bf16.msra.mxu0 %v865
      %1124 = vmatprep.subr.bf16.mxu0 0
      %1125 = vmatpush1.bf16.msra.mxu0 %v866
      %1126 = vmatprep.subr.bf16.mxu0 0
      %1127 = vmatpush1.bf16.msra.mxu0 %v867
      %1128 = vmatprep.subr.bf16.mxu0 0
      %1129 = vmatpush1.bf16.msra.mxu0 %v868
      %1130 = vmatprep.subr.bf16.mxu0 0
      %1131 = vmatpush1.bf16.msra.mxu0 %v869
      %1132 = vmatprep.subr.bf16.mxu0 0
      %1133 = vmatpush1.bf16.msra.mxu0 %v870
      %1134 = vmatprep.subr.bf16.mxu0 0
      %1135 = vmatpush1.bf16.msra.mxu0 %v871
      %1136 = vmatprep.subr.bf16.mxu0 0
      %1137 = vmatpush1.bf16.msra.mxu0 %v872
      %1138 = vmatprep.subr.bf16.mxu0 0
      %1139 = vmatpush1.bf16.msra.mxu0 %v873
      %1140 = vmatprep.subr.bf16.mxu0 0
      %1141 = vmatpush1.bf16.msra.mxu0 %v874
      %1142 = vmatprep.subr.bf16.mxu0 0
      %1143 = vmatpush1.bf16.msra.mxu0 %v875
      %1144 = vmatprep.subr.bf16.mxu0 0
      %1145 = vmatpush1.bf16.msra.mxu0 %v876
      %1146 = vmatprep.subr.bf16.mxu0 0
      %1147 = vmatpush1.bf16.msra.mxu0 %v877
      %1148 = vmatprep.mubr.bf16.mxu0 %v410
      %1149 = vmatmul.mubr.bf16.gmra.mrb[0].mxu0 %v409
      %v1150 = vpop.f32.mrb[0].mxu0
      %v1151 = vadd.f32 %v1110, %v1150
      %v1152 = vpop.f32.mrb[0].mxu0
      %v1153 = vpop.f32.mrb[0].mxu0
      %v1154 = vadd.f32 %v1113, %v1153
      %v1155 = vpop.f32.mrb[0].mxu0
      %1156 = vdwg.mxu0
      %1157 = vmatprep.subr.bf16.mxu0 0
      %1158 = vmatpush1.bf16.msra.mxu0 %v878
      %1159 = vmatprep.subr.bf16.mxu0 0
      %1160 = vmatpush1.bf16.msra.mxu0 %v879
      %1161 = vmatprep.subr.bf16.mxu0 0
      %1162 = vmatpush1.bf16.msra.mxu0 %v880
      %1163 = vmatprep.subr.bf16.mxu0 0
      %1164 = vmatpush1.bf16.msra.mxu0 %v881
      %1165 = vmatprep.subr.bf16.mxu0 0
      %1166 = vmatpush1.bf16.msra.mxu0 %v882
      %1167 = vmatprep.subr.bf16.mxu0 0
      %1168 = vmatpush1.bf16.msra.mxu0 %v883
      %1169 = vmatprep.subr.bf16.mxu0 0
      %1170 = vmatpush1.bf16.msra.mxu0 %v884
      %1171 = vmatprep.subr.bf16.mxu0 0
      %1172 = vmatpush1.bf16.msra.mxu0 %v885
      %1173 = vmatprep.subr.bf16.mxu0 0
      %1174 = vmatpush1.bf16.msra.mxu0 %v886
      %1175 = vmatprep.subr.bf16.mxu0 0
      %1176 = vmatpush1.bf16.msra.mxu0 %v887
      %1177 = vmatprep.subr.bf16.mxu0 0
      %1178 = vmatpush1.bf16.msra.mxu0 %v888
      %1179 = vmatprep.subr.bf16.mxu0 0
      %1180 = vmatpush1.bf16.msra.mxu0 %v889
      %1181 = vmatprep.subr.bf16.mxu0 0
      %1182 = vmatpush1.bf16.msra.mxu0 %v890
      %1183 = vmatprep.subr.bf16.mxu0 0
      %1184 = vmatpush1.bf16.msra.mxu0 %v891
      %1185 = vmatprep.subr.bf16.mxu0 0
      %1186 = vmatpush1.bf16.msra.mxu0 %v892
      %1187 = vmatprep.subr.bf16.mxu0 0
      %1188 = vmatpush1.bf16.msra.mxu0 %v893
      %1189 = vmatprep.mubr.bf16.mxu0 %v412
      %1190 = vmatmul.mubr.bf16.gmra.mrb[0].mxu0 %v411
      %v1191 = vpop.f32.mrb[0].mxu0
      %v1192 = vadd.f32 %v1151, %v1191
      %v1193 = vpop.f32.mrb[0].mxu0
      %v1194 = vpop.f32.mrb[0].mxu0
      %v1195 = vadd.f32 %v1154, %v1194
      %v1196 = vpop.f32.mrb[0].mxu0
      %1197 = vdwg.mxu0
      %1198 = vmatprep.subr.bf16.mxu0 0
      %1199 = vmatpush1.bf16.msra.mxu0 %v894
      %1200 = vmatprep.subr.bf16.mxu0 0
      %1201 = vmatpush1.bf16.msra.mxu0 %v895
      %1202 = vmatprep.subr.bf16.mxu0 0
      %1203 = vmatpush1.bf16.msra.mxu0 %v896
      %1204 = vmatprep.subr.bf16.mxu0 0
      %1205 = vmatpush1.bf16.msra.mxu0 %v897
      %1206 = vmatprep.subr.bf16.mxu0 0
      %1207 = vmatpush1.bf16.msra.mxu0 %v898
      %1208 = vmatprep.subr.bf16.mxu0 0
      %1209 = vmatpush1.bf16.msra.mxu0 %v899
      %1210 = vmatprep.subr.bf16.mxu0 0
      %1211 = vmatpush1.bf16.msra.mxu0 %v900
      %1212 = vmatprep.subr.bf16.mxu0 0
      %1213 = vmatpush1.bf16.msra.mxu0 %v901
      %1214 = vmatprep.subr.bf16.mxu0 0
      %1215 = vmatpush1.bf16.msra.mxu0 %v902
      %1216 = vmatprep.subr.bf16.mxu0 0
      %1217 = vmatpush1.bf16.msra.mxu0 %v903
      %1218 = vmatprep.subr.bf16.mxu0 0
      %1219 = vmatpush1.bf16.msra.mxu0 %v904
      %1220 = vmatprep.subr.bf16.mxu0 0
      %1221 = vmatpush1.bf16.msra.mxu0 %v905
      %1222 = vmatprep.subr.bf16.mxu0 0
      %1223 = vmatpush1.bf16.msra.mxu0 %v906
      %1224 = vmatprep.subr.bf16.mxu0 0
      %1225 = vmatpush1.bf16.msra.mxu0 %v907
      %1226 = vmatprep.subr.bf16.mxu0 0
      %1227 = vmatpush1.bf16.msra.mxu0 %v908
      %1228 = vmatprep.subr.bf16.mxu0 0
      %1229 = vmatpush1.bf16.msra.mxu0 %v909
      %1230 = vmatprep.mubr.bf16.mxu0 %v414
      %1231 = vmatmul.mubr.bf16.gmra.mrb[0].mxu0 %v413
      %v1232 = vpop.f32.mrb[0].mxu0
      %v1233 = vadd.f32 %v1192, %v1232
      %v1234 = vpop.f32.mrb[0].mxu0
      %v1235 = vpop.f32.mrb[0].mxu0
      %v1236 = vadd.f32 %v1195, %v1235
      %v1237 = vpop.f32.mrb[0].mxu0
      %1238 = vdwg.mxu0
      %1239 = vmatprep.subr.bf16.mxu0 0
      %1240 = vmatpush1.bf16.msra.mxu0 %v910
      %1241 = vmatprep.subr.bf16.mxu0 0
      %1242 = vmatpush1.bf16.msra.mxu0 %v911
      %1243 = vmatprep.subr.bf16.mxu0 0
      %1244 = vmatpush1.bf16.msra.mxu0 %v912
      %1245 = vmatprep.subr.bf16.mxu0 0
      %1246 = vmatpush1.bf16.msra.mxu0 %v913
      %1247 = vmatprep.subr.bf16.mxu0 0
      %1248 = vmatpush1.bf16.msra.mxu0 %v914
      %1249 = vmatprep.subr.bf16.mxu0 0
      %1250 = vmatpush1.bf16.msra.mxu0 %v915
      %1251 = vmatprep.subr.bf16.mxu0 0
      %1252 = vmatpush1.bf16.msra.mxu0 %v916
      %1253 = vmatprep.subr.bf16.mxu0 0
      %1254 = vmatpush1.bf16.msra.mxu0 %v917
      %1255 = vmatprep.subr.bf16.mxu0 0
      %1256 = vmatpush1.bf16.msra.mxu0 %v918
      %1257 = vmatprep.subr.bf16.mxu0 0
      %1258 = vmatpush1.bf16.msra.mxu0 %v919
      %1259 = vmatprep.subr.bf16.mxu0 0
      %1260 = vmatpush1.bf16.msra.mxu0 %v920
      %1261 = vmatprep.subr.bf16.mxu0 0
      %1262 = vmatpush1.bf16.msra.mxu0 %v921
      %1263 = vmatprep.subr.bf16.mxu0 0
      %1264 = vmatpush1.bf16.msra.mxu0 %v922
      %1265 = vmatprep.subr.bf16.mxu0 0
      %1266 = vmatpush1.bf16.msra.mxu0 %v923
      %1267 = vmatprep.subr.bf16.mxu0 0
      %1268 = vmatpush1.bf16.msra.mxu0 %v924
      %1269 = vmatprep.subr.bf16.mxu0 0
      %1270 = vmatpush1.bf16.msra.mxu0 %v925
      %1271 = vmatprep.mubr.bf16.mxu0 %v416
      %1272 = vmatmul.mubr.bf16.gmra.mrb[0].mxu0 %v415
      %v1273 = vpop.f32.mrb[0].mxu0
      %v1274 = vadd.f32 %v1233, %v1273
      %v1275 = vpop.f32.mrb[0].mxu0
      %v1276 = vpop.f32.mrb[0].mxu0
      %v1277 = vadd.f32 %v1236, %v1276
      %v1278 = vpop.f32.mrb[0].mxu0
      %1279 = vdwg.mxu0
      %1280 = vmatprep.subr.bf16.mxu0 0
      %1281 = vmatpush1.bf16.msra.mxu0 %v926
      %1282 = vmatprep.subr.bf16.mxu0 0
      %1283 = vmatpush1.bf16.msra.mxu0 %v927
      %1284 = vmatprep.subr.bf16.mxu0 0
      %1285 = vmatpush1.bf16.msra.mxu0 %v928
      %1286 = vmatprep.subr.bf16.mxu0 0
      %1287 = vmatpush1.bf16.msra.mxu0 %v929
      %1288 = vmatprep.subr.bf16.mxu0 0
      %1289 = vmatpush1.bf16.msra.mxu0 0
      %1290 = vmatprep.subr.bf16.mxu0 0
      %1291 = vmatpush1.bf16.msra.mxu0 0
      %1292 = vmatprep.subr.bf16.mxu0 0
      %1293 = vmatpush1.bf16.msra.mxu0 0
      %1294 = vmatprep.subr.bf16.mxu0 0
      %1295 = vmatpush1.bf16.msra.mxu0 0
      %1296 = vmatprep.subr.bf16.mxu0 0
      %1297 = vmatpush1.bf16.msra.mxu0 0
      %1298 = vmatprep.subr.bf16.mxu0 0
      %1299 = vmatpush1.bf16.msra.mxu0 0
      %1300 = vmatprep.subr.bf16.mxu0 0
      %1301 = vmatpush1.bf16.msra.mxu0 0
      %1302 = vmatprep.subr.bf16.mxu0 0
      %1303 = vmatpush1.bf16.msra.mxu0 0
      %1304 = vmatprep.subr.bf16.mxu0 0
      %1305 = vmatpush1.bf16.msra.mxu0 0
      %1306 = vmatprep.subr.bf16.mxu0 0
      %1307 = vmatpush1.bf16.msra.mxu0 0
      %1308 = vmatprep.subr.bf16.mxu0 0
      %1309 = vmatpush1.bf16.msra.mxu0 0
      %1310 = vmatprep.subr.bf16.mxu0 0
      %1311 = vmatpush1.bf16.msra.mxu0 0
      %1312 = vmatprep.mubr.bf16.mxu0 0
      %1313 = vmatmul.mubr.bf16.gmra.mrb[0].mxu0 %v1032
      %v1314 = vpop.f32.mrb[0].mxu0
      %v1315 = vadd.f32 %v1274, %v1314
      %v1316 = vpop.f32.mrb[0].mxu0
      %v1317 = vpop.f32.mrb[0].mxu0
      %v1318 = vadd.f32 %v1277, %v1317
      %v1319 = vpop.f32.mrb[0].mxu0
      %1320 = vdwg.mxu0
      %s1321 = scalar_lea.vmem %s1, 800
      %v1322 = vld [vmem:[%s1321] sm:$0xf]
      %v1323 = vld [vmem:[%s1321 + $0x4] sm:$0xf]
      %v1324 = vld [vmem:[%s1321 + $0x8] sm:$0xf]
      %v1325 = vld [vmem:[%s1321 + $0xc] sm:$0xf]
      %v1326 = vld [vmem:[%s1321 + $0x10] sm:$0xf]
      %v1327 = vld [vmem:[%s1321 + $0x14] sm:$0xf]
      %v1328 = vld [vmem:[%s1321 + $0x18] sm:$0xf]
      %v1329 = vld [vmem:[%s1321 + $0x1c] sm:$0xf]
      %v1330 = vld [vmem:[%s1321 + $0x20] sm:$0xf]
      %v1331 = vld [vmem:[%s1321 + $0x24] sm:$0xf]
      %v1332 = vld [vmem:[%s1321 + $0x28] sm:$0xf]
      %v1333 = vld [vmem:[%s1321 + $0x2c] sm:$0xf]
      %v1334 = vld [vmem:[%s1321 + $0x30] sm:$0xf]
      %v1335 = vld [vmem:[%s1321 + $0x34] sm:$0xf]
      %v1336 = vld [vmem:[%s1321 + $0x38] sm:$0xf]
      %v1337 = vld [vmem:[%s1321 + $0x3c] sm:$0xf]
      %v1338 = vld [vmem:[%s1321 + $0x40] sm:$0xf]
      %v1339 = vld [vmem:[%s1321 + $0x44] sm:$0xf]
      %v1340 = vld [vmem:[%s1321 + $0x48] sm:$0xf]
      %v1341 = vld [vmem:[%s1321 + $0x4c] sm:$0xf]
      %v1342 = vld [vmem:[%s1321 + $0x50] sm:$0xf]
      %v1343 = vld [vmem:[%s1321 + $0x54] sm:$0xf]
      %v1344 = vld [vmem:[%s1321 + $0x58] sm:$0xf]
      %v1345 = vld [vmem:[%s1321 + $0x5c] sm:$0xf]
      %v1346 = vld [vmem:[%s1321 + $0x60] sm:$0xf]
      %v1347 = vld [vmem:[%s1321 + $0x64] sm:$0xf]
      %v1348 = vld [vmem:[%s1321 + $0x68] sm:$0xf]
      %v1349 = vld [vmem:[%s1321 + $0x6c] sm:$0xf]
      %v1350 = vld [vmem:[%s1321 + $0x70] sm:$0xf]
      %v1351 = vld [vmem:[%s1321 + $0x74] sm:$0xf]
      %v1352 = vld [vmem:[%s1321 + $0x78] sm:$0xf]
      %v1353 = vld [vmem:[%s1321 + $0x7c] sm:$0xf]
      %v1354 = vld [vmem:[%s1321 + $0x80] sm:$0xf]
      %v1355 = vld [vmem:[%s1321 + $0x84] sm:$0xf]
      %v1356 = vld [vmem:[%s1321 + $0x88] sm:$0xf]
      %v1357 = vld [vmem:[%s1321 + $0x8c] sm:$0xf]
      %v1358 = vld [vmem:[%s1321 + $0x90] sm:$0xf]
      %v1359 = vld [vmem:[%s1321 + $0x94] sm:$0xf]
      %v1360 = vld [vmem:[%s1321 + $0x98] sm:$0xf]
      %v1361 = vld [vmem:[%s1321 + $0x9c] sm:$0xf]
      %v1362 = vld [vmem:[%s1321 + $0xa0] sm:$0xf]
      %v1363 = vld [vmem:[%s1321 + $0xa4] sm:$0xf]
      %v1364 = vld [vmem:[%s1321 + $0xa8] sm:$0xf]
      %v1365 = vld [vmem:[%s1321 + $0xac] sm:$0xf]
      %v1366 = vld [vmem:[%s1321 + $0xb0] sm:$0xf]
      %v1367 = vld [vmem:[%s1321 + $0xb4] sm:$0xf]
      %v1368 = vld [vmem:[%s1321 + $0xb8] sm:$0xf]
      %v1369 = vld [vmem:[%s1321 + $0xbc] sm:$0xf]
      %v1370 = vld [vmem:[%s1321 + $0xc0] sm:$0xf]
      %v1371 = vld [vmem:[%s1321 + $0xc4] sm:$0xf]
      %v1372 = vld [vmem:[%s1321 + $0xc8] sm:$0xf]
      %v1373 = vld [vmem:[%s1321 + $0xcc] sm:$0xf]
      %v1374 = vld [vmem:[%s1321 + $0xd0] sm:$0xf]
      %v1375 = vld [vmem:[%s1321 + $0xd4] sm:$0xf]
      %v1376 = vld [vmem:[%s1321 + $0xd8] sm:$0xf]
      %v1377 = vld [vmem:[%s1321 + $0xdc] sm:$0xf]
      %v1378 = vld [vmem:[%s1321 + $0xe0] sm:$0xf]
      %v1379 = vld [vmem:[%s1321 + $0xe4] sm:$0xf]
      %v1380 = vld [vmem:[%s1321 + $0xe8] sm:$0xf]
      %v1381 = vld [vmem:[%s1321 + $0xec] sm:$0xf]
      %v1382 = vld [vmem:[%s1321 + $0xf0] sm:$0xf]
      %v1383 = vld [vmem:[%s1321 + $0xf4] sm:$0xf]
      %v1384 = vld [vmem:[%s1321 + $0xf8] sm:$0xf]
      %v1385 = vld [vmem:[%s1321 + $0xfc] sm:$0xf]
      %v1386 = vld [vmem:[%s1321 + $0x100] sm:$0xf]
      %v1387 = vld [vmem:[%s1321 + $0x104] sm:$0xf]
      %v1388 = vld [vmem:[%s1321 + $0x108] sm:$0xf]
      %v1389 = vld [vmem:[%s1321 + $0x10c] sm:$0xf]
      %v1390 = vld [vmem:[%s1321 + $0x110] sm:$0xf]
      %v1391 = vld [vmem:[%s1321 + $0x114] sm:$0xf]
      %v1392 = vld [vmem:[%s1321 + $0x118] sm:$0xf]
      %v1393 = vld [vmem:[%s1321 + $0x11c] sm:$0xf]
      %v1394 = vld [vmem:[%s1321 + $0x120] sm:$0xf]
      %v1395 = vld [vmem:[%s1321 + $0x124] sm:$0xf]
      %v1396 = vld [vmem:[%s1321 + $0x128] sm:$0xf]
      %v1397 = vld [vmem:[%s1321 + $0x12c] sm:$0xf]
      %v1398 = vld [vmem:[%s1321 + $0x130] sm:$0xf]
      %v1399 = vld [vmem:[%s1321 + $0x134] sm:$0xf]
      %v1400 = vld [vmem:[%s1321 + $0x138] sm:$0xf]
      %v1401 = vld [vmem:[%s1321 + $0x13c] sm:$0xf]
      %v1402 = vld [vmem:[%s1321 + $0x140] sm:$0xf]
      %v1403 = vld [vmem:[%s1321 + $0x144] sm:$0xf]
      %v1404 = vld [vmem:[%s1321 + $0x148] sm:$0xf]
      %v1405 = vld [vmem:[%s1321 + $0x14c] sm:$0xf]
      %v1406 = vld [vmem:[%s1321 + $0x150] sm:$0xf]
      %v1407 = vld [vmem:[%s1321 + $0x154] sm:$0xf]
      %v1408 = vld [vmem:[%s1321 + $0x158] sm:$0xf]
      %v1409 = vld [vmem:[%s1321 + $0x15c] sm:$0xf]
      %v1410 = vld [vmem:[%s1321 + $0x160] sm:$0xf]
      %v1411 = vld [vmem:[%s1321 + $0x164] sm:$0xf]
      %v1412 = vld [vmem:[%s1321 + $0x168] sm:$0xf]
      %v1413 = vld [vmem:[%s1321 + $0x16c] sm:$0xf]
      %v1414 = vld [vmem:[%s1321 + $0x170] sm:$0xf]
      %v1415 = vld [vmem:[%s1321 + $0x174] sm:$0xf]
      %v1416 = vld [vmem:[%s1321 + $0x178] sm:$0xf]
      %v1417 = vld [vmem:[%s1321 + $0x17c] sm:$0xf]
      %v1418 = vld [vmem:[%s1321 + $0x180] sm:$0xf]
      %v1419 = vld [vmem:[%s1321 + $0x184] sm:$0xf]
      %v1420 = vld [vmem:[%s1321 + $0x188] sm:$0xf]
      %v1421 = vld [vmem:[%s1321 + $0x18c] sm:$0xf]
      %v1422 = vld [vmem:[%s1321 + $0x190] sm:$0xf]
      %v1423 = vld [vmem:[%s1321 + $0x194] sm:$0xf]
      %v1424 = vld [vmem:[%s1321 + $0x198] sm:$0xf]
      %v1425 = vld [vmem:[%s1321 + $0x19c] sm:$0xf]
      %v1426 = vld [vmem:[%s1321 + $0x1a0] sm:$0xf]
      %v1427 = vld [vmem:[%s1321 + $0x1a4] sm:$0xf]
      %v1428 = vld [vmem:[%s1321 + $0x1a8] sm:$0xf]
      %v1429 = vld [vmem:[%s1321 + $0x1ac] sm:$0xf]
      %v1430 = vld [vmem:[%s1321 + $0x1b0] sm:$0xf]
      %v1431 = vld [vmem:[%s1321 + $0x1b4] sm:$0xf]
      %v1432 = vld [vmem:[%s1321 + $0x1b8] sm:$0xf]
      %v1433 = vld [vmem:[%s1321 + $0x1bc] sm:$0xf]
      %v1434 = vld [vmem:[%s1321 + $0x1c0] sm:$0xf]
      %v1435 = vld [vmem:[%s1321 + $0x1c4] sm:$0xf]
      %v1436 = vld [vmem:[%s1321 + $0x1c8] sm:$0xf]
      %v1437 = vld [vmem:[%s1321 + $0x1cc] sm:$0xf]
      %v1438 = vld [vmem:[%s1321 + $0x1d0] sm:$0xf]
      %v1439 = vld [vmem:[%s1321 + $0x1d4] sm:$0xf]
      %v1440 = vld [vmem:[%s1321 + $0x1d8] sm:$0xf]
      %v1441 = vld [vmem:[%s1321 + $0x1dc] sm:$0xf]
      %v1442 = vld [vmem:[%s1321 + $0x1e0] sm:$0xf]
      %v1443 = vld [vmem:[%s1321 + $0x1e4] sm:$0xf]
      %v1444 = vld [vmem:[%s1321 + $0x1e8] sm:$0xf]
      %v1445 = vld [vmem:[%s1321 + $0x1ec] sm:$0xf]
      %v1446 = vld [vmem:[%s1321 + $0x1f0] sm:$0xf]
      %v1447 = vld [vmem:[%s1321 + $0x1f4] sm:$0xf]
      %v1448 = vld [vmem:[%s1321 + $0x1f8] sm:$0xf]
      %v1449 = vld [vmem:[%s1321 + $0x1fc] sm:$0xf]
      %v1450 = vld [vmem:[%s1321 + $0x200] sm:$0xf]
      %v1451 = vld [vmem:[%s1321 + $0x204] sm:$0xf]
      %v1452 = vld [vmem:[%s1321 + $0x208] sm:$0xf]
      %v1453 = vld [vmem:[%s1321 + $0x20c] sm:$0xf]
      %v1454 = vld [vmem:[%s1321 + $0x210] sm:$0xf]
      %v1455 = vld [vmem:[%s1321 + $0x214] sm:$0xf]
      %v1456 = vld [vmem:[%s1321 + $0x218] sm:$0xf]
      %v1457 = vld [vmem:[%s1321 + $0x21c] sm:$0xf]
      %v1458 = vld [vmem:[%s1321 + $0x220] sm:$0xf]
      %v1459 = vld [vmem:[%s1321 + $0x224] sm:$0xf]
      %v1460 = vld [vmem:[%s1321 + $0x228] sm:$0xf]
      %v1461 = vld [vmem:[%s1321 + $0x22c] sm:$0xf]
      %v1462 = vld [vmem:[%s1321 + $0x230] sm:$0xf]
      %v1463 = vld [vmem:[%s1321 + $0x234] sm:$0xf]
      %v1464 = vld [vmem:[%s1321 + $0x238] sm:$0xf]
      %v1465 = vld [vmem:[%s1321 + $0x23c] sm:$0xf]
      %v1466 = vld [vmem:[%s1321 + $0x240] sm:$0xf]
      %v1467 = vld [vmem:[%s1321 + $0x244] sm:$0xf]
      %v1468 = vld [vmem:[%s1321 + $0x248] sm:$0xf]
      %v1469 = vld [vmem:[%s1321 + $0x24c] sm:$0xf]
      %v1470 = vld [vmem:[%s1321 + $0x250] sm:$0xf]
      %v1471 = vld [vmem:[%s1321 + $0x254] sm:$0xf]
      %v1472 = vld [vmem:[%s1321 + $0x258] sm:$0xf]
      %v1473 = vld [vmem:[%s1321 + $0x25c] sm:$0xf]
      %v1474 = vld [vmem:[%s1321 + $0x260] sm:$0xf]
      %v1475 = vld [vmem:[%s1321 + $0x264] sm:$0xf]
      %v1476 = vld [vmem:[%s1321 + $0x268] sm:$0xf]
      %v1477 = vld [vmem:[%s1321 + $0x26c] sm:$0xf]
      %v1478 = vld [vmem:[%s1321 + $0x270] sm:$0xf]
      %v1479 = vld [vmem:[%s1321 + $0x274] sm:$0xf]
      %v1480 = vld [vmem:[%s1321 + $0x278] sm:$0xf]
      %v1481 = vld [vmem:[%s1321 + $0x27c] sm:$0xf]
      %v1482 = vld [vmem:[%s1321 + $0x280] sm:$0xf]
      %v1483 = vld [vmem:[%s1321 + $0x284] sm:$0xf]
      %v1484 = vld [vmem:[%s1321 + $0x288] sm:$0xf]
      %v1485 = vld [vmem:[%s1321 + $0x28c] sm:$0xf]
      %v1486 = vld [vmem:[%s1321 + $0x290] sm:$0xf]
      %v1487 = vld [vmem:[%s1321 + $0x294] sm:$0xf]
      %v1488 = vld [vmem:[%s1321 + $0x298] sm:$0xf]
      %v1489 = vld [vmem:[%s1321 + $0x29c] sm:$0xf]
      %v1490 = vld [vmem:[%s1321 + $0x2a0] sm:$0xf]
      %v1491 = vld [vmem:[%s1321 + $0x2a4] sm:$0xf]
      %v1492 = vld [vmem:[%s1321 + $0x2a8] sm:$0xf]
      %v1493 = vld [vmem:[%s1321 + $0x2ac] sm:$0xf]
      %v1494 = vld [vmem:[%s1321 + $0x2b0] sm:$0xf]
      %v1495 = vld [vmem:[%s1321 + $0x2b4] sm:$0xf]
      %v1496 = vld [vmem:[%s1321 + $0x2b8] sm:$0xf]
      %v1497 = vld [vmem:[%s1321 + $0x2bc] sm:$0xf]
      %v1498 = vld [vmem:[%s1321 + $0x2c0] sm:$0xf]
      %v1499 = vld [vmem:[%s1321 + $0x2c4] sm:$0xf]
      %v1500 = vld [vmem:[%s1321 + $0x2c8] sm:$0xf]
      %v1501 = vld [vmem:[%s1321 + $0x2cc] sm:$0xf]
      %v1502 = vld [vmem:[%s1321 + $0x2d0] sm:$0xf]
      %v1503 = vld [vmem:[%s1321 + $0x2d4] sm:$0xf]
      %v1504 = vld [vmem:[%s1321 + $0x2d8] sm:$0xf]
      %v1505 = vld [vmem:[%s1321 + $0x2dc] sm:$0xf]
      %v1506 = vld [vmem:[%s1321 + $0x2e0] sm:$0xf]
      %v1507 = vld [vmem:[%s1321 + $0x2e4] sm:$0xf]
      %v1508 = vld [vmem:[%s1321 + $0x2e8] sm:$0xf]
      %v1509 = vld [vmem:[%s1321 + $0x2ec] sm:$0xf]
      %v1510 = vld [vmem:[%s1321 + $0x2f0] sm:$0xf]
      %v1511 = vld [vmem:[%s1321 + $0x2f4] sm:$0xf]
      %v1512 = vld [vmem:[%s1321 + $0x2f8] sm:$0xf]
      %v1513 = vld [vmem:[%s1321 + $0x2fc] sm:$0xf]
      %v1514 = vld [vmem:[%s1321 + $0x300] sm:$0xf]
      %v1515 = vld [vmem:[%s1321 + $0x304] sm:$0xf]
      %v1516 = vld [vmem:[%s1321 + $0x308] sm:$0xf]
      %v1517 = vld [vmem:[%s1321 + $0x30c] sm:$0xf]
      %v1518 = vld [vmem:[%s1321 + $0x310] sm:$0xf]
      %v1519 = vld [vmem:[%s1321 + $0x314] sm:$0xf]
      %v1520 = vld [vmem:[%s1321 + $0x318] sm:$0xf]
      %v1521 = vld [vmem:[%s1321 + $0x31c] sm:$0xf]
      %v1722 = vunpack.c.l.b16 %v1322
      %v1723 = vunpack.c.l.b16 %v1323
      %v1724 = vunpack.c.l.b16 %v1324
      %v1725 = vunpack.c.l.b16 %v1325
      %v1726 = vunpack.c.l.b16 %v1326
      %v1727 = vunpack.c.l.b16 %v1327
      %v1728 = vunpack.c.l.b16 %v1328
      %v1729 = vunpack.c.l.b16 %v1329
      %v1730 = vunpack.c.l.b16 %v1330
      %v1731 = vunpack.c.l.b16 %v1331
      %v1732 = vunpack.c.l.b16 %v1332
      %v1733 = vunpack.c.l.b16 %v1333
      %v1734 = vunpack.c.l.b16 %v1334
      %v1735 = vunpack.c.l.b16 %v1335
      %v1736 = vunpack.c.l.b16 %v1336
      %v1737 = vunpack.c.l.b16 %v1337
      %v1738 = vunpack.c.l.b16 %v1338
      %v1739 = vunpack.c.l.b16 %v1339
      %v1740 = vunpack.c.l.b16 %v1340
      %v1741 = vunpack.c.l.b16 %v1341
      %v1742 = vunpack.c.l.b16 %v1342
      %v1743 = vunpack.c.l.b16 %v1343
      %v1744 = vunpack.c.l.b16 %v1344
      %v1745 = vunpack.c.l.b16 %v1345
      %v1746 = vunpack.c.l.b16 %v1346
      %v1747 = vunpack.c.l.b16 %v1347
      %v1748 = vunpack.c.l.b16 %v1348
      %v1749 = vunpack.c.l.b16 %v1349
      %v1750 = vunpack.c.l.b16 %v1350
      %v1751 = vunpack.c.l.b16 %v1351
      %v1752 = vunpack.c.l.b16 %v1352
      %v1753 = vunpack.c.l.b16 %v1353
      %v1754 = vunpack.c.l.b16 %v1354
      %v1755 = vunpack.c.l.b16 %v1355
      %v1756 = vunpack.c.l.b16 %v1356
      %v1757 = vunpack.c.l.b16 %v1357
      %v1758 = vunpack.c.l.b16 %v1358
      %v1759 = vunpack.c.l.b16 %v1359
      %v1760 = vunpack.c.l.b16 %v1360
      %v1761 = vunpack.c.l.b16 %v1361
      %v1762 = vunpack.c.l.b16 %v1362
      %v1763 = vunpack.c.l.b16 %v1363
      %v1764 = vunpack.c.l.b16 %v1364
      %v1765 = vunpack.c.l.b16 %v1365
      %v1766 = vunpack.c.l.b16 %v1366
      %v1767 = vunpack.c.l.b16 %v1367
      %v1768 = vunpack.c.l.b16 %v1368
      %v1769 = vunpack.c.l.b16 %v1369
      %v1770 = vunpack.c.l.b16 %v1370
      %v1771 = vunpack.c.l.b16 %v1371
      %v1772 = vunpack.c.l.b16 %v1372
      %v1773 = vunpack.c.l.b16 %v1373
      %v1774 = vunpack.c.l.b16 %v1374
      %v1775 = vunpack.c.l.b16 %v1375
      %v1776 = vunpack.c.l.b16 %v1376
      %v1777 = vunpack.c.l.b16 %v1377
      %v1778 = vunpack.c.l.b16 %v1378
      %v1779 = vunpack.c.l.b16 %v1379
      %v1780 = vunpack.c.l.b16 %v1380
      %v1781 = vunpack.c.l.b16 %v1381
      %v1782 = vunpack.c.l.b16 %v1382
      %v1783 = vunpack.c.l.b16 %v1383
      %v1784 = vunpack.c.l.b16 %v1384
      %v1785 = vunpack.c.l.b16 %v1385
      %v1786 = vunpack.c.l.b16 %v1386
      %v1787 = vunpack.c.l.b16 %v1387
      %v1788 = vunpack.c.l.b16 %v1388
      %v1789 = vunpack.c.l.b16 %v1389
      %v1790 = vunpack.c.l.b16 %v1390
      %v1791 = vunpack.c.l.b16 %v1391
      %v1792 = vunpack.c.l.b16 %v1392
      %v1793 = vunpack.c.l.b16 %v1393
      %v1794 = vunpack.c.l.b16 %v1394
      %v1795 = vunpack.c.l.b16 %v1395
      %v1796 = vunpack.c.l.b16 %v1396
      %v1797 = vunpack.c.l.b16 %v1397
      %v1798 = vunpack.c.l.b16 %v1398
      %v1799 = vunpack.c.l.b16 %v1399
      %v1800 = vunpack.c.l.b16 %v1400
      %v1801 = vunpack.c.l.b16 %v1401
      %v1802 = vunpack.c.l.b16 %v1402
      %v1803 = vunpack.c.l.b16 %v1403
      %v1804 = vunpack.c.l.b16 %v1404
      %v1805 = vunpack.c.l.b16 %v1405
      %v1806 = vunpack.c.l.b16 %v1406
      %v1807 = vunpack.c.l.b16 %v1407
      %v1808 = vunpack.c.l.b16 %v1408
      %v1809 = vunpack.c.l.b16 %v1409
      %v1810 = vunpack.c.l.b16 %v1410
      %v1811 = vunpack.c.l.b16 %v1411
      %v1812 = vunpack.c.l.b16 %v1412
      %v1813 = vunpack.c.l.b16 %v1413
      %v1814 = vunpack.c.l.b16 %v1414
      %v1815 = vunpack.c.l.b16 %v1415
      %v1816 = vunpack.c.l.b16 %v1416
      %v1817 = vunpack.c.l.b16 %v1417
      %v1818 = vunpack.c.l.b16 %v1418
      %v1819 = vunpack.c.l.b16 %v1419
      %v1820 = vunpack.c.l.b16 %v1420
      %v1821 = vunpack.c.l.b16 %v1421
      %v1822 = vunpack.c.l.b16 %v1422
      %v1823 = vunpack.c.l.b16 %v1423
      %v1824 = vunpack.c.l.b16 %v1424
      %v1825 = vunpack.c.l.b16 %v1425
      %v1826 = vunpack.c.l.b16 %v1426
      %v1827 = vunpack.c.l.b16 %v1427
      %v1828 = vunpack.c.l.b16 %v1428
      %v1829 = vunpack.c.l.b16 %v1429
      %v1830 = vunpack.c.l.b16 %v1430
      %v1831 = vunpack.c.l.b16 %v1431
      %v1832 = vunpack.c.l.b16 %v1432
      %v1833 = vunpack.c.l.b16 %v1433
      %v1834 = vunpack.c.l.b16 %v1434
      %v1835 = vunpack.c.l.b16 %v1435
      %v1836 = vunpack.c.l.b16 %v1436
      %v1837 = vunpack.c.l.b16 %v1437
      %v1838 = vunpack.c.l.b16 %v1438
      %v1839 = vunpack.c.l.b16 %v1439
      %v1840 = vunpack.c.l.b16 %v1440
      %v1841 = vunpack.c.l.b16 %v1441
      %v1842 = vunpack.c.l.b16 %v1442
      %v1843 = vunpack.c.l.b16 %v1443
      %v1844 = vunpack.c.l.b16 %v1444
      %v1845 = vunpack.c.l.b16 %v1445
      %v1846 = vunpack.c.l.b16 %v1446
      %v1847 = vunpack.c.l.b16 %v1447
      %v1848 = vunpack.c.l.b16 %v1448
      %v1849 = vunpack.c.l.b16 %v1449
      %v1850 = vunpack.c.l.b16 %v1450
      %v1851 = vunpack.c.l.b16 %v1451
      %v1852 = vunpack.c.l.b16 %v1452
      %v1853 = vunpack.c.l.b16 %v1453
      %v1854 = vunpack.c.l.b16 %v1454
      %v1855 = vunpack.c.l.b16 %v1455
      %v1856 = vunpack.c.l.b16 %v1456
      %v1857 = vunpack.c.l.b16 %v1457
      %v1858 = vunpack.c.l.b16 %v1458
      %v1859 = vunpack.c.l.b16 %v1459
      %v1860 = vunpack.c.l.b16 %v1460
      %v1861 = vunpack.c.l.b16 %v1461
      %v1862 = vunpack.c.l.b16 %v1462
      %v1863 = vunpack.c.l.b16 %v1463
      %v1864 = vunpack.c.l.b16 %v1464
      %v1865 = vunpack.c.l.b16 %v1465
      %v1866 = vunpack.c.l.b16 %v1466
      %v1867 = vunpack.c.l.b16 %v1467
      %v1868 = vunpack.c.l.b16 %v1468
      %v1869 = vunpack.c.l.b16 %v1469
      %v1870 = vunpack.c.l.b16 %v1470
      %v1871 = vunpack.c.l.b16 %v1471
      %v1872 = vunpack.c.l.b16 %v1472
      %v1873 = vunpack.c.l.b16 %v1473
      %v1874 = vunpack.c.l.b16 %v1474
      %v1875 = vunpack.c.l.b16 %v1475
      %v1876 = vunpack.c.l.b16 %v1476
      %v1877 = vunpack.c.l.b16 %v1477
      %v1878 = vunpack.c.l.b16 %v1478
      %v1879 = vunpack.c.l.b16 %v1479
      %v1880 = vunpack.c.l.b16 %v1480
      %v1881 = vunpack.c.l.b16 %v1481
      %v1882 = vunpack.c.l.b16 %v1482
      %v1883 = vunpack.c.l.b16 %v1483
      %v1884 = vunpack.c.l.b16 %v1484
      %v1885 = vunpack.c.l.b16 %v1485
      %v1886 = vunpack.c.l.b16 %v1486
      %v1887 = vunpack.c.l.b16 %v1487
      %v1888 = vunpack.c.l.b16 %v1488
      %v1889 = vunpack.c.l.b16 %v1489
      %v1890 = vunpack.c.l.b16 %v1490
      %v1891 = vunpack.c.l.b16 %v1491
      %v1892 = vunpack.c.l.b16 %v1492
      %v1893 = vunpack.c.l.b16 %v1493
      %v1894 = vunpack.c.l.b16 %v1494
      %v1895 = vunpack.c.l.b16 %v1495
      %v1896 = vunpack.c.l.b16 %v1496
      %v1897 = vunpack.c.l.b16 %v1497
      %v1898 = vunpack.c.l.b16 %v1498
      %v1899 = vunpack.c.l.b16 %v1499
      %v1900 = vunpack.c.l.b16 %v1500
      %v1901 = vunpack.c.l.b16 %v1501
      %v1902 = vunpack.c.l.b16 %v1502
      %v1903 = vunpack.c.l.b16 %v1503
      %v1904 = vunpack.c.l.b16 %v1504
      %v1905 = vunpack.c.l.b16 %v1505
      %v1906 = vunpack.c.l.b16 %v1506
      %v1907 = vunpack.c.l.b16 %v1507
      %v1908 = vunpack.c.l.b16 %v1508
      %v1909 = vunpack.c.l.b16 %v1509
      %v1910 = vunpack.c.l.b16 %v1510
      %v1911 = vunpack.c.l.b16 %v1511
      %v1912 = vunpack.c.l.b16 %v1512
      %v1913 = vunpack.c.l.b16 %v1513
      %v1914 = vunpack.c.l.b16 %v1514
      %v1915 = vunpack.c.l.b16 %v1515
      %v1916 = vunpack.c.l.b16 %v1516
      %v1917 = vunpack.c.l.b16 %v1517
      %v1918 = vunpack.c.l.b16 %v1518
      %v1919 = vunpack.c.l.b16 %v1519
      %v1920 = vunpack.c.l.b16 %v1520
      %v1921 = vunpack.c.l.b16 %v1521
      %v1922 = vpack.c.b16 %v1723, %v1722
      %v1923 = vpack.c.b16 %v1725, %v1724
      %v1924 = vpack.c.b16 %v1727, %v1726
      %v1925 = vpack.c.b16 %v1729, %v1728
      %v1926 = vpack.c.b16 %v1731, %v1730
      %v1927 = vpack.c.b16 %v1733, %v1732
      %v1928 = vpack.c.b16 %v1735, %v1734
      %v1929 = vpack.c.b16 %v1737, %v1736
      %v1930 = vpack.c.b16 %v1739, %v1738
      %v1931 = vpack.c.b16 %v1741, %v1740
      %v1932 = vpack.c.b16 %v1743, %v1742
      %v1933 = vpack.c.b16 %v1745, %v1744
      %v1934 = vpack.c.b16 %v1747, %v1746
      %v1935 = vpack.c.b16 %v1749, %v1748
      %v1936 = vpack.c.b16 %v1751, %v1750
      %v1937 = vpack.c.b16 %v1753, %v1752
      %v1938 = vpack.c.b16 %v1755, %v1754
      %v1939 = vpack.c.b16 %v1757, %v1756
      %v1940 = vpack.c.b16 %v1759, %v1758
      %v1941 = vpack.c.b16 %v1761, %v1760
      %v1942 = vpack.c.b16 %v1763, %v1762
      %v1943 = vpack.c.b16 %v1765, %v1764
      %v1944 = vpack.c.b16 %v1767, %v1766
      %v1945 = vpack.c.b16 %v1769, %v1768
      %v1946 = vpack.c.b16 %v1771, %v1770
      %v1947 = vpack.c.b16 %v1773, %v1772
      %v1948 = vpack.c.b16 %v1775, %v1774
      %v1949 = vpack.c.b16 %v1777, %v1776
      %v1950 = vpack.c.b16 %v1779, %v1778
      %v1951 = vpack.c.b16 %v1781, %v1780
      %v1952 = vpack.c.b16 %v1783, %v1782
      %v1953 = vpack.c.b16 %v1785, %v1784
      %v1954 = vpack.c.b16 %v1787, %v1786
      %v1955 = vpack.c.b16 %v1789, %v1788
      %v1956 = vpack.c.b16 %v1791, %v1790
      %v1957 = vpack.c.b16 %v1793, %v1792
      %v1958 = vpack.c.b16 %v1795, %v1794
      %v1959 = vpack.c.b16 %v1797, %v1796
      %v1960 = vpack.c.b16 %v1799, %v1798
      %v1961 = vpack.c.b16 %v1801, %v1800
      %v1962 = vpack.c.b16 %v1803, %v1802
      %v1963 = vpack.c.b16 %v1805, %v1804
      %v1964 = vpack.c.b16 %v1807, %v1806
      %v1965 = vpack.c.b16 %v1809, %v1808
      %v1966 = vpack.c.b16 %v1811, %v1810
      %v1967 = vpack.c.b16 %v1813, %v1812
      %v1968 = vpack.c.b16 %v1815, %v1814
      %v1969 = vpack.c.b16 %v1817, %v1816
      %v1970 = vpack.c.b16 %v1819, %v1818
      %v1971 = vpack.c.b16 %v1821, %v1820
      %v1972 = vpack.c.b16 %v1823, %v1822
      %v1973 = vpack.c.b16 %v1825, %v1824
      %v1974 = vpack.c.b16 %v1827, %v1826
      %v1975 = vpack.c.b16 %v1829, %v1828
      %v1976 = vpack.c.b16 %v1831, %v1830
      %v1977 = vpack.c.b16 %v1833, %v1832
      %v1978 = vpack.c.b16 %v1835, %v1834
      %v1979 = vpack.c.b16 %v1837, %v1836
      %v1980 = vpack.c.b16 %v1839, %v1838
      %v1981 = vpack.c.b16 %v1841, %v1840
      %v1982 = vpack.c.b16 %v1843, %v1842
      %v1983 = vpack.c.b16 %v1845, %v1844
      %v1984 = vpack.c.b16 %v1847, %v1846
      %v1985 = vpack.c.b16 %v1849, %v1848
      %v1986 = vpack.c.b16 %v1851, %v1850
      %v1987 = vpack.c.b16 %v1853, %v1852
      %v1988 = vpack.c.b16 %v1855, %v1854
      %v1989 = vpack.c.b16 %v1857, %v1856
      %v1990 = vpack.c.b16 %v1859, %v1858
      %v1991 = vpack.c.b16 %v1861, %v1860
      %v1992 = vpack.c.b16 %v1863, %v1862
      %v1993 = vpack.c.b16 %v1865, %v1864
      %v1994 = vpack.c.b16 %v1867, %v1866
      %v1995 = vpack.c.b16 %v1869, %v1868
      %v1996 = vpack.c.b16 %v1871, %v1870
      %v1997 = vpack.c.b16 %v1873, %v1872
      %v1998 = vpack.c.b16 %v1875, %v1874
      %v1999 = vpack.c.b16 %v1877, %v1876
      %v2000 = vpack.c.b16 %v1879, %v1878
      %v2001 = vpack.c.b16 %v1881, %v1880
      %v2002 = vpack.c.b16 %v1883, %v1882
      %v2003 = vpack.c.b16 %v1885, %v1884
      %v2004 = vpack.c.b16 %v1887, %v1886
      %v2005 = vpack.c.b16 %v1889, %v1888
      %v2006 = vpack.c.b16 %v1891, %v1890
      %v2007 = vpack.c.b16 %v1893, %v1892
      %v2008 = vpack.c.b16 %v1895, %v1894
      %v2009 = vpack.c.b16 %v1897, %v1896
      %v2010 = vpack.c.b16 %v1899, %v1898
      %v2011 = vpack.c.b16 %v1901, %v1900
      %v2012 = vpack.c.b16 %v1903, %v1902
      %v2013 = vpack.c.b16 %v1905, %v1904
      %v2014 = vpack.c.b16 %v1907, %v1906
      %v2015 = vpack.c.b16 %v1909, %v1908
      %v2016 = vpack.c.b16 %v1911, %v1910
      %v2017 = vpack.c.b16 %v1913, %v1912
      %v2018 = vpack.c.b16 %v1915, %v1914
      %v2019 = vpack.c.b16 %v1917, %v1916
      %v2020 = vpack.c.b16 %v1919, %v1918
      %v2021 = vpack.c.b16 %v1921, %v1920
      %2122 = vmatprep.subr.bf16.mxu0 0
      %2123 = vmatpush1.bf16.msra.mxu0 %v1922
      %2124 = vmatprep.subr.bf16.mxu0 0
      %2125 = vmatpush1.bf16.msra.mxu0 %v1923
      %2126 = vmatprep.subr.bf16.mxu0 0
      %2127 = vmatpush1.bf16.msra.mxu0 %v1924
      %2128 = vmatprep.subr.bf16.mxu0 0
      %2129 = vmatpush1.bf16.msra.mxu0 %v1925
      %2130 = vmatprep.subr.bf16.mxu0 0
      %2131 = vmatpush1.bf16.msra.mxu0 %v1926
      %2132 = vmatprep.subr.bf16.mxu0 0
      %2133 = vmatpush1.bf16.msra.mxu0 %v1927
      %2134 = vmatprep.subr.bf16.mxu0 0
      %2135 = vmatpush1.bf16.msra.mxu0 %v1928
      %2136 = vmatprep.subr.bf16.mxu0 0
      %2137 = vmatpush1.bf16.msra.mxu0 %v1929
      %2138 = vmatprep.subr.bf16.mxu0 0
      %2139 = vmatpush1.bf16.msra.mxu0 %v1930
      %2140 = vmatprep.subr.bf16.mxu0 0
      %2141 = vmatpush1.bf16.msra.mxu0 %v1931
      %2142 = vmatprep.subr.bf16.mxu0 0
      %2143 = vmatpush1.bf16.msra.mxu0 %v1932
      %2144 = vmatprep.subr.bf16.mxu0 0
      %2145 = vmatpush1.bf16.msra.mxu0 %v1933
      %2146 = vmatprep.subr.bf16.mxu0 0
      %2147 = vmatpush1.bf16.msra.mxu0 %v1934
      %2148 = vmatprep.subr.bf16.mxu0 0
      %2149 = vmatpush1.bf16.msra.mxu0 %v1935
      %2150 = vmatprep.subr.bf16.mxu0 0
      %2151 = vmatpush1.bf16.msra.mxu0 %v1936
      %2152 = vmatprep.subr.bf16.mxu0 0
      %2153 = vmatpush1.bf16.msra.mxu0 %v1937
      %2154 = vmatprep.mubr.bf16.mxu0 %v406
      %2155 = vmatmul.mubr.bf16.gmra.mrb[0].mxu0 %v405
      %v2156 = vpop.f32.mrb[0].mxu0
      %v2157 = vadd.f32 0.0, %v2156
      %v2158 = vpop.f32.mrb[0].mxu0
      %v2159 = vpop.f32.mrb[0].mxu0
      %v2160 = vadd.f32 0.0, %v2159
      %v2161 = vpop.f32.mrb[0].mxu0
      %2162 = vdwg.mxu0
      %2163 = vmatprep.subr.bf16.mxu0 0
      %2164 = vmatpush1.bf16.msra.mxu0 %v1938
      %2165 = vmatprep.subr.bf16.mxu0 0
      %2166 = vmatpush1.bf16.msra.mxu0 %v1939
      %2167 = vmatprep.subr.bf16.mxu0 0
      %2168 = vmatpush1.bf16.msra.mxu0 %v1940
      %2169 = vmatprep.subr.bf16.mxu0 0
      %2170 = vmatpush1.bf16.msra.mxu0 %v1941
      %2171 = vmatprep.subr.bf16.mxu0 0
      %2172 = vmatpush1.bf16.msra.mxu0 %v1942
      %2173 = vmatprep.subr.bf16.mxu0 0
      %2174 = vmatpush1.bf16.msra.mxu0 %v1943
      %2175 = vmatprep.subr.bf16.mxu0 0
      %2176 = vmatpush1.bf16.msra.mxu0 %v1944
      %2177 = vmatprep.subr.bf16.mxu0 0
      %2178 = vmatpush1.bf16.msra.mxu0 %v1945
      %2179 = vmatprep.subr.bf16.mxu0 0
      %2180 = vmatpush1.bf16.msra.mxu0 %v1946
      %2181 = vmatprep.subr.bf16.mxu0 0
      %2182 = vmatpush1.bf16.msra.mxu0 %v1947
      %2183 = vmatprep.subr.bf16.mxu0 0
      %2184 = vmatpush1.bf16.msra.mxu0 %v1948
      %2185 = vmatprep.subr.bf16.mxu0 0
      %2186 = vmatpush1.bf16.msra.mxu0 %v1949
      %2187 = vmatprep.subr.bf16.mxu0 0
      %2188 = vmatpush1.bf16.msra.mxu0 %v1950
      %2189 = vmatprep.subr.bf16.mxu0 0
      %2190 = vmatpush1.bf16.msra.mxu0 %v1951
      %2191 = vmatprep.subr.bf16.mxu0 0
      %2192 = vmatpush1.bf16.msra.mxu0 %v1952
      %2193 = vmatprep.subr.bf16.mxu0 0
      %2194 = vmatpush1.bf16.msra.mxu0 %v1953
      %2195 = vmatprep.mubr.bf16.mxu0 %v408
      %2196 = vmatmul.mubr.bf16.gmra.mrb[0].mxu0 %v407
      %v2197 = vpop.f32.mrb[0].mxu0
      %v2198 = vadd.f32 %v2157, %v2197
      %v2199 = vpop.f32.mrb[0].mxu0
      %v2200 = vpop.f32.mrb[0].mxu0
      %v2201 = vadd.f32 %v2160, %v2200
      %v2202 = vpop.f32.mrb[0].mxu0
      %2203 = vdwg.mxu0
      %2204 = vmatprep.subr.bf16.mxu0 0
      %2205 = vmatpush1.bf16.msra.mxu0 %v1954
      %2206 = vmatprep.subr.bf16.mxu0 0
      %2207 = vmatpush1.bf16.msra.mxu0 %v1955
      %2208 = vmatprep.subr.bf16.mxu0 0
      %2209 = vmatpush1.bf16.msra.mxu0 %v1956
      %2210 = vmatprep.subr.bf16.mxu0 0
      %2211 = vmatpush1.bf16.msra.mxu0 %v1957
      %2212 = vmatprep.subr.bf16.mxu0 0
      %2213 = vmatpush1.bf16.msra.mxu0 %v1958
      %2214 = vmatprep.subr.bf16.mxu0 0
      %2215 = vmatpush1.bf16.msra.mxu0 %v1959
      %2216 = vmatprep.subr.bf16.mxu0 0
      %2217 = vmatpush1.bf16.msra.mxu0 %v1960
      %2218 = vmatprep.subr.bf16.mxu0 0
      %2219 = vmatpush1.bf16.msra.mxu0 %v1961
      %2220 = vmatprep.subr.bf16.mxu0 0
      %2221 = vmatpush1.bf16.msra.mxu0 %v1962
      %2222 = vmatprep.subr.bf16.mxu0 0
      %2223 = vmatpush1.bf16.msra.mxu0 %v1963
      %2224 = vmatprep.subr.bf16.mxu0 0
      %2225 = vmatpush1.bf16.msra.mxu0 %v1964
      %2226 = vmatprep.subr.bf16.mxu0 0
      %2227 = vmatpush1.bf16.msra.mxu0 %v1965
      %2228 = vmatprep.subr.bf16.mxu0 0
      %2229 = vmatpush1.bf16.msra.mxu0 %v1966
      %2230 = vmatprep.subr.bf16.mxu0 0
      %2231 = vmatpush1.bf16.msra.mxu0 %v1967
      %2232 = vmatprep.subr.bf16.mxu0 0
      %2233 = vmatpush1.bf16.msra.mxu0 %v1968
      %2234 = vmatprep.subr.bf16.mxu0 0
      %2235 = vmatpush1.bf16.msra.mxu0 %v1969
      %2236 = vmatprep.mubr.bf16.mxu0 %v410
      %2237 = vmatmul.mubr.bf16.gmra.mrb[0].mxu0 %v409
      %v2238 = vpop.f32.mrb[0].mxu0
      %v2239 = vadd.f32 %v2198, %v2238
      %v2240 = vpop.f32.mrb[0].mxu0
      %v2241 = vpop.f32.mrb[0].mxu0
      %v2242 = vadd.f32 %v2201, %v2241
      %v2243 = vpop.f32.mrb[0].mxu0
      %2244 = vdwg.mxu0
      %2245 = vmatprep.subr.bf16.mxu0 0
      %2246 = vmatpush1.bf16.msra.mxu0 %v1970
      %2247 = vmatprep.subr.bf16.mxu0 0
      %2248 = vmatpush1.bf16.msra.mxu0 %v1971
      %2249 = vmatprep.subr.bf16.mxu0 0
      %2250 = vmatpush1.bf16.msra.mxu0 %v1972
      %2251 = vmatprep.subr.bf16.mxu0 0
      %2252 = vmatpush1.bf16.msra.mxu0 %v1973
      %2253 = vmatprep.subr.bf16.mxu0 0
      %2254 = vmatpush1.bf16.msra.mxu0 %v1974
      %2255 = vmatprep.subr.bf16.mxu0 0
      %2256 = vmatpush1.bf16.msra.mxu0 %v1975
      %2257 = vmatprep.subr.bf16.mxu0 0
      %2258 = vmatpush1.bf16.msra.mxu0 %v1976
      %2259 = vmatprep.subr.bf16.mxu0 0
      %2260 = vmatpush1.bf16.msra.mxu0 %v1977
      %2261 = vmatprep.subr.bf16.mxu0 0
      %2262 = vmatpush1.bf16.msra.mxu0 %v1978
      %2263 = vmatprep.subr.bf16.mxu0 0
      %2264 = vmatpush1.bf16.msra.mxu0 %v1979
      %2265 = vmatprep.subr.bf16.mxu0 0
      %2266 = vmatpush1.bf16.msra.mxu0 %v1980
      %2267 = vmatprep.subr.bf16.mxu0 0
      %2268 = vmatpush1.bf16.msra.mxu0 %v1981
      %2269 = vmatprep.subr.bf16.mxu0 0
      %2270 = vmatpush1.bf16.msra.mxu0 %v1982
      %2271 = vmatprep.subr.bf16.mxu0 0
      %2272 = vmatpush1.bf16.msra.mxu0 %v1983
      %2273 = vmatprep.subr.bf16.mxu0 0
      %2274 = vmatpush1.bf16.msra.mxu0 %v1984
      %2275 = vmatprep.subr.bf16.mxu0 0
      %2276 = vmatpush1.bf16.msra.mxu0 %v1985
      %2277 = vmatprep.mubr.bf16.mxu0 %v412
      %2278 = vmatmul.mubr.bf16.gmra.mrb[0].mxu0 %v411
      %v2279 = vpop.f32.mrb[0].mxu0
      %v2280 = vadd.f32 %v2239, %v2279
      %v2281 = vpop.f32.mrb[0].mxu0
      %v2282 = vpop.f32.mrb[0].mxu0
      %v2283 = vadd.f32 %v2242, %v2282
      %v2284 = vpop.f32.mrb[0].mxu0
      %2285 = vdwg.mxu0
      %2286 = vmatprep.subr.bf16.mxu0 0
      %2287 = vmatpush1.bf16.msra.mxu0 %v1986
      %2288 = vmatprep.subr.bf16.mxu0 0
      %2289 = vmatpush1.bf16.msra.mxu0 %v1987
      %2290 = vmatprep.subr.bf16.mxu0 0
      %2291 = vmatpush1.bf16.msra.mxu0 %v1988
      %2292 = vmatprep.subr.bf16.mxu0 0
      %2293 = vmatpush1.bf16.msra.mxu0 %v1989
      %2294 = vmatprep.subr.bf16.mxu0 0
      %2295 = vmatpush1.bf16.msra.mxu0 %v1990
      %2296 = vmatprep.subr.bf16.mxu0 0
      %2297 = vmatpush1.bf16.msra.mxu0 %v1991
      %2298 = vmatprep.subr.bf16.mxu0 0
      %2299 = vmatpush1.bf16.msra.mxu0 %v1992
      %2300 = vmatprep.subr.bf16.mxu0 0
      %2301 = vmatpush1.bf16.msra.mxu0 %v1993
      %2302 = vmatprep.subr.bf16.mxu0 0
      %2303 = vmatpush1.bf16.msra.mxu0 %v1994
      %2304 = vmatprep.subr.bf16.mxu0 0
      %2305 = vmatpush1.bf16.msra.mxu0 %v1995
      %2306 = vmatprep.subr.bf16.mxu0 0
      %2307 = vmatpush1.bf16.msra.mxu0 %v1996
      %2308 = vmatprep.subr.bf16.mxu0 0
      %2309 = vmatpush1.bf16.msra.mxu0 %v1997
      %2310 = vmatprep.subr.bf16.mxu0 0
      %2311 = vmatpush1.bf16.msra.mxu0 %v1998
      %2312 = vmatprep.subr.bf16.mxu0 0
      %2313 = vmatpush1.bf16.msra.mxu0 %v1999
      %2314 = vmatprep.subr.bf16.mxu0 0
      %2315 = vmatpush1.bf16.msra.mxu0 %v2000
      %2316 = vmatprep.subr.bf16.mxu0 0
      %2317 = vmatpush1.bf16.msra.mxu0 %v2001
      %2318 = vmatprep.mubr.bf16.mxu0 %v414
      %2319 = vmatmul.mubr.bf16.gmra.mrb[0].mxu0 %v413
      %v2320 = vpop.f32.mrb[0].mxu0
      %v2321 = vadd.f32 %v2280, %v2320
      %v2322 = vpop.f32.mrb[0].mxu0
      %v2323 = vpop.f32.mrb[0].mxu0
      %v2324 = vadd.f32 %v2283, %v2323
      %v2325 = vpop.f32.mrb[0].mxu0
      %2326 = vdwg.mxu0
      %2327 = vmatprep.subr.bf16.mxu0 0
      %2328 = vmatpush1.bf16.msra.mxu0 %v2002
      %2329 = vmatprep.subr.bf16.mxu0 0
      %2330 = vmatpush1.bf16.msra.mxu0 %v2003
      %2331 = vmatprep.subr.bf16.mxu0 0
      %2332 = vmatpush1.bf16.msra.mxu0 %v2004
      %2333 = vmatprep.subr.bf16.mxu0 0
      %2334 = vmatpush1.bf16.msra.mxu0 %v2005
      %2335 = vmatprep.subr.bf16.mxu0 0
      %2336 = vmatpush1.bf16.msra.mxu0 %v2006
      %2337 = vmatprep.subr.bf16.mxu0 0
      %2338 = vmatpush1.bf16.msra.mxu0 %v2007
      %2339 = vmatprep.subr.bf16.mxu0 0
      %2340 = vmatpush1.bf16.msra.mxu0 %v2008
      %2341 = vmatprep.subr.bf16.mxu0 0
      %2342 = vmatpush1.bf16.msra.mxu0 %v2009
      %2343 = vmatprep.subr.bf16.mxu0 0
      %2344 = vmatpush1.bf16.msra.mxu0 %v2010
      %2345 = vmatprep.subr.bf16.mxu0 0
      %2346 = vmatpush1.bf16.msra.mxu0 %v2011
      %2347 = vmatprep.subr.bf16.mxu0 0
      %2348 = vmatpush1.bf16.msra.mxu0 %v2012
      %2349 = vmatprep.subr.bf16.mxu0 0
      %2350 = vmatpush1.bf16.msra.mxu0 %v2013
      %2351 = vmatprep.subr.bf16.mxu0 0
      %2352 = vmatpush1.bf16.msra.mxu0 %v2014
      %2353 = vmatprep.subr.bf16.mxu0 0
      %2354 = vmatpush1.bf16.msra.mxu0 %v2015
      %2355 = vmatprep.subr.bf16.mxu0 0
      %2356 = vmatpush1.bf16.msra.mxu0 %v2016
      %2357 = vmatprep.subr.bf16.mxu0 0
      %2358 = vmatpush1.bf16.msra.mxu0 %v2017
      %2359 = vmatprep.mubr.bf16.mxu0 %v416
      %2360 = vmatmul.mubr.bf16.gmra.mrb[0].mxu0 %v415
      %v2361 = vpop.f32.mrb[0].mxu0
      %v2362 = vadd.f32 %v2321, %v2361
      %v2363 = vpop.f32.mrb[0].mxu0
      %v2364 = vpop.f32.mrb[0].mxu0
      %v2365 = vadd.f32 %v2324, %v2364
      %v2366 = vpop.f32.mrb[0].mxu0
      %2367 = vdwg.mxu0
      %2368 = vmatprep.subr.bf16.mxu0 0
      %2369 = vmatpush1.bf16.msra.mxu0 %v2018
      %2370 = vmatprep.subr.bf16.mxu0 0
      %2371 = vmatpush1.bf16.msra.mxu0 %v2019
      %2372 = vmatprep.subr.bf16.mxu0 0
      %2373 = vmatpush1.bf16.msra.mxu0 %v2020
      %2374 = vmatprep.subr.bf16.mxu0 0
      %2375 = vmatpush1.bf16.msra.mxu0 %v2021
      %2376 = vmatprep.subr.bf16.mxu0 0
      %2377 = vmatpush1.bf16.msra.mxu0 0
      %2378 = vmatprep.subr.bf16.mxu0 0
      %2379 = vmatpush1.bf16.msra.mxu0 0
      %2380 = vmatprep.subr.bf16.mxu0 0
      %2381 = vmatpush1.bf16.msra.mxu0 0
      %2382 = vmatprep.subr.bf16.mxu0 0
      %2383 = vmatpush1.bf16.msra.mxu0 0
      %2384 = vmatprep.subr.bf16.mxu0 0
      %2385 = vmatpush1.bf16.msra.mxu0 0
      %2386 = vmatprep.subr.bf16.mxu0 0
      %2387 = vmatpush1.bf16.msra.mxu0 0
      %2388 = vmatprep.subr.bf16.mxu0 0
      %2389 = vmatpush1.bf16.msra.mxu0 0
      %2390 = vmatprep.subr.bf16.mxu0 0
      %2391 = vmatpush1.bf16.msra.mxu0 0
      %2392 = vmatprep.subr.bf16.mxu0 0
      %2393 = vmatpush1.bf16.msra.mxu0 0
      %2394 = vmatprep.subr.bf16.mxu0 0
      %2395 = vmatpush1.bf16.msra.mxu0 0
      %2396 = vmatprep.subr.bf16.mxu0 0
      %2397 = vmatpush1.bf16.msra.mxu0 0
      %2398 = vmatprep.subr.bf16.mxu0 0
      %2399 = vmatpush1.bf16.msra.mxu0 0
      %2400 = vmatprep.mubr.bf16.mxu0 0
      %2401 = vmatmul.mubr.bf16.gmra.mrb[0].mxu0 %v1032
      %v2402 = vpop.f32.mrb[0].mxu0
      %v2403 = vadd.f32 %v2362, %v2402
      %v2404 = vpop.f32.mrb[0].mxu0
      %v2405 = vpop.f32.mrb[0].mxu0
      %v2406 = vadd.f32 %v2365, %v2405
      %v2407 = vpop.f32.mrb[0].mxu0
      %2408 = vdwg.mxu0
      %s2409 = scalar_lea.vmem %s1, 1600
      %v2410 = vld [vmem:[%s2409] sm:$0xf]
      %v2411 = vld [vmem:[%s2409 + $0x4] sm:$0xf]
      %v2412 = vld [vmem:[%s2409 + $0x8] sm:$0xf]
      %v2413 = vld [vmem:[%s2409 + $0xc] sm:$0xf]
      %v2414 = vld [vmem:[%s2409 + $0x10] sm:$0xf]
      %v2415 = vld [vmem:[%s2409 + $0x14] sm:$0xf]
      %v2416 = vld [vmem:[%s2409 + $0x18] sm:$0xf]
      %v2417 = vld [vmem:[%s2409 + $0x1c] sm:$0xf]
      %v2418 = vld [vmem:[%s2409 + $0x20] sm:$0xf]
      %v2419 = vld [vmem:[%s2409 + $0x24] sm:$0xf]
      %v2420 = vld [vmem:[%s2409 + $0x28] sm:$0xf]
      %v2421 = vld [vmem:[%s2409 + $0x2c] sm:$0xf]
      %v2422 = vld [vmem:[%s2409 + $0x30] sm:$0xf]
      %v2423 = vld [vmem:[%s2409 + $0x34] sm:$0xf]
      %v2424 = vld [vmem:[%s2409 + $0x38] sm:$0xf]
      %v2425 = vld [vmem:[%s2409 + $0x3c] sm:$0xf]
      %v2426 = vld [vmem:[%s2409 + $0x40] sm:$0xf]
      %v2427 = vld [vmem:[%s2409 + $0x44] sm:$0xf]
      %v2428 = vld [vmem:[%s2409 + $0x48] sm:$0xf]
      %v2429 = vld [vmem:[%s2409 + $0x4c] sm:$0xf]
      %v2430 = vld [vmem:[%s2409 + $0x50] sm:$0xf]
      %v2431 = vld [vmem:[%s2409 + $0x54] sm:$0xf]
      %v2432 = vld [vmem:[%s2409 + $0x58] sm:$0xf]
      %v2433 = vld [vmem:[%s2409 + $0x5c] sm:$0xf]
      %v2434 = vld [vmem:[%s2409 + $0x60] sm:$0xf]
      %v2435 = vld [vmem:[%s2409 + $0x64] sm:$0xf]
      %v2436 = vld [vmem:[%s2409 + $0x68] sm:$0xf]
      %v2437 = vld [vmem:[%s2409 + $0x6c] sm:$0xf]
      %v2438 = vld [vmem:[%s2409 + $0x70] sm:$0xf]
      %v2439 = vld [vmem:[%s2409 + $0x74] sm:$0xf]
      %v2440 = vld [vmem:[%s2409 + $0x78] sm:$0xf]
      %v2441 = vld [vmem:[%s2409 + $0x7c] sm:$0xf]
      %v2442 = vld [vmem:[%s2409 + $0x80] sm:$0xf]
      %v2443 = vld [vmem:[%s2409 + $0x84] sm:$0xf]
      %v2444 = vld [vmem:[%s2409 + $0x88] sm:$0xf]
      %v2445 = vld [vmem:[%s2409 + $0x8c] sm:$0xf]
      %v2446 = vld [vmem:[%s2409 + $0x90] sm:$0xf]
      %v2447 = vld [vmem:[%s2409 + $0x94] sm:$0xf]
      %v2448 = vld [vmem:[%s2409 + $0x98] sm:$0xf]
      %v2449 = vld [vmem:[%s2409 + $0x9c] sm:$0xf]
      %v2450 = vld [vmem:[%s2409 + $0xa0] sm:$0xf]
      %v2451 = vld [vmem:[%s2409 + $0xa4] sm:$0xf]
      %v2452 = vld [vmem:[%s2409 + $0xa8] sm:$0xf]
      %v2453 = vld [vmem:[%s2409 + $0xac] sm:$0xf]
      %v2454 = vld [vmem:[%s2409 + $0xb0] sm:$0xf]
      %v2455 = vld [vmem:[%s2409 + $0xb4] sm:$0xf]
      %v2456 = vld [vmem:[%s2409 + $0xb8] sm:$0xf]
      %v2457 = vld [vmem:[%s2409 + $0xbc] sm:$0xf]
      %v2458 = vld [vmem:[%s2409 + $0xc0] sm:$0xf]
      %v2459 = vld [vmem:[%s2409 + $0xc4] sm:$0xf]
      %v2460 = vld [vmem:[%s2409 + $0xc8] sm:$0xf]
      %v2461 = vld [vmem:[%s2409 + $0xcc] sm:$0xf]
      %v2462 = vld [vmem:[%s2409 + $0xd0] sm:$0xf]
      %v2463 = vld [vmem:[%s2409 + $0xd4] sm:$0xf]
      %v2464 = vld [vmem:[%s2409 + $0xd8] sm:$0xf]
      %v2465 = vld [vmem:[%s2409 + $0xdc] sm:$0xf]
      %v2466 = vld [vmem:[%s2409 + $0xe0] sm:$0xf]
      %v2467 = vld [vmem:[%s2409 + $0xe4] sm:$0xf]
      %v2468 = vld [vmem:[%s2409 + $0xe8] sm:$0xf]
      %v2469 = vld [vmem:[%s2409 + $0xec] sm:$0xf]
      %v2470 = vld [vmem:[%s2409 + $0xf0] sm:$0xf]
      %v2471 = vld [vmem:[%s2409 + $0xf4] sm:$0xf]
      %v2472 = vld [vmem:[%s2409 + $0xf8] sm:$0xf]
      %v2473 = vld [vmem:[%s2409 + $0xfc] sm:$0xf]
      %v2474 = vld [vmem:[%s2409 + $0x100] sm:$0xf]
      %v2475 = vld [vmem:[%s2409 + $0x104] sm:$0xf]
      %v2476 = vld [vmem:[%s2409 + $0x108] sm:$0xf]
      %v2477 = vld [vmem:[%s2409 + $0x10c] sm:$0xf]
      %v2478 = vld [vmem:[%s2409 + $0x110] sm:$0xf]
      %v2479 = vld [vmem:[%s2409 + $0x114] sm:$0xf]
      %v2480 = vld [vmem:[%s2409 + $0x118] sm:$0xf]
      %v2481 = vld [vmem:[%s2409 + $0x11c] sm:$0xf]
      %v2482 = vld [vmem:[%s2409 + $0x120] sm:$0xf]
      %v2483 = vld [vmem:[%s2409 + $0x124] sm:$0xf]
      %v2484 = vld [vmem:[%s2409 + $0x128] sm:$0xf]
      %v2485 = vld [vmem:[%s2409 + $0x12c] sm:$0xf]
      %v2486 = vld [vmem:[%s2409 + $0x130] sm:$0xf]
      %v2487 = vld [vmem:[%s2409 + $0x134] sm:$0xf]
      %v2488 = vld [vmem:[%s2409 + $0x138] sm:$0xf]
      %v2489 = vld [vmem:[%s2409 + $0x13c] sm:$0xf]
      %v2490 = vld [vmem:[%s2409 + $0x140] sm:$0xf]
      %v2491 = vld [vmem:[%s2409 + $0x144] sm:$0xf]
      %v2492 = vld [vmem:[%s2409 + $0x148] sm:$0xf]
      %v2493 = vld [vmem:[%s2409 + $0x14c] sm:$0xf]
      %v2494 = vld [vmem:[%s2409 + $0x150] sm:$0xf]
      %v2495 = vld [vmem:[%s2409 + $0x154] sm:$0xf]
      %v2496 = vld [vmem:[%s2409 + $0x158] sm:$0xf]
      %v2497 = vld [vmem:[%s2409 + $0x15c] sm:$0xf]
      %v2498 = vld [vmem:[%s2409 + $0x160] sm:$0xf]
      %v2499 = vld [vmem:[%s2409 + $0x164] sm:$0xf]
      %v2500 = vld [vmem:[%s2409 + $0x168] sm:$0xf]
      %v2501 = vld [vmem:[%s2409 + $0x16c] sm:$0xf]
      %v2502 = vld [vmem:[%s2409 + $0x170] sm:$0xf]
      %v2503 = vld [vmem:[%s2409 + $0x174] sm:$0xf]
      %v2504 = vld [vmem:[%s2409 + $0x178] sm:$0xf]
      %v2505 = vld [vmem:[%s2409 + $0x17c] sm:$0xf]
      %v2506 = vld [vmem:[%s2409 + $0x180] sm:$0xf]
      %v2507 = vld [vmem:[%s2409 + $0x184] sm:$0xf]
      %v2508 = vld [vmem:[%s2409 + $0x188] sm:$0xf]
      %v2509 = vld [vmem:[%s2409 + $0x18c] sm:$0xf]
      %v2510 = vld [vmem:[%s2409 + $0x190] sm:$0xf]
      %v2511 = vld [vmem:[%s2409 + $0x194] sm:$0xf]
      %v2512 = vld [vmem:[%s2409 + $0x198] sm:$0xf]
      %v2513 = vld [vmem:[%s2409 + $0x19c] sm:$0xf]
      %v2514 = vld [vmem:[%s2409 + $0x1a0] sm:$0xf]
      %v2515 = vld [vmem:[%s2409 + $0x1a4] sm:$0xf]
      %v2516 = vld [vmem:[%s2409 + $0x1a8] sm:$0xf]
      %v2517 = vld [vmem:[%s2409 + $0x1ac] sm:$0xf]
      %v2518 = vld [vmem:[%s2409 + $0x1b0] sm:$0xf]
      %v2519 = vld [vmem:[%s2409 + $0x1b4] sm:$0xf]
      %v2520 = vld [vmem:[%s2409 + $0x1b8] sm:$0xf]
      %v2521 = vld [vmem:[%s2409 + $0x1bc] sm:$0xf]
      %v2522 = vld [vmem:[%s2409 + $0x1c0] sm:$0xf]
      %v2523 = vld [vmem:[%s2409 + $0x1c4] sm:$0xf]
      %v2524 = vld [vmem:[%s2409 + $0x1c8] sm:$0xf]
      %v2525 = vld [vmem:[%s2409 + $0x1cc] sm:$0xf]
      %v2526 = vld [vmem:[%s2409 + $0x1d0] sm:$0xf]
      %v2527 = vld [vmem:[%s2409 + $0x1d4] sm:$0xf]
      %v2528 = vld [vmem:[%s2409 + $0x1d8] sm:$0xf]
      %v2529 = vld [vmem:[%s2409 + $0x1dc] sm:$0xf]
      %v2530 = vld [vmem:[%s2409 + $0x1e0] sm:$0xf]
      %v2531 = vld [vmem:[%s2409 + $0x1e4] sm:$0xf]
      %v2532 = vld [vmem:[%s2409 + $0x1e8] sm:$0xf]
      %v2533 = vld [vmem:[%s2409 + $0x1ec] sm:$0xf]
      %v2534 = vld [vmem:[%s2409 + $0x1f0] sm:$0xf]
      %v2535 = vld [vmem:[%s2409 + $0x1f4] sm:$0xf]
      %v2536 = vld [vmem:[%s2409 + $0x1f8] sm:$0xf]
      %v2537 = vld [vmem:[%s2409 + $0x1fc] sm:$0xf]
      %v2538 = vld [vmem:[%s2409 + $0x200] sm:$0xf]
      %v2539 = vld [vmem:[%s2409 + $0x204] sm:$0xf]
      %v2540 = vld [vmem:[%s2409 + $0x208] sm:$0xf]
      %v2541 = vld [vmem:[%s2409 + $0x20c] sm:$0xf]
      %v2542 = vld [vmem:[%s2409 + $0x210] sm:$0xf]
      %v2543 = vld [vmem:[%s2409 + $0x214] sm:$0xf]
      %v2544 = vld [vmem:[%s2409 + $0x218] sm:$0xf]
      %v2545 = vld [vmem:[%s2409 + $0x21c] sm:$0xf]
      %v2546 = vld [vmem:[%s2409 + $0x220] sm:$0xf]
      %v2547 = vld [vmem:[%s2409 + $0x224] sm:$0xf]
      %v2548 = vld [vmem:[%s2409 + $0x228] sm:$0xf]
      %v2549 = vld [vmem:[%s2409 + $0x22c] sm:$0xf]
      %v2550 = vld [vmem:[%s2409 + $0x230] sm:$0xf]
      %v2551 = vld [vmem:[%s2409 + $0x234] sm:$0xf]
      %v2552 = vld [vmem:[%s2409 + $0x238] sm:$0xf]
      %v2553 = vld [vmem:[%s2409 + $0x23c] sm:$0xf]
      %v2554 = vld [vmem:[%s2409 + $0x240] sm:$0xf]
      %v2555 = vld [vmem:[%s2409 + $0x244] sm:$0xf]
      %v2556 = vld [vmem:[%s2409 + $0x248] sm:$0xf]
      %v2557 = vld [vmem:[%s2409 + $0x24c] sm:$0xf]
      %v2558 = vld [vmem:[%s2409 + $0x250] sm:$0xf]
      %v2559 = vld [vmem:[%s2409 + $0x254] sm:$0xf]
      %v2560 = vld [vmem:[%s2409 + $0x258] sm:$0xf]
      %v2561 = vld [vmem:[%s2409 + $0x25c] sm:$0xf]
      %v2562 = vld [vmem:[%s2409 + $0x260] sm:$0xf]
      %v2563 = vld [vmem:[%s2409 + $0x264] sm:$0xf]
      %v2564 = vld [vmem:[%s2409 + $0x268] sm:$0xf]
      %v2565 = vld [vmem:[%s2409 + $0x26c] sm:$0xf]
      %v2566 = vld [vmem:[%s2409 + $0x270] sm:$0xf]
      %v2567 = vld [vmem:[%s2409 + $0x274] sm:$0xf]
      %v2568 = vld [vmem:[%s2409 + $0x278] sm:$0xf]
      %v2569 = vld [vmem:[%s2409 + $0x27c] sm:$0xf]
      %v2570 = vld [vmem:[%s2409 + $0x280] sm:$0xf]
      %v2571 = vld [vmem:[%s2409 + $0x284] sm:$0xf]
      %v2572 = vld [vmem:[%s2409 + $0x288] sm:$0xf]
      %v2573 = vld [vmem:[%s2409 + $0x28c] sm:$0xf]
      %v2574 = vld [vmem:[%s2409 + $0x290] sm:$0xf]
      %v2575 = vld [vmem:[%s2409 + $0x294] sm:$0xf]
      %v2576 = vld [vmem:[%s2409 + $0x298] sm:$0xf]
      %v2577 = vld [vmem:[%s2409 + $0x29c] sm:$0xf]
      %v2578 = vld [vmem:[%s2409 + $0x2a0] sm:$0xf]
      %v2579 = vld [vmem:[%s2409 + $0x2a4] sm:$0xf]
      %v2580 = vld [vmem:[%s2409 + $0x2a8] sm:$0xf]
      %v2581 = vld [vmem:[%s2409 + $0x2ac] sm:$0xf]
      %v2582 = vld [vmem:[%s2409 + $0x2b0] sm:$0xf]
      %v2583 = vld [vmem:[%s2409 + $0x2b4] sm:$0xf]
      %v2584 = vld [vmem:[%s2409 + $0x2b8] sm:$0xf]
      %v2585 = vld [vmem:[%s2409 + $0x2bc] sm:$0xf]
      %v2586 = vld [vmem:[%s2409 + $0x2c0] sm:$0xf]
      %v2587 = vld [vmem:[%s2409 + $0x2c4] sm:$0xf]
      %v2588 = vld [vmem:[%s2409 + $0x2c8] sm:$0xf]
      %v2589 = vld [vmem:[%s2409 + $0x2cc] sm:$0xf]
      %v2590 = vld [vmem:[%s2409 + $0x2d0] sm:$0xf]
      %v2591 = vld [vmem:[%s2409 + $0x2d4] sm:$0xf]
      %v2592 = vld [vmem:[%s2409 + $0x2d8] sm:$0xf]
      %v2593 = vld [vmem:[%s2409 + $0x2dc] sm:$0xf]
      %v2594 = vld [vmem:[%s2409 + $0x2e0] sm:$0xf]
      %v2595 = vld [vmem:[%s2409 + $0x2e4] sm:$0xf]
      %v2596 = vld [vmem:[%s2409 + $0x2e8] sm:$0xf]
      %v2597 = vld [vmem:[%s2409 + $0x2ec] sm:$0xf]
      %v2598 = vld [vmem:[%s2409 + $0x2f0] sm:$0xf]
      %v2599 = vld [vmem:[%s2409 + $0x2f4] sm:$0xf]
      %v2600 = vld [vmem:[%s2409 + $0x2f8] sm:$0xf]
      %v2601 = vld [vmem:[%s2409 + $0x2fc] sm:$0xf]
      %v2602 = vld [vmem:[%s2409 + $0x300] sm:$0xf]
      %v2603 = vld [vmem:[%s2409 + $0x304] sm:$0xf]
      %v2604 = vld [vmem:[%s2409 + $0x308] sm:$0xf]
      %v2605 = vld [vmem:[%s2409 + $0x30c] sm:$0xf]
      %v2606 = vld [vmem:[%s2409 + $0x310] sm:$0xf]
      %v2607 = vld [vmem:[%s2409 + $0x314] sm:$0xf]
      %v2608 = vld [vmem:[%s2409 + $0x318] sm:$0xf]
      %v2609 = vld [vmem:[%s2409 + $0x31c] sm:$0xf]
      %v2810 = vunpack.c.l.b16 %v2410
      %v2811 = vunpack.c.l.b16 %v2411
      %v2812 = vunpack.c.l.b16 %v2412
      %v2813 = vunpack.c.l.b16 %v2413
      %v2814 = vunpack.c.l.b16 %v2414
      %v2815 = vunpack.c.l.b16 %v2415
      %v2816 = vunpack.c.l.b16 %v2416
      %v2817 = vunpack.c.l.b16 %v2417
      %v2818 = vunpack.c.l.b16 %v2418
      %v2819 = vunpack.c.l.b16 %v2419
      %v2820 = vunpack.c.l.b16 %v2420
      %v2821 = vunpack.c.l.b16 %v2421
      %v2822 = vunpack.c.l.b16 %v2422
      %v2823 = vunpack.c.l.b16 %v2423
      %v2824 = vunpack.c.l.b16 %v2424
      %v2825 = vunpack.c.l.b16 %v2425
      %v2826 = vunpack.c.l.b16 %v2426
      %v2827 = vunpack.c.l.b16 %v2427
      %v2828 = vunpack.c.l.b16 %v2428
      %v2829 = vunpack.c.l.b16 %v2429
      %v2830 = vunpack.c.l.b16 %v2430
      %v2831 = vunpack.c.l.b16 %v2431
      %v2832 = vunpack.c.l.b16 %v2432
      %v2833 = vunpack.c.l.b16 %v2433
      %v2834 = vunpack.c.l.b16 %v2434
      %v2835 = vunpack.c.l.b16 %v2435
      %v2836 = vunpack.c.l.b16 %v2436
      %v2837 = vunpack.c.l.b16 %v2437
      %v2838 = vunpack.c.l.b16 %v2438
      %v2839 = vunpack.c.l.b16 %v2439
      %v2840 = vunpack.c.l.b16 %v2440
      %v2841 = vunpack.c.l.b16 %v2441
      %v2842 = vunpack.c.l.b16 %v2442
      %v2843 = vunpack.c.l.b16 %v2443
      %v2844 = vunpack.c.l.b16 %v2444
      %v2845 = vunpack.c.l.b16 %v2445
      %v2846 = vunpack.c.l.b16 %v2446
      %v2847 = vunpack.c.l.b16 %v2447
      %v2848 = vunpack.c.l.b16 %v2448
      %v2849 = vunpack.c.l.b16 %v2449
      %v2850 = vunpack.c.l.b16 %v2450
      %v2851 = vunpack.c.l.b16 %v2451
      %v2852 = vunpack.c.l.b16 %v2452
      %v2853 = vunpack.c.l.b16 %v2453
      %v2854 = vunpack.c.l.b16 %v2454
      %v2855 = vunpack.c.l.b16 %v2455
      %v2856 = vunpack.c.l.b16 %v2456
      %v2857 = vunpack.c.l.b16 %v2457
      %v2858 = vunpack.c.l.b16 %v2458
      %v2859 = vunpack.c.l.b16 %v2459
      %v2860 = vunpack.c.l.b16 %v2460
      %v2861 = vunpack.c.l.b16 %v2461
      %v2862 = vunpack.c.l.b16 %v2462
      %v2863 = vunpack.c.l.b16 %v2463
      %v2864 = vunpack.c.l.b16 %v2464
      %v2865 = vunpack.c.l.b16 %v2465
      %v2866 = vunpack.c.l.b16 %v2466
      %v2867 = vunpack.c.l.b16 %v2467
      %v2868 = vunpack.c.l.b16 %v2468
      %v2869 = vunpack.c.l.b16 %v2469
      %v2870 = vunpack.c.l.b16 %v2470
      %v2871 = vunpack.c.l.b16 %v2471
      %v2872 = vunpack.c.l.b16 %v2472
      %v2873 = vunpack.c.l.b16 %v2473
      %v2874 = vunpack.c.l.b16 %v2474
      %v2875 = vunpack.c.l.b16 %v2475
      %v2876 = vunpack.c.l.b16 %v2476
      %v2877 = vunpack.c.l.b16 %v2477
      %v2878 = vunpack.c.l.b16 %v2478
      %v2879 = vunpack.c.l.b16 %v2479
      %v2880 = vunpack.c.l.b16 %v2480
      %v2881 = vunpack.c.l.b16 %v2481
      %v2882 = vunpack.c.l.b16 %v2482
      %v2883 = vunpack.c.l.b16 %v2483
      %v2884 = vunpack.c.l.b16 %v2484
      %v2885 = vunpack.c.l.b16 %v2485
      %v2886 = vunpack.c.l.b16 %v2486
      %v2887 = vunpack.c.l.b16 %v2487
      %v2888 = vunpack.c.l.b16 %v2488
      %v2889 = vunpack.c.l.b16 %v2489
      %v2890 = vunpack.c.l.b16 %v2490
      %v2891 = vunpack.c.l.b16 %v2491
      %v2892 = vunpack.c.l.b16 %v2492
      %v2893 = vunpack.c.l.b16 %v2493
      %v2894 = vunpack.c.l.b16 %v2494
      %v2895 = vunpack.c.l.b16 %v2495
      %v2896 = vunpack.c.l.b16 %v2496
      %v2897 = vunpack.c.l.b16 %v2497
      %v2898 = vunpack.c.l.b16 %v2498
      %v2899 = vunpack.c.l.b16 %v2499
      %v2900 = vunpack.c.l.b16 %v2500
      %v2901 = vunpack.c.l.b16 %v2501
      %v2902 = vunpack.c.l.b16 %v2502
      %v2903 = vunpack.c.l.b16 %v2503
      %v2904 = vunpack.c.l.b16 %v2504
      %v2905 = vunpack.c.l.b16 %v2505
      %v2906 = vunpack.c.l.b16 %v2506
      %v2907 = vunpack.c.l.b16 %v2507
      %v2908 = vunpack.c.l.b16 %v2508
      %v2909 = vunpack.c.l.b16 %v2509
      %v2910 = vunpack.c.l.b16 %v2510
      %v2911 = vunpack.c.l.b16 %v2511
      %v2912 = vunpack.c.l.b16 %v2512
      %v2913 = vunpack.c.l.b16 %v2513
      %v2914 = vunpack.c.l.b16 %v2514
      %v2915 = vunpack.c.l.b16 %v2515
      %v2916 = vunpack.c.l.b16 %v2516
      %v2917 = vunpack.c.l.b16 %v2517
      %v2918 = vunpack.c.l.b16 %v2518
      %v2919 = vunpack.c.l.b16 %v2519
      %v2920 = vunpack.c.l.b16 %v2520
      %v2921 = vunpack.c.l.b16 %v2521
      %v2922 = vunpack.c.l.b16 %v2522
      %v2923 = vunpack.c.l.b16 %v2523
      %v2924 = vunpack.c.l.b16 %v2524
      %v2925 = vunpack.c.l.b16 %v2525
      %v2926 = vunpack.c.l.b16 %v2526
      %v2927 = vunpack.c.l.b16 %v2527
      %v2928 = vunpack.c.l.b16 %v2528
      %v2929 = vunpack.c.l.b16 %v2529
      %v2930 = vunpack.c.l.b16 %v2530
      %v2931 = vunpack.c.l.b16 %v2531
      %v2932 = vunpack.c.l.b16 %v2532
      %v2933 = vunpack.c.l.b16 %v2533
      %v2934 = vunpack.c.l.b16 %v2534
      %v2935 = vunpack.c.l.b16 %v2535
      %v2936 = vunpack.c.l.b16 %v2536
      %v2937 = vunpack.c.l.b16 %v2537
      %v2938 = vunpack.c.l.b16 %v2538
      %v2939 = vunpack.c.l.b16 %v2539
      %v2940 = vunpack.c.l.b16 %v2540
      %v2941 = vunpack.c.l.b16 %v2541
      %v2942 = vunpack.c.l.b16 %v2542
      %v2943 = vunpack.c.l.b16 %v2543
      %v2944 = vunpack.c.l.b16 %v2544
      %v2945 = vunpack.c.l.b16 %v2545
      %v2946 = vunpack.c.l.b16 %v2546
      %v2947 = vunpack.c.l.b16 %v2547
      %v2948 = vunpack.c.l.b16 %v2548
      %v2949 = vunpack.c.l.b16 %v2549
      %v2950 = vunpack.c.l.b16 %v2550
      %v2951 = vunpack.c.l.b16 %v2551
      %v2952 = vunpack.c.l.b16 %v2552
      %v2953 = vunpack.c.l.b16 %v2553
      %v2954 = vunpack.c.l.b16 %v2554
      %v2955 = vunpack.c.l.b16 %v2555
      %v2956 = vunpack.c.l.b16 %v2556
      %v2957 = vunpack.c.l.b16 %v2557
      %v2958 = vunpack.c.l.b16 %v2558
      %v2959 = vunpack.c.l.b16 %v2559
      %v2960 = vunpack.c.l.b16 %v2560
      %v2961 = vunpack.c.l.b16 %v2561
      %v2962 = vunpack.c.l.b16 %v2562
      %v2963 = vunpack.c.l.b16 %v2563
      %v2964 = vunpack.c.l.b16 %v2564
      %v2965 = vunpack.c.l.b16 %v2565
      %v2966 = vunpack.c.l.b16 %v2566
      %v2967 = vunpack.c.l.b16 %v2567
      %v2968 = vunpack.c.l.b16 %v2568
      %v2969 = vunpack.c.l.b16 %v2569
      %v2970 = vunpack.c.l.b16 %v2570
      %v2971 = vunpack.c.l.b16 %v2571
      %v2972 = vunpack.c.l.b16 %v2572
      %v2973 = vunpack.c.l.b16 %v2573
      %v2974 = vunpack.c.l.b16 %v2574
      %v2975 = vunpack.c.l.b16 %v2575
      %v2976 = vunpack.c.l.b16 %v2576
      %v2977 = vunpack.c.l.b16 %v2577
      %v2978 = vunpack.c.l.b16 %v2578
      %v2979 = vunpack.c.l.b16 %v2579
      %v2980 = vunpack.c.l.b16 %v2580
      %v2981 = vunpack.c.l.b16 %v2581
      %v2982 = vunpack.c.l.b16 %v2582
      %v2983 = vunpack.c.l.b16 %v2583
      %v2984 = vunpack.c.l.b16 %v2584
      %v2985 = vunpack.c.l.b16 %v2585
      %v2986 = vunpack.c.l.b16 %v2586
      %v2987 = vunpack.c.l.b16 %v2587
      %v2988 = vunpack.c.l.b16 %v2588
      %v2989 = vunpack.c.l.b16 %v2589
      %v2990 = vunpack.c.l.b16 %v2590
      %v2991 = vunpack.c.l.b16 %v2591
      %v2992 = vunpack.c.l.b16 %v2592
      %v2993 = vunpack.c.l.b16 %v2593
      %v2994 = vunpack.c.l.b16 %v2594
      %v2995 = vunpack.c.l.b16 %v2595
      %v2996 = vunpack.c.l.b16 %v2596
      %v2997 = vunpack.c.l.b16 %v2597
      %v2998 = vunpack.c.l.b16 %v2598
      %v2999 = vunpack.c.l.b16 %v2599
      %v3000 = vunpack.c.l.b16 %v2600
      %v3001 = vunpack.c.l.b16 %v2601
      %v3002 = vunpack.c.l.b16 %v2602
      %v3003 = vunpack.c.l.b16 %v2603
      %v3004 = vunpack.c.l.b16 %v2604
      %v3005 = vunpack.c.l.b16 %v2605
      %v3006 = vunpack.c.l.b16 %v2606
      %v3007 = vunpack.c.l.b16 %v2607
      %v3008 = vunpack.c.l.b16 %v2608
      %v3009 = vunpack.c.l.b16 %v2609
      %v3010 = vpack.c.b16 %v2811, %v2810
      %v3011 = vpack.c.b16 %v2813, %v2812
      %v3012 = vpack.c.b16 %v2815, %v2814
      %v3013 = vpack.c.b16 %v2817, %v2816
      %v3014 = vpack.c.b16 %v2819, %v2818
      %v3015 = vpack.c.b16 %v2821, %v2820
      %v3016 = vpack.c.b16 %v2823, %v2822
      %v3017 = vpack.c.b16 %v2825, %v2824
      %v3018 = vpack.c.b16 %v2827, %v2826
      %v3019 = vpack.c.b16 %v2829, %v2828
      %v3020 = vpack.c.b16 %v2831, %v2830
      %v3021 = vpack.c.b16 %v2833, %v2832
      %v3022 = vpack.c.b16 %v2835, %v2834
      %v3023 = vpack.c.b16 %v2837, %v2836
      %v3024 = vpack.c.b16 %v2839, %v2838
      %v3025 = vpack.c.b16 %v2841, %v2840
      %v3026 = vpack.c.b16 %v2843, %v2842
      %v3027 = vpack.c.b16 %v2845, %v2844
      %v3028 = vpack.c.b16 %v2847, %v2846
      %v3029 = vpack.c.b16 %v2849, %v2848
      %v3030 = vpack.c.b16 %v2851, %v2850
      %v3031 = vpack.c.b16 %v2853, %v2852
      %v3032 = vpack.c.b16 %v2855, %v2854
      %v3033 = vpack.c.b16 %v2857, %v2856
      %v3034 = vpack.c.b16 %v2859, %v2858
      %v3035 = vpack.c.b16 %v2861, %v2860
      %v3036 = vpack.c.b16 %v2863, %v2862
      %v3037 = vpack.c.b16 %v2865, %v2864
      %v3038 = vpack.c.b16 %v2867, %v2866
      %v3039 = vpack.c.b16 %v2869, %v2868
      %v3040 = vpack.c.b16 %v2871, %v2870
      %v3041 = vpack.c.b16 %v2873, %v2872
      %v3042 = vpack.c.b16 %v2875, %v2874
      %v3043 = vpack.c.b16 %v2877, %v2876
      %v3044 = vpack.c.b16 %v2879, %v2878
      %v3045 = vpack.c.b16 %v2881, %v2880
      %v3046 = vpack.c.b16 %v2883, %v2882
      %v3047 = vpack.c.b16 %v2885, %v2884
      %v3048 = vpack.c.b16 %v2887, %v2886
      %v3049 = vpack.c.b16 %v2889, %v2888
      %v3050 = vpack.c.b16 %v2891, %v2890
      %v3051 = vpack.c.b16 %v2893, %v2892
      %v3052 = vpack.c.b16 %v2895, %v2894
      %v3053 = vpack.c.b16 %v2897, %v2896
      %v3054 = vpack.c.b16 %v2899, %v2898
      %v3055 = vpack.c.b16 %v2901, %v2900
      %v3056 = vpack.c.b16 %v2903, %v2902
      %v3057 = vpack.c.b16 %v2905, %v2904
      %v3058 = vpack.c.b16 %v2907, %v2906
      %v3059 = vpack.c.b16 %v2909, %v2908
      %v3060 = vpack.c.b16 %v2911, %v2910
      %v3061 = vpack.c.b16 %v2913, %v2912
      %v3062 = vpack.c.b16 %v2915, %v2914
      %v3063 = vpack.c.b16 %v2917, %v2916
      %v3064 = vpack.c.b16 %v2919, %v2918
      %v3065 = vpack.c.b16 %v2921, %v2920
      %v3066 = vpack.c.b16 %v2923, %v2922
      %v3067 = vpack.c.b16 %v2925, %v2924
      %v3068 = vpack.c.b16 %v2927, %v2926
      %v3069 = vpack.c.b16 %v2929, %v2928
      %v3070 = vpack.c.b16 %v2931, %v2930
      %v3071 = vpack.c.b16 %v2933, %v2932
      %v3072 = vpack.c.b16 %v2935, %v2934
      %v3073 = vpack.c.b16 %v2937, %v2936
      %v3074 = vpack.c.b16 %v2939, %v2938
      %v3075 = vpack.c.b16 %v2941, %v2940
      %v3076 = vpack.c.b16 %v2943, %v2942
      %v3077 = vpack.c.b16 %v2945, %v2944
      %v3078 = vpack.c.b16 %v2947, %v2946
      %v3079 = vpack.c.b16 %v2949, %v2948
      %v3080 = vpack.c.b16 %v2951, %v2950
      %v3081 = vpack.c.b16 %v2953, %v2952
      %v3082 = vpack.c.b16 %v2955, %v2954
      %v3083 = vpack.c.b16 %v2957, %v2956
      %v3084 = vpack.c.b16 %v2959, %v2958
      %v3085 = vpack.c.b16 %v2961, %v2960
      %v3086 = vpack.c.b16 %v2963, %v2962
      %v3087 = vpack.c.b16 %v2965, %v2964
      %v3088 = vpack.c.b16 %v2967, %v2966
      %v3089 = vpack.c.b16 %v2969, %v2968
      %v3090 = vpack.c.b16 %v2971, %v2970
      %v3091 = vpack.c.b16 %v2973, %v2972
      %v3092 = vpack.c.b16 %v2975, %v2974
      %v3093 = vpack.c.b16 %v2977, %v2976
      %v3094 = vpack.c.b16 %v2979, %v2978
      %v3095 = vpack.c.b16 %v2981, %v2980
      %v3096 = vpack.c.b16 %v2983, %v2982
      %v3097 = vpack.c.b16 %v2985, %v2984
      %v3098 = vpack.c.b16 %v2987, %v2986
      %v3099 = vpack.c.b16 %v2989, %v2988
      %v3100 = vpack.c.b16 %v2991, %v2990
      %v3101 = vpack.c.b16 %v2993, %v2992
      %v3102 = vpack.c.b16 %v2995, %v2994
      %v3103 = vpack.c.b16 %v2997, %v2996
      %v3104 = vpack.c.b16 %v2999, %v2998
      %v3105 = vpack.c.b16 %v3001, %v3000
      %v3106 = vpack.c.b16 %v3003, %v3002
      %v3107 = vpack.c.b16 %v3005, %v3004
      %v3108 = vpack.c.b16 %v3007, %v3006
      %v3109 = vpack.c.b16 %v3009, %v3008
      %3210 = vmatprep.subr.bf16.mxu0 0
      %3211 = vmatpush1.bf16.msra.mxu0 %v3010
      %3212 = vmatprep.subr.bf16.mxu0 0
      %3213 = vmatpush1.bf16.msra.mxu0 %v3011
      %3214 = vmatprep.subr.bf16.mxu0 0
      %3215 = vmatpush1.bf16.msra.mxu0 %v3012
      %3216 = vmatprep.subr.bf16.mxu0 0
      %3217 = vmatpush1.bf16.msra.mxu0 %v3013
      %3218 = vmatprep.subr.bf16.mxu0 0
      %3219 = vmatpush1.bf16.msra.mxu0 %v3014
      %3220 = vmatprep.subr.bf16.mxu0 0
      %3221 = vmatpush1.bf16.msra.mxu0 %v3015
      %3222 = vmatprep.subr.bf16.mxu0 0
      %3223 = vmatpush1.bf16.msra.mxu0 %v3016
      %3224 = vmatprep.subr.bf16.mxu0 0
      %3225 = vmatpush1.bf16.msra.mxu0 %v3017
      %3226 = vmatprep.subr.bf16.mxu0 0
      %3227 = vmatpush1.bf16.msra.mxu0 %v3018
      %3228 = vmatprep.subr.bf16.mxu0 0
      %3229 = vmatpush1.bf16.msra.mxu0 %v3019
      %3230 = vmatprep.subr.bf16.mxu0 0
      %3231 = vmatpush1.bf16.msra.mxu0 %v3020
      %3232 = vmatprep.subr.bf16.mxu0 0
      %3233 = vmatpush1.bf16.msra.mxu0 %v3021
      %3234 = vmatprep.subr.bf16.mxu0 0
      %3235 = vmatpush1.bf16.msra.mxu0 %v3022
      %3236 = vmatprep.subr.bf16.mxu0 0
      %3237 = vmatpush1.bf16.msra.mxu0 %v3023
      %3238 = vmatprep.subr.bf16.mxu0 0
      %3239 = vmatpush1.bf16.msra.mxu0 %v3024
      %3240 = vmatprep.subr.bf16.mxu0 0
      %3241 = vmatpush1.bf16.msra.mxu0 %v3025
      %3242 = vmatprep.mubr.bf16.mxu0 %v406
      %3243 = vmatmul.mubr.bf16.gmra.mrb[0].mxu0 %v405
      %v3244 = vpop.f32.mrb[0].mxu0
      %v3245 = vadd.f32 0.0, %v3244
      %v3246 = vpop.f32.mrb[0].mxu0
      %v3247 = vpop.f32.mrb[0].mxu0
      %v3248 = vadd.f32 0.0, %v3247
      %v3249 = vpop.f32.mrb[0].mxu0
      %3250 = vdwg.mxu0
      %3251 = vmatprep.subr.bf16.mxu0 0
      %3252 = vmatpush1.bf16.msra.mxu0 %v3026
      %3253 = vmatprep.subr.bf16.mxu0 0
      %3254 = vmatpush1.bf16.msra.mxu0 %v3027
      %3255 = vmatprep.subr.bf16.mxu0 0
      %3256 = vmatpush1.bf16.msra.mxu0 %v3028
      %3257 = vmatprep.subr.bf16.mxu0 0
      %3258 = vmatpush1.bf16.msra.mxu0 %v3029
      %3259 = vmatprep.subr.bf16.mxu0 0
      %3260 = vmatpush1.bf16.msra.mxu0 %v3030
      %3261 = vmatprep.subr.bf16.mxu0 0
      %3262 = vmatpush1.bf16.msra.mxu0 %v3031
      %3263 = vmatprep.subr.bf16.mxu0 0
      %3264 = vmatpush1.bf16.msra.mxu0 %v3032
      %3265 = vmatprep.subr.bf16.mxu0 0
      %3266 = vmatpush1.bf16.msra.mxu0 %v3033
      %3267 = vmatprep.subr.bf16.mxu0 0
      %3268 = vmatpush1.bf16.msra.mxu0 %v3034
      %3269 = vmatprep.subr.bf16.mxu0 0
      %3270 = vmatpush1.bf16.msra.mxu0 %v3035
      %3271 = vmatprep.subr.bf16.mxu0 0
      %3272 = vmatpush1.bf16.msra.mxu0 %v3036
      %3273 = vmatprep.subr.bf16.mxu0 0
      %3274 = vmatpush1.bf16.msra.mxu0 %v3037
      %3275 = vmatprep.subr.bf16.mxu0 0
      %3276 = vmatpush1.bf16.msra.mxu0 %v3038
      %3277 = vmatprep.subr.bf16.mxu0 0
      %3278 = vmatpush1.bf16.msra.mxu0 %v3039
      %3279 = vmatprep.subr.bf16.mxu0 0
      %3280 = vmatpush1.bf16.msra.mxu0 %v3040
      %3281 = vmatprep.subr.bf16.mxu0 0
      %3282 = vmatpush1.bf16.msra.mxu0 %v3041
      %3283 = vmatprep.mubr.bf16.mxu0 %v408
      %3284 = vmatmul.mubr.bf16.gmra.mrb[0].mxu0 %v407
      %v3285 = vpop.f32.mrb[0].mxu0
      %v3286 = vadd.f32 %v3245, %v3285
      %v3287 = vpop.f32.mrb[0].mxu0
      %v3288 = vpop.f32.mrb[0].mxu0
      %v3289 = vadd.f32 %v3248, %v3288
      %v3290 = vpop.f32.mrb[0].mxu0
      %3291 = vdwg.mxu0
      %3292 = vmatprep.subr.bf16.mxu0 0
      %3293 = vmatpush1.bf16.msra.mxu0 %v3042
      %3294 = vmatprep.subr.bf16.mxu0 0
      %3295 = vmatpush1.bf16.msra.mxu0 %v3043
      %3296 = vmatprep.subr.bf16.mxu0 0
      %3297 = vmatpush1.bf16.msra.mxu0 %v3044
      %3298 = vmatprep.subr.bf16.mxu0 0
      %3299 = vmatpush1.bf16.msra.mxu0 %v3045
      %3300 = vmatprep.subr.bf16.mxu0 0
      %3301 = vmatpush1.bf16.msra.mxu0 %v3046
      %3302 = vmatprep.subr.bf16.mxu0 0
      %3303 = vmatpush1.bf16.msra.mxu0 %v3047
      %3304 = vmatprep.subr.bf16.mxu0 0
      %3305 = vmatpush1.bf16.msra.mxu0 %v3048
      %3306 = vmatprep.subr.bf16.mxu0 0
      %3307 = vmatpush1.bf16.msra.mxu0 %v3049
      %3308 = vmatprep.subr.bf16.mxu0 0
      %3309 = vmatpush1.bf16.msra.mxu0 %v3050
      %3310 = vmatprep.subr.bf16.mxu0 0
      %3311 = vmatpush1.bf16.msra.mxu0 %v3051
      %3312 = vmatprep.subr.bf16.mxu0 0
      %3313 = vmatpush1.bf16.msra.mxu0 %v3052
      %3314 = vmatprep.subr.bf16.mxu0 0
      %3315 = vmatpush1.bf16.msra.mxu0 %v3053
      %3316 = vmatprep.subr.bf16.mxu0 0
      %3317 = vmatpush1.bf16.msra.mxu0 %v3054
      %3318 = vmatprep.subr.bf16.mxu0 0
      %3319 = vmatpush1.bf16.msra.mxu0 %v3055
      %3320 = vmatprep.subr.bf16.mxu0 0
      %3321 = vmatpush1.bf16.msra.mxu0 %v3056
      %3322 = vmatprep.subr.bf16.mxu0 0
      %3323 = vmatpush1.bf16.msra.mxu0 %v3057
      %3324 = vmatprep.mubr.bf16.mxu0 %v410
      %3325 = vmatmul.mubr.bf16.gmra.mrb[0].mxu0 %v409
      %v3326 = vpop.f32.mrb[0].mxu0
      %v3327 = vadd.f32 %v3286, %v3326
      %v3328 = vpop.f32.mrb[0].mxu0
      %v3329 = vpop.f32.mrb[0].mxu0
      %v3330 = vadd.f32 %v3289, %v3329
      %v3331 = vpop.f32.mrb[0].mxu0
      %3332 = vdwg.mxu0
      %3333 = vmatprep.subr.bf16.mxu0 0
      %3334 = vmatpush1.bf16.msra.mxu0 %v3058
      %3335 = vmatprep.subr.bf16.mxu0 0
      %3336 = vmatpush1.bf16.msra.mxu0 %v3059
      %3337 = vmatprep.subr.bf16.mxu0 0
      %3338 = vmatpush1.bf16.msra.mxu0 %v3060
      %3339 = vmatprep.subr.bf16.mxu0 0
      %3340 = vmatpush1.bf16.msra.mxu0 %v3061
      %3341 = vmatprep.subr.bf16.mxu0 0
      %3342 = vmatpush1.bf16.msra.mxu0 %v3062
      %3343 = vmatprep.subr.bf16.mxu0 0
      %3344 = vmatpush1.bf16.msra.mxu0 %v3063
      %3345 = vmatprep.subr.bf16.mxu0 0
      %3346 = vmatpush1.bf16.msra.mxu0 %v3064
      %3347 = vmatprep.subr.bf16.mxu0 0
      %3348 = vmatpush1.bf16.msra.mxu0 %v3065
      %3349 = vmatprep.subr.bf16.mxu0 0
      %3350 = vmatpush1.bf16.msra.mxu0 %v3066
      %3351 = vmatprep.subr.bf16.mxu0 0
      %3352 = vmatpush1.bf16.msra.mxu0 %v3067
      %3353 = vmatprep.subr.bf16.mxu0 0
      %3354 = vmatpush1.bf16.msra.mxu0 %v3068
      %3355 = vmatprep.subr.bf16.mxu0 0
      %3356 = vmatpush1.bf16.msra.mxu0 %v3069
      %3357 = vmatprep.subr.bf16.mxu0 0
      %3358 = vmatpush1.bf16.msra.mxu0 %v3070
      %3359 = vmatprep.subr.bf16.mxu0 0
      %3360 = vmatpush1.bf16.msra.mxu0 %v3071
      %3361 = vmatprep.subr.bf16.mxu0 0
      %3362 = vmatpush1.bf16.msra.mxu0 %v3072
      %3363 = vmatprep.subr.bf16.mxu0 0
      %3364 = vmatpush1.bf16.msra.mxu0 %v3073
      %3365 = vmatprep.mubr.bf16.mxu0 %v412
      %3366 = vmatmul.mubr.bf16.gmra.mrb[0].mxu0 %v411
      %v3367 = vpop.f32.mrb[0].mxu0
      %v3368 = vadd.f32 %v3327, %v3367
      %v3369 = vpop.f32.mrb[0].mxu0
      %v3370 = vpop.f32.mrb[0].mxu0
      %v3371 = vadd.f32 %v3330, %v3370
      %v3372 = vpop.f32.mrb[0].mxu0
      %3373 = vdwg.mxu0
      %3374 = vmatprep.subr.bf16.mxu0 0
      %3375 = vmatpush1.bf16.msra.mxu0 %v3074
      %3376 = vmatprep.subr.bf16.mxu0 0
      %3377 = vmatpush1.bf16.msra.mxu0 %v3075
      %3378 = vmatprep.subr.bf16.mxu0 0
      %3379 = vmatpush1.bf16.msra.mxu0 %v3076
      %3380 = vmatprep.subr.bf16.mxu0 0
      %3381 = vmatpush1.bf16.msra.mxu0 %v3077
      %3382 = vmatprep.subr.bf16.mxu0 0
      %3383 = vmatpush1.bf16.msra.mxu0 %v3078
      %3384 = vmatprep.subr.bf16.mxu0 0
      %3385 = vmatpush1.bf16.msra.mxu0 %v3079
      %3386 = vmatprep.subr.bf16.mxu0 0
      %3387 = vmatpush1.bf16.msra.mxu0 %v3080
      %3388 = vmatprep.subr.bf16.mxu0 0
      %3389 = vmatpush1.bf16.msra.mxu0 %v3081
      %3390 = vmatprep.subr.bf16.mxu0 0
      %3391 = vmatpush1.bf16.msra.mxu0 %v3082
      %3392 = vmatprep.subr.bf16.mxu0 0
      %3393 = vmatpush1.bf16.msra.mxu0 %v3083
      %3394 = vmatprep.subr.bf16.mxu0 0
      %3395 = vmatpush1.bf16.msra.mxu0 %v3084
      %3396 = vmatprep.subr.bf16.mxu0 0
      %3397 = vmatpush1.bf16.msra.mxu0 %v3085
      %3398 = vmatprep.subr.bf16.mxu0 0
      %3399 = vmatpush1.bf16.msra.mxu0 %v3086
      %3400 = vmatprep.subr.bf16.mxu0 0
      %3401 = vmatpush1.bf16.msra.mxu0 %v3087
      %3402 = vmatprep.subr.bf16.mxu0 0
      %3403 = vmatpush1.bf16.msra.mxu0 %v3088
      %3404 = vmatprep.subr.bf16.mxu0 0
      %3405 = vmatpush1.bf16.msra.mxu0 %v3089
      %3406 = vmatprep.mubr.bf16.mxu0 %v414
      %3407 = vmatmul.mubr.bf16.gmra.mrb[0].mxu0 %v413
      %v3408 = vpop.f32.mrb[0].mxu0
      %v3409 = vadd.f32 %v3368, %v3408
      %v3410 = vpop.f32.mrb[0].mxu0
      %v3411 = vpop.f32.mrb[0].mxu0
      %v3412 = vadd.f32 %v3371, %v3411
      %v3413 = vpop.f32.mrb[0].mxu0
      %3414 = vdwg.mxu0
      %3415 = vmatprep.subr.bf16.mxu0 0
      %3416 = vmatpush1.bf16.msra.mxu0 %v3090
      %3417 = vmatprep.subr.bf16.mxu0 0
      %3418 = vmatpush1.bf16.msra.mxu0 %v3091
      %3419 = vmatprep.subr.bf16.mxu0 0
      %3420 = vmatpush1.bf16.msra.mxu0 %v3092
      %3421 = vmatprep.subr.bf16.mxu0 0
      %3422 = vmatpush1.bf16.msra.mxu0 %v3093
      %3423 = vmatprep.subr.bf16.mxu0 0
      %3424 = vmatpush1.bf16.msra.mxu0 %v3094
      %3425 = vmatprep.subr.bf16.mxu0 0
      %3426 = vmatpush1.bf16.msra.mxu0 %v3095
      %3427 = vmatprep.subr.bf16.mxu0 0
      %3428 = vmatpush1.bf16.msra.mxu0 %v3096
      %3429 = vmatprep.subr.bf16.mxu0 0
      %3430 = vmatpush1.bf16.msra.mxu0 %v3097
      %3431 = vmatprep.subr.bf16.mxu0 0
      %3432 = vmatpush1.bf16.msra.mxu0 %v3098
      %3433 = vmatprep.subr.bf16.mxu0 0
      %3434 = vmatpush1.bf16.msra.mxu0 %v3099
      %3435 = vmatprep.subr.bf16.mxu0 0
      %3436 = vmatpush1.bf16.msra.mxu0 %v3100
      %3437 = vmatprep.subr.bf16.mxu0 0
      %3438 = vmatpush1.bf16.msra.mxu0 %v3101
      %3439 = vmatprep.subr.bf16.mxu0 0
      %3440 = vmatpush1.bf16.msra.mxu0 %v3102
      %3441 = vmatprep.subr.bf16.mxu0 0
      %3442 = vmatpush1.bf16.msra.mxu0 %v3103
      %3443 = vmatprep.subr.bf16.mxu0 0
      %3444 = vmatpush1.bf16.msra.mxu0 %v3104
      %3445 = vmatprep.subr.bf16.mxu0 0
      %3446 = vmatpush1.bf16.msra.mxu0 %v3105
      %3447 = vmatprep.mubr.bf16.mxu0 %v416
      %3448 = vmatmul.mubr.bf16.gmra.mrb[0].mxu0 %v415
      %v3449 = vpop.f32.mrb[0].mxu0
      %v3450 = vadd.f32 %v3409, %v3449
      %v3451 = vpop.f32.mrb[0].mxu0
      %v3452 = vpop.f32.mrb[0].mxu0
      %v3453 = vadd.f32 %v3412, %v3452
      %v3454 = vpop.f32.mrb[0].mxu0
      %3455 = vdwg.mxu0
      %3456 = vmatprep.subr.bf16.mxu0 0
      %3457 = vmatpush1.bf16.msra.mxu0 %v3106
      %3458 = vmatprep.subr.bf16.mxu0 0
      %3459 = vmatpush1.bf16.msra.mxu0 %v3107
      %3460 = vmatprep.subr.bf16.mxu0 0
      %3461 = vmatpush1.bf16.msra.mxu0 %v3108
      %3462 = vmatprep.subr.bf16.mxu0 0
      %3463 = vmatpush1.bf16.msra.mxu0 %v3109
      %3464 = vmatprep.subr.bf16.mxu0 0
      %3465 = vmatpush1.bf16.msra.mxu0 0
      %3466 = vmatprep.subr.bf16.mxu0 0
      %3467 = vmatpush1.bf16.msra.mxu0 0
      %3468 = vmatprep.subr.bf16.mxu0 0
      %3469 = vmatpush1.bf16.msra.mxu0 0
      %3470 = vmatprep.subr.bf16.mxu0 0
      %3471 = vmatpush1.bf16.msra.mxu0 0
      %3472 = vmatprep.subr.bf16.mxu0 0
      %3473 = vmatpush1.bf16.msra.mxu0 0
      %3474 = vmatprep.subr.bf16.mxu0 0
      %3475 = vmatpush1.bf16.msra.mxu0 0
      %3476 = vmatprep.subr.bf16.mxu0 0
      %3477 = vmatpush1.bf16.msra.mxu0 0
      %3478 = vmatprep.subr.bf16.mxu0 0
      %3479 = vmatpush1.bf16.msra.mxu0 0
      %3480 = vmatprep.subr.bf16.mxu0 0
      %3481 = vmatpush1.bf16.msra.mxu0 0
      %3482 = vmatprep.subr.bf16.mxu0 0
      %3483 = vmatpush1.bf16.msra.mxu0 0
      %3484 = vmatprep.subr.bf16.mxu0 0
      %3485 = vmatpush1.bf16.msra.mxu0 0
      %3486 = vmatprep.subr.bf16.mxu0 0
      %3487 = vmatpush1.bf16.msra.mxu0 0
      %3488 = vmatprep.mubr.bf16.mxu0 0
      %3489 = vmatmul.mubr.bf16.gmra.mrb[0].mxu0 %v1032
      %v3490 = vpop.f32.mrb[0].mxu0
      %v3491 = vadd.f32 %v3450, %v3490
      %v3492 = vpop.f32.mrb[0].mxu0
      %v3493 = vpop.f32.mrb[0].mxu0
      %v3494 = vadd.f32 %v3453, %v3493
      %v3495 = vpop.f32.mrb[0].mxu0
      %3496 = vdwg.mxu0
      %s3497 = scalar_lea.vmem %s1, 2400
      %v3498 = vld [vmem:[%s3497] sm:$0xf]
      %v3499 = vld [vmem:[%s3497 + $0x4] sm:$0xf]
      %v3500 = vld [vmem:[%s3497 + $0x8] sm:$0xf]
      %v3501 = vld [vmem:[%s3497 + $0xc] sm:$0xf]
      %v3502 = vld [vmem:[%s3497 + $0x10] sm:$0xf]
      %v3503 = vld [vmem:[%s3497 + $0x14] sm:$0xf]
      %v3504 = vld [vmem:[%s3497 + $0x18] sm:$0xf]
      %v3505 = vld [vmem:[%s3497 + $0x1c] sm:$0xf]
      %v3506 = vld [vmem:[%s3497 + $0x20] sm:$0xf]
      %v3507 = vld [vmem:[%s3497 + $0x24] sm:$0xf]
      %v3508 = vld [vmem:[%s3497 + $0x28] sm:$0xf]
      %v3509 = vld [vmem:[%s3497 + $0x2c] sm:$0xf]
      %v3510 = vld [vmem:[%s3497 + $0x30] sm:$0xf]
      %v3511 = vld [vmem:[%s3497 + $0x34] sm:$0xf]
      %v3512 = vld [vmem:[%s3497 + $0x38] sm:$0xf]
      %v3513 = vld [vmem:[%s3497 + $0x3c] sm:$0xf]
      %v3514 = vld [vmem:[%s3497 + $0x40] sm:$0xf]
      %v3515 = vld [vmem:[%s3497 + $0x44] sm:$0xf]
      %v3516 = vld [vmem:[%s3497 + $0x48] sm:$0xf]
      %v3517 = vld [vmem:[%s3497 + $0x4c] sm:$0xf]
      %v3518 = vld [vmem:[%s3497 + $0x50] sm:$0xf]
      %v3519 = vld [vmem:[%s3497 + $0x54] sm:$0xf]
      %v3520 = vld [vmem:[%s3497 + $0x58] sm:$0xf]
      %v3521 = vld [vmem:[%s3497 + $0x5c] sm:$0xf]
      %v3522 = vld [vmem:[%s3497 + $0x60] sm:$0xf]
      %v3523 = vld [vmem:[%s3497 + $0x64] sm:$0xf]
      %v3524 = vld [vmem:[%s3497 + $0x68] sm:$0xf]
      %v3525 = vld [vmem:[%s3497 + $0x6c] sm:$0xf]
      %v3526 = vld [vmem:[%s3497 + $0x70] sm:$0xf]
      %v3527 = vld [vmem:[%s3497 + $0x74] sm:$0xf]
      %v3528 = vld [vmem:[%s3497 + $0x78] sm:$0xf]
      %v3529 = vld [vmem:[%s3497 + $0x7c] sm:$0xf]
      %v3530 = vld [vmem:[%s3497 + $0x80] sm:$0xf]
      %v3531 = vld [vmem:[%s3497 + $0x84] sm:$0xf]
      %v3532 = vld [vmem:[%s3497 + $0x88] sm:$0xf]
      %v3533 = vld [vmem:[%s3497 + $0x8c] sm:$0xf]
      %v3534 = vld [vmem:[%s3497 + $0x90] sm:$0xf]
      %v3535 = vld [vmem:[%s3497 + $0x94] sm:$0xf]
      %v3536 = vld [vmem:[%s3497 + $0x98] sm:$0xf]
      %v3537 = vld [vmem:[%s3497 + $0x9c] sm:$0xf]
      %v3538 = vld [vmem:[%s3497 + $0xa0] sm:$0xf]
      %v3539 = vld [vmem:[%s3497 + $0xa4] sm:$0xf]
      %v3540 = vld [vmem:[%s3497 + $0xa8] sm:$0xf]
      %v3541 = vld [vmem:[%s3497 + $0xac] sm:$0xf]
      %v3542 = vld [vmem:[%s3497 + $0xb0] sm:$0xf]
      %v3543 = vld [vmem:[%s3497 + $0xb4] sm:$0xf]
      %v3544 = vld [vmem:[%s3497 + $0xb8] sm:$0xf]
      %v3545 = vld [vmem:[%s3497 + $0xbc] sm:$0xf]
      %v3546 = vld [vmem:[%s3497 + $0xc0] sm:$0xf]
      %v3547 = vld [vmem:[%s3497 + $0xc4] sm:$0xf]
      %v3548 = vld [vmem:[%s3497 + $0xc8] sm:$0xf]
      %v3549 = vld [vmem:[%s3497 + $0xcc] sm:$0xf]
      %v3550 = vld [vmem:[%s3497 + $0xd0] sm:$0xf]
      %v3551 = vld [vmem:[%s3497 + $0xd4] sm:$0xf]
      %v3552 = vld [vmem:[%s3497 + $0xd8] sm:$0xf]
      %v3553 = vld [vmem:[%s3497 + $0xdc] sm:$0xf]
      %v3554 = vld [vmem:[%s3497 + $0xe0] sm:$0xf]
      %v3555 = vld [vmem:[%s3497 + $0xe4] sm:$0xf]
      %v3556 = vld [vmem:[%s3497 + $0xe8] sm:$0xf]
      %v3557 = vld [vmem:[%s3497 + $0xec] sm:$0xf]
      %v3558 = vld [vmem:[%s3497 + $0xf0] sm:$0xf]
      %v3559 = vld [vmem:[%s3497 + $0xf4] sm:$0xf]
      %v3560 = vld [vmem:[%s3497 + $0xf8] sm:$0xf]
      %v3561 = vld [vmem:[%s3497 + $0xfc] sm:$0xf]
      %v3562 = vld [vmem:[%s3497 + $0x100] sm:$0xf]
      %v3563 = vld [vmem:[%s3497 + $0x104] sm:$0xf]
      %v3564 = vld [vmem:[%s3497 + $0x108] sm:$0xf]
      %v3565 = vld [vmem:[%s3497 + $0x10c] sm:$0xf]
      %v3566 = vld [vmem:[%s3497 + $0x110] sm:$0xf]
      %v3567 = vld [vmem:[%s3497 + $0x114] sm:$0xf]
      %v3568 = vld [vmem:[%s3497 + $0x118] sm:$0xf]
      %v3569 = vld [vmem:[%s3497 + $0x11c] sm:$0xf]
      %v3570 = vld [vmem:[%s3497 + $0x120] sm:$0xf]
      %v3571 = vld [vmem:[%s3497 + $0x124] sm:$0xf]
      %v3572 = vld [vmem:[%s3497 + $0x128] sm:$0xf]
      %v3573 = vld [vmem:[%s3497 + $0x12c] sm:$0xf]
      %v3574 = vld [vmem:[%s3497 + $0x130] sm:$0xf]
      %v3575 = vld [vmem:[%s3497 + $0x134] sm:$0xf]
      %v3576 = vld [vmem:[%s3497 + $0x138] sm:$0xf]
      %v3577 = vld [vmem:[%s3497 + $0x13c] sm:$0xf]
      %v3578 = vld [vmem:[%s3497 + $0x140] sm:$0xf]
      %v3579 = vld [vmem:[%s3497 + $0x144] sm:$0xf]
      %v3580 = vld [vmem:[%s3497 + $0x148] sm:$0xf]
      %v3581 = vld [vmem:[%s3497 + $0x14c] sm:$0xf]
      %v3582 = vld [vmem:[%s3497 + $0x150] sm:$0xf]
      %v3583 = vld [vmem:[%s3497 + $0x154] sm:$0xf]
      %v3584 = vld [vmem:[%s3497 + $0x158] sm:$0xf]
      %v3585 = vld [vmem:[%s3497 + $0x15c] sm:$0xf]
      %v3586 = vld [vmem:[%s3497 + $0x160] sm:$0xf]
      %v3587 = vld [vmem:[%s3497 + $0x164] sm:$0xf]
      %v3588 = vld [vmem:[%s3497 + $0x168] sm:$0xf]
      %v3589 = vld [vmem:[%s3497 + $0x16c] sm:$0xf]
      %v3590 = vld [vmem:[%s3497 + $0x170] sm:$0xf]
      %v3591 = vld [vmem:[%s3497 + $0x174] sm:$0xf]
      %v3592 = vld [vmem:[%s3497 + $0x178] sm:$0xf]
      %v3593 = vld [vmem:[%s3497 + $0x17c] sm:$0xf]
      %v3594 = vld [vmem:[%s3497 + $0x180] sm:$0xf]
      %v3595 = vld [vmem:[%s3497 + $0x184] sm:$0xf]
      %v3596 = vld [vmem:[%s3497 + $0x188] sm:$0xf]
      %v3597 = vld [vmem:[%s3497 + $0x18c] sm:$0xf]
      %v3598 = vld [vmem:[%s3497 + $0x190] sm:$0xf]
      %v3599 = vld [vmem:[%s3497 + $0x194] sm:$0xf]
      %v3600 = vld [vmem:[%s3497 + $0x198] sm:$0xf]
      %v3601 = vld [vmem:[%s3497 + $0x19c] sm:$0xf]
      %v3602 = vld [vmem:[%s3497 + $0x1a0] sm:$0xf]
      %v3603 = vld [vmem:[%s3497 + $0x1a4] sm:$0xf]
      %v3604 = vld [vmem:[%s3497 + $0x1a8] sm:$0xf]
      %v3605 = vld [vmem:[%s3497 + $0x1ac] sm:$0xf]
      %v3606 = vld [vmem:[%s3497 + $0x1b0] sm:$0xf]
      %v3607 = vld [vmem:[%s3497 + $0x1b4] sm:$0xf]
      %v3608 = vld [vmem:[%s3497 + $0x1b8] sm:$0xf]
      %v3609 = vld [vmem:[%s3497 + $0x1bc] sm:$0xf]
      %v3610 = vld [vmem:[%s3497 + $0x1c0] sm:$0xf]
      %v3611 = vld [vmem:[%s3497 + $0x1c4] sm:$0xf]
      %v3612 = vld [vmem:[%s3497 + $0x1c8] sm:$0xf]
      %v3613 = vld [vmem:[%s3497 + $0x1cc] sm:$0xf]
      %v3614 = vld [vmem:[%s3497 + $0x1d0] sm:$0xf]
      %v3615 = vld [vmem:[%s3497 + $0x1d4] sm:$0xf]
      %v3616 = vld [vmem:[%s3497 + $0x1d8] sm:$0xf]
      %v3617 = vld [vmem:[%s3497 + $0x1dc] sm:$0xf]
      %v3618 = vld [vmem:[%s3497 + $0x1e0] sm:$0xf]
      %v3619 = vld [vmem:[%s3497 + $0x1e4] sm:$0xf]
      %v3620 = vld [vmem:[%s3497 + $0x1e8] sm:$0xf]
      %v3621 = vld [vmem:[%s3497 + $0x1ec] sm:$0xf]
      %v3622 = vld [vmem:[%s3497 + $0x1f0] sm:$0xf]
      %v3623 = vld [vmem:[%s3497 + $0x1f4] sm:$0xf]
      %v3624 = vld [vmem:[%s3497 + $0x1f8] sm:$0xf]
      %v3625 = vld [vmem:[%s3497 + $0x1fc] sm:$0xf]
      %v3626 = vld [vmem:[%s3497 + $0x200] sm:$0xf]
      %v3627 = vld [vmem:[%s3497 + $0x204] sm:$0xf]
      %v3628 = vld [vmem:[%s3497 + $0x208] sm:$0xf]
      %v3629 = vld [vmem:[%s3497 + $0x20c] sm:$0xf]
      %v3630 = vld [vmem:[%s3497 + $0x210] sm:$0xf]
      %v3631 = vld [vmem:[%s3497 + $0x214] sm:$0xf]
      %v3632 = vld [vmem:[%s3497 + $0x218] sm:$0xf]
      %v3633 = vld [vmem:[%s3497 + $0x21c] sm:$0xf]
      %v3634 = vld [vmem:[%s3497 + $0x220] sm:$0xf]
      %v3635 = vld [vmem:[%s3497 + $0x224] sm:$0xf]
      %v3636 = vld [vmem:[%s3497 + $0x228] sm:$0xf]
      %v3637 = vld [vmem:[%s3497 + $0x22c] sm:$0xf]
      %v3638 = vld [vmem:[%s3497 + $0x230] sm:$0xf]
      %v3639 = vld [vmem:[%s3497 + $0x234] sm:$0xf]
      %v3640 = vld [vmem:[%s3497 + $0x238] sm:$0xf]
      %v3641 = vld [vmem:[%s3497 + $0x23c] sm:$0xf]
      %v3642 = vld [vmem:[%s3497 + $0x240] sm:$0xf]
      %v3643 = vld [vmem:[%s3497 + $0x244] sm:$0xf]
      %v3644 = vld [vmem:[%s3497 + $0x248] sm:$0xf]
      %v3645 = vld [vmem:[%s3497 + $0x24c] sm:$0xf]
      %v3646 = vld [vmem:[%s3497 + $0x250] sm:$0xf]
      %v3647 = vld [vmem:[%s3497 + $0x254] sm:$0xf]
      %v3648 = vld [vmem:[%s3497 + $0x258] sm:$0xf]
      %v3649 = vld [vmem:[%s3497 + $0x25c] sm:$0xf]
      %v3650 = vld [vmem:[%s3497 + $0x260] sm:$0xf]
      %v3651 = vld [vmem:[%s3497 + $0x264] sm:$0xf]
      %v3652 = vld [vmem:[%s3497 + $0x268] sm:$0xf]
      %v3653 = vld [vmem:[%s3497 + $0x26c] sm:$0xf]
      %v3654 = vld [vmem:[%s3497 + $0x270] sm:$0xf]
      %v3655 = vld [vmem:[%s3497 + $0x274] sm:$0xf]
      %v3656 = vld [vmem:[%s3497 + $0x278] sm:$0xf]
      %v3657 = vld [vmem:[%s3497 + $0x27c] sm:$0xf]
      %v3658 = vld [vmem:[%s3497 + $0x280] sm:$0xf]
      %v3659 = vld [vmem:[%s3497 + $0x284] sm:$0xf]
      %v3660 = vld [vmem:[%s3497 + $0x288] sm:$0xf]
      %v3661 = vld [vmem:[%s3497 + $0x28c] sm:$0xf]
      %v3662 = vld [vmem:[%s3497 + $0x290] sm:$0xf]
      %v3663 = vld [vmem:[%s3497 + $0x294] sm:$0xf]
      %v3664 = vld [vmem:[%s3497 + $0x298] sm:$0xf]
      %v3665 = vld [vmem:[%s3497 + $0x29c] sm:$0xf]
      %v3666 = vld [vmem:[%s3497 + $0x2a0] sm:$0xf]
      %v3667 = vld [vmem:[%s3497 + $0x2a4] sm:$0xf]
      %v3668 = vld [vmem:[%s3497 + $0x2a8] sm:$0xf]
      %v3669 = vld [vmem:[%s3497 + $0x2ac] sm:$0xf]
      %v3670 = vld [vmem:[%s3497 + $0x2b0] sm:$0xf]
      %v3671 = vld [vmem:[%s3497 + $0x2b4] sm:$0xf]
      %v3672 = vld [vmem:[%s3497 + $0x2b8] sm:$0xf]
      %v3673 = vld [vmem:[%s3497 + $0x2bc] sm:$0xf]
      %v3674 = vld [vmem:[%s3497 + $0x2c0] sm:$0xf]
      %v3675 = vld [vmem:[%s3497 + $0x2c4] sm:$0xf]
      %v3676 = vld [vmem:[%s3497 + $0x2c8] sm:$0xf]
      %v3677 = vld [vmem:[%s3497 + $0x2cc] sm:$0xf]
      %v3678 = vld [vmem:[%s3497 + $0x2d0] sm:$0xf]
      %v3679 = vld [vmem:[%s3497 + $0x2d4] sm:$0xf]
      %v3680 = vld [vmem:[%s3497 + $0x2d8] sm:$0xf]
      %v3681 = vld [vmem:[%s3497 + $0x2dc] sm:$0xf]
      %v3682 = vld [vmem:[%s3497 + $0x2e0] sm:$0xf]
      %v3683 = vld [vmem:[%s3497 + $0x2e4] sm:$0xf]
      %v3684 = vld [vmem:[%s3497 + $0x2e8] sm:$0xf]
      %v3685 = vld [vmem:[%s3497 + $0x2ec] sm:$0xf]
      %v3686 = vld [vmem:[%s3497 + $0x2f0] sm:$0xf]
      %v3687 = vld [vmem:[%s3497 + $0x2f4] sm:$0xf]
      %v3688 = vld [vmem:[%s3497 + $0x2f8] sm:$0xf]
      %v3689 = vld [vmem:[%s3497 + $0x2fc] sm:$0xf]
      %v3690 = vld [vmem:[%s3497 + $0x300] sm:$0xf]
      %v3691 = vld [vmem:[%s3497 + $0x304] sm:$0xf]
      %v3692 = vld [vmem:[%s3497 + $0x308] sm:$0xf]
      %v3693 = vld [vmem:[%s3497 + $0x30c] sm:$0xf]
      %v3694 = vld [vmem:[%s3497 + $0x310] sm:$0xf]
      %v3695 = vld [vmem:[%s3497 + $0x314] sm:$0xf]
      %v3696 = vld [vmem:[%s3497 + $0x318] sm:$0xf]
      %v3697 = vld [vmem:[%s3497 + $0x31c] sm:$0xf]
      %v3898 = vunpack.c.l.b16 %v3498
      %v3899 = vunpack.c.l.b16 %v3499
      %v3900 = vunpack.c.l.b16 %v3500
      %v3901 = vunpack.c.l.b16 %v3501
      %v3902 = vunpack.c.l.b16 %v3502
      %v3903 = vunpack.c.l.b16 %v3503
      %v3904 = vunpack.c.l.b16 %v3504
      %v3905 = vunpack.c.l.b16 %v3505
      %v3906 = vunpack.c.l.b16 %v3506
      %v3907 = vunpack.c.l.b16 %v3507
      %v3908 = vunpack.c.l.b16 %v3508
      %v3909 = vunpack.c.l.b16 %v3509
      %v3910 = vunpack.c.l.b16 %v3510
      %v3911 = vunpack.c.l.b16 %v3511
      %v3912 = vunpack.c.l.b16 %v3512
      %v3913 = vunpack.c.l.b16 %v3513
      %v3914 = vunpack.c.l.b16 %v3514
      %v3915 = vunpack.c.l.b16 %v3515
      %v3916 = vunpack.c.l.b16 %v3516
      %v3917 = vunpack.c.l.b16 %v3517
      %v3918 = vunpack.c.l.b16 %v3518
      %v3919 = vunpack.c.l.b16 %v3519
      %v3920 = vunpack.c.l.b16 %v3520
      %v3921 = vunpack.c.l.b16 %v3521
      %v3922 = vunpack.c.l.b16 %v3522
      %v3923 = vunpack.c.l.b16 %v3523
      %v3924 = vunpack.c.l.b16 %v3524
      %v3925 = vunpack.c.l.b16 %v3525
      %v3926 = vunpack.c.l.b16 %v3526
      %v3927 = vunpack.c.l.b16 %v3527
      %v3928 = vunpack.c.l.b16 %v3528
      %v3929 = vunpack.c.l.b16 %v3529
      %v3930 = vunpack.c.l.b16 %v3530
      %v3931 = vunpack.c.l.b16 %v3531
      %v3932 = vunpack.c.l.b16 %v3532
      %v3933 = vunpack.c.l.b16 %v3533
      %v3934 = vunpack.c.l.b16 %v3534
      %v3935 = vunpack.c.l.b16 %v3535
      %v3936 = vunpack.c.l.b16 %v3536
      %v3937 = vunpack.c.l.b16 %v3537
      %v3938 = vunpack.c.l.b16 %v3538
      %v3939 = vunpack.c.l.b16 %v3539
      %v3940 = vunpack.c.l.b16 %v3540
      %v3941 = vunpack.c.l.b16 %v3541
      %v3942 = vunpack.c.l.b16 %v3542
      %v3943 = vunpack.c.l.b16 %v3543
      %v3944 = vunpack.c.l.b16 %v3544
      %v3945 = vunpack.c.l.b16 %v3545
      %v3946 = vunpack.c.l.b16 %v3546
      %v3947 = vunpack.c.l.b16 %v3547
      %v3948 = vunpack.c.l.b16 %v3548
      %v3949 = vunpack.c.l.b16 %v3549
      %v3950 = vunpack.c.l.b16 %v3550
      %v3951 = vunpack.c.l.b16 %v3551
      %v3952 = vunpack.c.l.b16 %v3552
      %v3953 = vunpack.c.l.b16 %v3553
      %v3954 = vunpack.c.l.b16 %v3554
      %v3955 = vunpack.c.l.b16 %v3555
      %v3956 = vunpack.c.l.b16 %v3556
      %v3957 = vunpack.c.l.b16 %v3557
      %v3958 = vunpack.c.l.b16 %v3558
      %v3959 = vunpack.c.l.b16 %v3559
      %v3960 = vunpack.c.l.b16 %v3560
      %v3961 = vunpack.c.l.b16 %v3561
      %v3962 = vunpack.c.l.b16 %v3562
      %v3963 = vunpack.c.l.b16 %v3563
      %v3964 = vunpack.c.l.b16 %v3564
      %v3965 = vunpack.c.l.b16 %v3565
      %v3966 = vunpack.c.l.b16 %v3566
      %v3967 = vunpack.c.l.b16 %v3567
      %v3968 = vunpack.c.l.b16 %v3568
      %v3969 = vunpack.c.l.b16 %v3569
      %v3970 = vunpack.c.l.b16 %v3570
      %v3971 = vunpack.c.l.b16 %v3571
      %v3972 = vunpack.c.l.b16 %v3572
      %v3973 = vunpack.c.l.b16 %v3573
      %v3974 = vunpack.c.l.b16 %v3574
      %v3975 = vunpack.c.l.b16 %v3575
      %v3976 = vunpack.c.l.b16 %v3576
      %v3977 = vunpack.c.l.b16 %v3577
      %v3978 = vunpack.c.l.b16 %v3578
      %v3979 = vunpack.c.l.b16 %v3579
      %v3980 = vunpack.c.l.b16 %v3580
      %v3981 = vunpack.c.l.b16 %v3581
      %v3982 = vunpack.c.l.b16 %v3582
      %v3983 = vunpack.c.l.b16 %v3583
      %v3984 = vunpack.c.l.b16 %v3584
      %v3985 = vunpack.c.l.b16 %v3585
      %v3986 = vunpack.c.l.b16 %v3586
      %v3987 = vunpack.c.l.b16 %v3587
      %v3988 = vunpack.c.l.b16 %v3588
      %v3989 = vunpack.c.l.b16 %v3589
      %v3990 = vunpack.c.l.b16 %v3590
      %v3991 = vunpack.c.l.b16 %v3591
      %v3992 = vunpack.c.l.b16 %v3592
      %v3993 = vunpack.c.l.b16 %v3593
      %v3994 = vunpack.c.l.b16 %v3594
      %v3995 = vunpack.c.l.b16 %v3595
      %v3996 = vunpack.c.l.b16 %v3596
      %v3997 = vunpack.c.l.b16 %v3597
      %v3998 = vunpack.c.l.b16 %v3598
      %v3999 = vunpack.c.l.b16 %v3599
      %v4000 = vunpack.c.l.b16 %v3600
      %v4001 = vunpack.c.l.b16 %v3601
      %v4002 = vunpack.c.l.b16 %v3602
      %v4003 = vunpack.c.l.b16 %v3603
      %v4004 = vunpack.c.l.b16 %v3604
      %v4005 = vunpack.c.l.b16 %v3605
      %v4006 = vunpack.c.l.b16 %v3606
      %v4007 = vunpack.c.l.b16 %v3607
      %v4008 = vunpack.c.l.b16 %v3608
      %v4009 = vunpack.c.l.b16 %v3609
      %v4010 = vunpack.c.l.b16 %v3610
      %v4011 = vunpack.c.l.b16 %v3611
      %v4012 = vunpack.c.l.b16 %v3612
      %v4013 = vunpack.c.l.b16 %v3613
      %v4014 = vunpack.c.l.b16 %v3614
      %v4015 = vunpack.c.l.b16 %v3615
      %v4016 = vunpack.c.l.b16 %v3616
      %v4017 = vunpack.c.l.b16 %v3617
      %v4018 = vunpack.c.l.b16 %v3618
      %v4019 = vunpack.c.l.b16 %v3619
      %v4020 = vunpack.c.l.b16 %v3620
      %v4021 = vunpack.c.l.b16 %v3621
      %v4022 = vunpack.c.l.b16 %v3622
      %v4023 = vunpack.c.l.b16 %v3623
      %v4024 = vunpack.c.l.b16 %v3624
      %v4025 = vunpack.c.l.b16 %v3625
      %v4026 = vunpack.c.l.b16 %v3626
      %v4027 = vunpack.c.l.b16 %v3627
      %v4028 = vunpack.c.l.b16 %v3628
      %v4029 = vunpack.c.l.b16 %v3629
      %v4030 = vunpack.c.l.b16 %v3630
      %v4031 = vunpack.c.l.b16 %v3631
      %v4032 = vunpack.c.l.b16 %v3632
      %v4033 = vunpack.c.l.b16 %v3633
      %v4034 = vunpack.c.l.b16 %v3634
      %v4035 = vunpack.c.l.b16 %v3635
      %v4036 = vunpack.c.l.b16 %v3636
      %v4037 = vunpack.c.l.b16 %v3637
      %v4038 = vunpack.c.l.b16 %v3638
      %v4039 = vunpack.c.l.b16 %v3639
      %v4040 = vunpack.c.l.b16 %v3640
      %v4041 = vunpack.c.l.b16 %v3641
      %v4042 = vunpack.c.l.b16 %v3642
      %v4043 = vunpack.c.l.b16 %v3643
      %v4044 = vunpack.c.l.b16 %v3644
      %v4045 = vunpack.c.l.b16 %v3645
      %v4046 = vunpack.c.l.b16 %v3646
      %v4047 = vunpack.c.l.b16 %v3647
      %v4048 = vunpack.c.l.b16 %v3648
      %v4049 = vunpack.c.l.b16 %v3649
      %v4050 = vunpack.c.l.b16 %v3650
      %v4051 = vunpack.c.l.b16 %v3651
      %v4052 = vunpack.c.l.b16 %v3652
      %v4053 = vunpack.c.l.b16 %v3653
      %v4054 = vunpack.c.l.b16 %v3654
      %v4055 = vunpack.c.l.b16 %v3655
      %v4056 = vunpack.c.l.b16 %v3656
      %v4057 = vunpack.c.l.b16 %v3657
      %v4058 = vunpack.c.l.b16 %v3658
      %v4059 = vunpack.c.l.b16 %v3659
      %v4060 = vunpack.c.l.b16 %v3660
      %v4061 = vunpack.c.l.b16 %v3661
      %v4062 = vunpack.c.l.b16 %v3662
      %v4063 = vunpack.c.l.b16 %v3663
      %v4064 = vunpack.c.l.b16 %v3664
      %v4065 = vunpack.c.l.b16 %v3665
      %v4066 = vunpack.c.l.b16 %v3666
      %v4067 = vunpack.c.l.b16 %v3667
      %v4068 = vunpack.c.l.b16 %v3668
      %v4069 = vunpack.c.l.b16 %v3669
      %v4070 = vunpack.c.l.b16 %v3670
      %v4071 = vunpack.c.l.b16 %v3671
      %v4072 = vunpack.c.l.b16 %v3672
      %v4073 = vunpack.c.l.b16 %v3673
      %v4074 = vunpack.c.l.b16 %v3674
      %v4075 = vunpack.c.l.b16 %v3675
      %v4076 = vunpack.c.l.b16 %v3676
      %v4077 = vunpack.c.l.b16 %v3677
      %v4078 = vunpack.c.l.b16 %v3678
      %v4079 = vunpack.c.l.b16 %v3679
      %v4080 = vunpack.c.l.b16 %v3680
      %v4081 = vunpack.c.l.b16 %v3681
      %v4082 = vunpack.c.l.b16 %v3682
      %v4083 = vunpack.c.l.b16 %v3683
      %v4084 = vunpack.c.l.b16 %v3684
      %v4085 = vunpack.c.l.b16 %v3685
      %v4086 = vunpack.c.l.b16 %v3686
      %v4087 = vunpack.c.l.b16 %v3687
      %v4088 = vunpack.c.l.b16 %v3688
      %v4089 = vunpack.c.l.b16 %v3689
      %v4090 = vunpack.c.l.b16 %v3690
      %v4091 = vunpack.c.l.b16 %v3691
      %v4092 = vunpack.c.l.b16 %v3692
      %v4093 = vunpack.c.l.b16 %v3693
      %v4094 = vunpack.c.l.b16 %v3694
      %v4095 = vunpack.c.l.b16 %v3695
      %v4096 = vunpack.c.l.b16 %v3696
      %v4097 = vunpack.c.l.b16 %v3697
      %v4098 = vpack.c.b16 %v3899, %v3898
      %v4099 = vpack.c.b16 %v3901, %v3900
      %v4100 = vpack.c.b16 %v3903, %v3902
      %v4101 = vpack.c.b16 %v3905, %v3904
      %v4102 = vpack.c.b16 %v3907, %v3906
      %v4103 = vpack.c.b16 %v3909, %v3908
      %v4104 = vpack.c.b16 %v3911, %v3910
      %v4105 = vpack.c.b16 %v3913, %v3912
      %v4106 = vpack.c.b16 %v3915, %v3914
      %v4107 = vpack.c.b16 %v3917, %v3916
      %v4108 = vpack.c.b16 %v3919, %v3918
      %v4109 = vpack.c.b16 %v3921, %v3920
      %v4110 = vpack.c.b16 %v3923, %v3922
      %v4111 = vpack.c.b16 %v3925, %v3924
      %v4112 = vpack.c.b16 %v3927, %v3926
      %v4113 = vpack.c.b16 %v3929, %v3928
      %v4114 = vpack.c.b16 %v3931, %v3930
      %v4115 = vpack.c.b16 %v3933, %v3932
      %v4116 = vpack.c.b16 %v3935, %v3934
      %v4117 = vpack.c.b16 %v3937, %v3936
      %v4118 = vpack.c.b16 %v3939, %v3938
      %v4119 = vpack.c.b16 %v3941, %v3940
      %v4120 = vpack.c.b16 %v3943, %v3942
      %v4121 = vpack.c.b16 %v3945, %v3944
      %v4122 = vpack.c.b16 %v3947, %v3946
      %v4123 = vpack.c.b16 %v3949, %v3948
      %v4124 = vpack.c.b16 %v3951, %v3950
      %v4125 = vpack.c.b16 %v3953, %v3952
      %v4126 = vpack.c.b16 %v3955, %v3954
      %v4127 = vpack.c.b16 %v3957, %v3956
      %v4128 = vpack.c.b16 %v3959, %v3958
      %v4129 = vpack.c.b16 %v3961, %v3960
      %v4130 = vpack.c.b16 %v3963, %v3962
      %v4131 = vpack.c.b16 %v3965, %v3964
      %v4132 = vpack.c.b16 %v3967, %v3966
      %v4133 = vpack.c.b16 %v3969, %v3968
      %v4134 = vpack.c.b16 %v3971, %v3970
      %v4135 = vpack.c.b16 %v3973, %v3972
      %v4136 = vpack.c.b16 %v3975, %v3974
      %v4137 = vpack.c.b16 %v3977, %v3976
      %v4138 = vpack.c.b16 %v3979, %v3978
      %v4139 = vpack.c.b16 %v3981, %v3980
      %v4140 = vpack.c.b16 %v3983, %v3982
      %v4141 = vpack.c.b16 %v3985, %v3984
      %v4142 = vpack.c.b16 %v3987, %v3986
      %v4143 = vpack.c.b16 %v3989, %v3988
      %v4144 = vpack.c.b16 %v3991, %v3990
      %v4145 = vpack.c.b16 %v3993, %v3992
      %v4146 = vpack.c.b16 %v3995, %v3994
      %v4147 = vpack.c.b16 %v3997, %v3996
      %v4148 = vpack.c.b16 %v3999, %v3998
      %v4149 = vpack.c.b16 %v4001, %v4000
      %v4150 = vpack.c.b16 %v4003, %v4002
      %v4151 = vpack.c.b16 %v4005, %v4004
      %v4152 = vpack.c.b16 %v4007, %v4006
      %v4153 = vpack.c.b16 %v4009, %v4008
      %v4154 = vpack.c.b16 %v4011, %v4010
      %v4155 = vpack.c.b16 %v4013, %v4012
      %v4156 = vpack.c.b16 %v4015, %v4014
      %v4157 = vpack.c.b16 %v4017, %v4016
      %v4158 = vpack.c.b16 %v4019, %v4018
      %v4159 = vpack.c.b16 %v4021, %v4020
      %v4160 = vpack.c.b16 %v4023, %v4022
      %v4161 = vpack.c.b16 %v4025, %v4024
      %v4162 = vpack.c.b16 %v4027, %v4026
      %v4163 = vpack.c.b16 %v4029, %v4028
      %v4164 = vpack.c.b16 %v4031, %v4030
      %v4165 = vpack.c.b16 %v4033, %v4032
      %v4166 = vpack.c.b16 %v4035, %v4034
      %v4167 = vpack.c.b16 %v4037, %v4036
      %v4168 = vpack.c.b16 %v4039, %v4038
      %v4169 = vpack.c.b16 %v4041, %v4040
      %v4170 = vpack.c.b16 %v4043, %v4042
      %v4171 = vpack.c.b16 %v4045, %v4044
      %v4172 = vpack.c.b16 %v4047, %v4046
      %v4173 = vpack.c.b16 %v4049, %v4048
      %v4174 = vpack.c.b16 %v4051, %v4050
      %v4175 = vpack.c.b16 %v4053, %v4052
      %v4176 = vpack.c.b16 %v4055, %v4054
      %v4177 = vpack.c.b16 %v4057, %v4056
      %v4178 = vpack.c.b16 %v4059, %v4058
      %v4179 = vpack.c.b16 %v4061, %v4060
      %v4180 = vpack.c.b16 %v4063, %v4062
      %v4181 = vpack.c.b16 %v4065, %v4064
      %v4182 = vpack.c.b16 %v4067, %v4066
      %v4183 = vpack.c.b16 %v4069, %v4068
      %v4184 = vpack.c.b16 %v4071, %v4070
      %v4185 = vpack.c.b16 %v4073, %v4072
      %v4186 = vpack.c.b16 %v4075, %v4074
      %v4187 = vpack.c.b16 %v4077, %v4076
      %v4188 = vpack.c.b16 %v4079, %v4078
      %v4189 = vpack.c.b16 %v4081, %v4080
      %v4190 = vpack.c.b16 %v4083, %v4082
      %v4191 = vpack.c.b16 %v4085, %v4084
      %v4192 = vpack.c.b16 %v4087, %v4086
      %v4193 = vpack.c.b16 %v4089, %v4088
      %v4194 = vpack.c.b16 %v4091, %v4090
      %v4195 = vpack.c.b16 %v4093, %v4092
      %v4196 = vpack.c.b16 %v4095, %v4094
      %v4197 = vpack.c.b16 %v4097, %v4096
      %4298 = vmatprep.subr.bf16.mxu0 0
      %4299 = vmatpush1.bf16.msra.mxu0 %v4098
      %4300 = vmatprep.subr.bf16.mxu0 0
      %4301 = vmatpush1.bf16.msra.mxu0 %v4099
      %4302 = vmatprep.subr.bf16.mxu0 0
      %4303 = vmatpush1.bf16.msra.mxu0 %v4100
      %4304 = vmatprep.subr.bf16.mxu0 0
      %4305 = vmatpush1.bf16.msra.mxu0 %v4101
      %4306 = vmatprep.subr.bf16.mxu0 0
      %4307 = vmatpush1.bf16.msra.mxu0 %v4102
      %4308 = vmatprep.subr.bf16.mxu0 0
      %4309 = vmatpush1.bf16.msra.mxu0 %v4103
      %4310 = vmatprep.subr.bf16.mxu0 0
      %4311 = vmatpush1.bf16.msra.mxu0 %v4104
      %4312 = vmatprep.subr.bf16.mxu0 0
      %4313 = vmatpush1.bf16.msra.mxu0 %v4105
      %4314 = vmatprep.subr.bf16.mxu0 0
      %4315 = vmatpush1.bf16.msra.mxu0 %v4106
      %4316 = vmatprep.subr.bf16.mxu0 0
      %4317 = vmatpush1.bf16.msra.mxu0 %v4107
      %4318 = vmatprep.subr.bf16.mxu0 0
      %4319 = vmatpush1.bf16.msra.mxu0 %v4108
      %4320 = vmatprep.subr.bf16.mxu0 0
      %4321 = vmatpush1.bf16.msra.mxu0 %v4109
      %4322 = vmatprep.subr.bf16.mxu0 0
      %4323 = vmatpush1.bf16.msra.mxu0 %v4110
      %4324 = vmatprep.subr.bf16.mxu0 0
      %4325 = vmatpush1.bf16.msra.mxu0 %v4111
      %4326 = vmatprep.subr.bf16.mxu0 0
      %4327 = vmatpush1.bf16.msra.mxu0 %v4112
      %4328 = vmatprep.subr.bf16.mxu0 0
      %4329 = vmatpush1.bf16.msra.mxu0 %v4113
      %4330 = vmatprep.mubr.bf16.mxu0 %v406
      %4331 = vmatmul.mubr.bf16.gmra.mrb[0].mxu0 %v405
      %v4332 = vpop.f32.mrb[0].mxu0
      %v4333 = vadd.f32 0.0, %v4332
      %v4334 = vpop.f32.mrb[0].mxu0
      %v4335 = vpop.f32.mrb[0].mxu0
      %v4336 = vadd.f32 0.0, %v4335
      %v4337 = vpop.f32.mrb[0].mxu0
      %4338 = vdwg.mxu0
      %4339 = vmatprep.subr.bf16.mxu0 0
      %4340 = vmatpush1.bf16.msra.mxu0 %v4114
      %4341 = vmatprep.subr.bf16.mxu0 0
      %4342 = vmatpush1.bf16.msra.mxu0 %v4115
      %4343 = vmatprep.subr.bf16.mxu0 0
      %4344 = vmatpush1.bf16.msra.mxu0 %v4116
      %4345 = vmatprep.subr.bf16.mxu0 0
      %4346 = vmatpush1.bf16.msra.mxu0 %v4117
      %4347 = vmatprep.subr.bf16.mxu0 0
      %4348 = vmatpush1.bf16.msra.mxu0 %v4118
      %4349 = vmatprep.subr.bf16.mxu0 0
      %4350 = vmatpush1.bf16.msra.mxu0 %v4119
      %4351 = vmatprep.subr.bf16.mxu0 0
      %4352 = vmatpush1.bf16.msra.mxu0 %v4120
      %4353 = vmatprep.subr.bf16.mxu0 0
      %4354 = vmatpush1.bf16.msra.mxu0 %v4121
      %4355 = vmatprep.subr.bf16.mxu0 0
      %4356 = vmatpush1.bf16.msra.mxu0 %v4122
      %4357 = vmatprep.subr.bf16.mxu0 0
      %4358 = vmatpush1.bf16.msra.mxu0 %v4123
      %4359 = vmatprep.subr.bf16.mxu0 0
      %4360 = vmatpush1.bf16.msra.mxu0 %v4124
      %4361 = vmatprep.subr.bf16.mxu0 0
      %4362 = vmatpush1.bf16.msra.mxu0 %v4125
      %4363 = vmatprep.subr.bf16.mxu0 0
      %4364 = vmatpush1.bf16.msra.mxu0 %v4126
      %4365 = vmatprep.subr.bf16.mxu0 0
      %4366 = vmatpush1.bf16.msra.mxu0 %v4127
      %4367 = vmatprep.subr.bf16.mxu0 0
      %4368 = vmatpush1.bf16.msra.mxu0 %v4128
      %4369 = vmatprep.subr.bf16.mxu0 0
      %4370 = vmatpush1.bf16.msra.mxu0 %v4129
      %4371 = vmatprep.mubr.bf16.mxu0 %v408
      %4372 = vmatmul.mubr.bf16.gmra.mrb[0].mxu0 %v407
      %v4373 = vpop.f32.mrb[0].mxu0
      %v4374 = vadd.f32 %v4333, %v4373
      %v4375 = vpop.f32.mrb[0].mxu0
      %v4376 = vpop.f32.mrb[0].mxu0
      %v4377 = vadd.f32 %v4336, %v4376
      %v4378 = vpop.f32.mrb[0].mxu0
      %4379 = vdwg.mxu0
      %4380 = vmatprep.subr.bf16.mxu0 0
      %4381 = vmatpush1.bf16.msra.mxu0 %v4130
      %4382 = vmatprep.subr.bf16.mxu0 0
      %4383 = vmatpush1.bf16.msra.mxu0 %v4131
      %4384 = vmatprep.subr.bf16.mxu0 0
      %4385 = vmatpush1.bf16.msra.mxu0 %v4132
      %4386 = vmatprep.subr.bf16.mxu0 0
      %4387 = vmatpush1.bf16.msra.mxu0 %v4133
      %4388 = vmatprep.subr.bf16.mxu0 0
      %4389 = vmatpush1.bf16.msra.mxu0 %v4134
      %4390 = vmatprep.subr.bf16.mxu0 0
      %4391 = vmatpush1.bf16.msra.mxu0 %v4135
      %4392 = vmatprep.subr.bf16.mxu0 0
      %4393 = vmatpush1.bf16.msra.mxu0 %v4136
      %4394 = vmatprep.subr.bf16.mxu0 0
      %4395 = vmatpush1.bf16.msra.mxu0 %v4137
      %4396 = vmatprep.subr.bf16.mxu0 0
      %4397 = vmatpush1.bf16.msra.mxu0 %v4138
      %4398 = vmatprep.subr.bf16.mxu0 0
      %4399 = vmatpush1.bf16.msra.mxu0 %v4139
      %4400 = vmatprep.subr.bf16.mxu0 0
      %4401 = vmatpush1.bf16.msra.mxu0 %v4140
      %4402 = vmatprep.subr.bf16.mxu0 0
      %4403 = vmatpush1.bf16.msra.mxu0 %v4141
      %4404 = vmatprep.subr.bf16.mxu0 0
      %4405 = vmatpush1.bf16.msra.mxu0 %v4142
      %4406 = vmatprep.subr.bf16.mxu0 0
      %4407 = vmatpush1.bf16.msra.mxu0 %v4143
      %4408 = vmatprep.subr.bf16.mxu0 0
      %4409 = vmatpush1.bf16.msra.mxu0 %v4144
      %4410 = vmatprep.subr.bf16.mxu0 0
      %4411 = vmatpush1.bf16.msra.mxu0 %v4145
      %4412 = vmatprep.mubr.bf16.mxu0 %v410
      %4413 = vmatmul.mubr.bf16.gmra.mrb[0].mxu0 %v409
      %v4414 = vpop.f32.mrb[0].mxu0
      %v4415 = vadd.f32 %v4374, %v4414
      %v4416 = vpop.f32.mrb[0].mxu0
      %v4417 = vpop.f32.mrb[0].mxu0
      %v4418 = vadd.f32 %v4377, %v4417
      %v4419 = vpop.f32.mrb[0].mxu0
      %4420 = vdwg.mxu0
      %4421 = vmatprep.subr.bf16.mxu0 0
      %4422 = vmatpush1.bf16.msra.mxu0 %v4146
      %4423 = vmatprep.subr.bf16.mxu0 0
      %4424 = vmatpush1.bf16.msra.mxu0 %v4147
      %4425 = vmatprep.subr.bf16.mxu0 0
      %4426 = vmatpush1.bf16.msra.mxu0 %v4148
      %4427 = vmatprep.subr.bf16.mxu0 0
      %4428 = vmatpush1.bf16.msra.mxu0 %v4149
      %4429 = vmatprep.subr.bf16.mxu0 0
      %4430 = vmatpush1.bf16.msra.mxu0 %v4150
      %4431 = vmatprep.subr.bf16.mxu0 0
      %4432 = vmatpush1.bf16.msra.mxu0 %v4151
      %4433 = vmatprep.subr.bf16.mxu0 0
      %4434 = vmatpush1.bf16.msra.mxu0 %v4152
      %4435 = vmatprep.subr.bf16.mxu0 0
      %4436 = vmatpush1.bf16.msra.mxu0 %v4153
      %4437 = vmatprep.subr.bf16.mxu0 0
      %4438 = vmatpush1.bf16.msra.mxu0 %v4154
      %4439 = vmatprep.subr.bf16.mxu0 0
      %4440 = vmatpush1.bf16.msra.mxu0 %v4155
      %4441 = vmatprep.subr.bf16.mxu0 0
      %4442 = vmatpush1.bf16.msra.mxu0 %v4156
      %4443 = vmatprep.subr.bf16.mxu0 0
      %4444 = vmatpush1.bf16.msra.mxu0 %v4157
      %4445 = vmatprep.subr.bf16.mxu0 0
      %4446 = vmatpush1.bf16.msra.mxu0 %v4158
      %4447 = vmatprep.subr.bf16.mxu0 0
      %4448 = vmatpush1.bf16.msra.mxu0 %v4159
      %4449 = vmatprep.subr.bf16.mxu0 0
      %4450 = vmatpush1.bf16.msra.mxu0 %v4160
      %4451 = vmatprep.subr.bf16.mxu0 0
      %4452 = vmatpush1.bf16.msra.mxu0 %v4161
      %4453 = vmatprep.mubr.bf16.mxu0 %v412
      %4454 = vmatmul.mubr.bf16.gmra.mrb[0].mxu0 %v411
      %v4455 = vpop.f32.mrb[0].mxu0
      %v4456 = vadd.f32 %v4415, %v4455
      %v4457 = vpop.f32.mrb[0].mxu0
      %v4458 = vpop.f32.mrb[0].mxu0
      %v4459 = vadd.f32 %v4418, %v4458
      %v4460 = vpop.f32.mrb[0].mxu0
      %4461 = vdwg.mxu0
      %4462 = vmatprep.subr.bf16.mxu0 0
      %4463 = vmatpush1.bf16.msra.mxu0 %v4162
      %4464 = vmatprep.subr.bf16.mxu0 0
      %4465 = vmatpush1.bf16.msra.mxu0 %v4163
      %4466 = vmatprep.subr.bf16.mxu0 0
      %4467 = vmatpush1.bf16.msra.mxu0 %v4164
      %4468 = vmatprep.subr.bf16.mxu0 0
      %4469 = vmatpush1.bf16.msra.mxu0 %v4165
      %4470 = vmatprep.subr.bf16.mxu0 0
      %4471 = vmatpush1.bf16.msra.mxu0 %v4166
      %4472 = vmatprep.subr.bf16.mxu0 0
      %4473 = vmatpush1.bf16.msra.mxu0 %v4167
      %4474 = vmatprep.subr.bf16.mxu0 0
      %4475 = vmatpush1.bf16.msra.mxu0 %v4168
      %4476 = vmatprep.subr.bf16.mxu0 0
      %4477 = vmatpush1.bf16.msra.mxu0 %v4169
      %4478 = vmatprep.subr.bf16.mxu0 0
      %4479 = vmatpush1.bf16.msra.mxu0 %v4170
      %4480 = vmatprep.subr.bf16.mxu0 0
      %4481 = vmatpush1.bf16.msra.mxu0 %v4171
      %4482 = vmatprep.subr.bf16.mxu0 0
      %4483 = vmatpush1.bf16.msra.mxu0 %v4172
      %4484 = vmatprep.subr.bf16.mxu0 0
      %4485 = vmatpush1.bf16.msra.mxu0 %v4173
      %4486 = vmatprep.subr.bf16.mxu0 0
      %4487 = vmatpush1.bf16.msra.mxu0 %v4174
      %4488 = vmatprep.subr.bf16.mxu0 0
      %4489 = vmatpush1.bf16.msra.mxu0 %v4175
      %4490 = vmatprep.subr.bf16.mxu0 0
      %4491 = vmatpush1.bf16.msra.mxu0 %v4176
      %4492 = vmatprep.subr.bf16.mxu0 0
      %4493 = vmatpush1.bf16.msra.mxu0 %v4177
      %4494 = vmatprep.mubr.bf16.mxu0 %v414
      %4495 = vmatmul.mubr.bf16.gmra.mrb[0].mxu0 %v413
      %v4496 = vpop.f32.mrb[0].mxu0
      %v4497 = vadd.f32 %v4456, %v4496
      %v4498 = vpop.f32.mrb[0].mxu0
      %v4499 = vpop.f32.mrb[0].mxu0
      %v4500 = vadd.f32 %v4459, %v4499
      %v4501 = vpop.f32.mrb[0].mxu0
      %4502 = vdwg.mxu0
      %4503 = vmatprep.subr.bf16.mxu0 0
      %4504 = vmatpush1.bf16.msra.mxu0 %v4178
      %4505 = vmatprep.subr.bf16.mxu0 0
      %4506 = vmatpush1.bf16.msra.mxu0 %v4179
      %4507 = vmatprep.subr.bf16.mxu0 0
      %4508 = vmatpush1.bf16.msra.mxu0 %v4180
      %4509 = vmatprep.subr.bf16.mxu0 0
      %4510 = vmatpush1.bf16.msra.mxu0 %v4181
      %4511 = vmatprep.subr.bf16.mxu0 0
      %4512 = vmatpush1.bf16.msra.mxu0 %v4182
      %4513 = vmatprep.subr.bf16.mxu0 0
      %4514 = vmatpush1.bf16.msra.mxu0 %v4183
      %4515 = vmatprep.subr.bf16.mxu0 0
      %4516 = vmatpush1.bf16.msra.mxu0 %v4184
      %4517 = vmatprep.subr.bf16.mxu0 0
      %4518 = vmatpush1.bf16.msra.mxu0 %v4185
      %4519 = vmatprep.subr.bf16.mxu0 0
      %4520 = vmatpush1.bf16.msra.mxu0 %v4186
      %4521 = vmatprep.subr.bf16.mxu0 0
      %4522 = vmatpush1.bf16.msra.mxu0 %v4187
      %4523 = vmatprep.subr.bf16.mxu0 0
      %4524 = vmatpush1.bf16.msra.mxu0 %v4188
      %4525 = vmatprep.subr.bf16.mxu0 0
      %4526 = vmatpush1.bf16.msra.mxu0 %v4189
      %4527 = vmatprep.subr.bf16.mxu0 0
      %4528 = vmatpush1.bf16.msra.mxu0 %v4190
      %4529 = vmatprep.subr.bf16.mxu0 0
      %4530 = vmatpush1.bf16.msra.mxu0 %v4191
      %4531 = vmatprep.subr.bf16.mxu0 0
      %4532 = vmatpush1.bf16.msra.mxu0 %v4192
      %4533 = vmatprep.subr.bf16.mxu0 0
      %4534 = vmatpush1.bf16.msra.mxu0 %v4193
      %4535 = vmatprep.mubr.bf16.mxu0 %v416
      %4536 = vmatmul.mubr.bf16.gmra.mrb[0].mxu0 %v415
      %v4537 = vpop.f32.mrb[0].mxu0
      %v4538 = vadd.f32 %v4497, %v4537
      %v4539 = vpop.f32.mrb[0].mxu0
      %v4540 = vpop.f32.mrb[0].mxu0
      %v4541 = vadd.f32 %v4500, %v4540
      %v4542 = vpop.f32.mrb[0].mxu0
      %4543 = vdwg.mxu0
      %4544 = vmatprep.subr.bf16.mxu0 0
      %4545 = vmatpush1.bf16.msra.mxu0 %v4194
      %4546 = vmatprep.subr.bf16.mxu0 0
      %4547 = vmatpush1.bf16.msra.mxu0 %v4195
      %4548 = vmatprep.subr.bf16.mxu0 0
      %4549 = vmatpush1.bf16.msra.mxu0 %v4196
      %4550 = vmatprep.subr.bf16.mxu0 0
      %4551 = vmatpush1.bf16.msra.mxu0 %v4197
      %4552 = vmatprep.subr.bf16.mxu0 0
      %4553 = vmatpush1.bf16.msra.mxu0 0
      %4554 = vmatprep.subr.bf16.mxu0 0
      %4555 = vmatpush1.bf16.msra.mxu0 0
      %4556 = vmatprep.subr.bf16.mxu0 0
      %4557 = vmatpush1.bf16.msra.mxu0 0
      %4558 = vmatprep.subr.bf16.mxu0 0
      %4559 = vmatpush1.bf16.msra.mxu0 0
      %4560 = vmatprep.subr.bf16.mxu0 0
      %4561 = vmatpush1.bf16.msra.mxu0 0
      %4562 = vmatprep.subr.bf16.mxu0 0
      %4563 = vmatpush1.bf16.msra.mxu0 0
      %4564 = vmatprep.subr.bf16.mxu0 0
      %4565 = vmatpush1.bf16.msra.mxu0 0
      %4566 = vmatprep.subr.bf16.mxu0 0
      %4567 = vmatpush1.bf16.msra.mxu0 0
      %4568 = vmatprep.subr.bf16.mxu0 0
      %4569 = vmatpush1.bf16.msra.mxu0 0
      %4570 = vmatprep.subr.bf16.mxu0 0
      %4571 = vmatpush1.bf16.msra.mxu0 0
      %4572 = vmatprep.subr.bf16.mxu0 0
      %4573 = vmatpush1.bf16.msra.mxu0 0
      %4574 = vmatprep.subr.bf16.mxu0 0
      %4575 = vmatpush1.bf16.msra.mxu0 0
      %4576 = vmatprep.mubr.bf16.mxu0 0
      %4577 = vmatmul.mubr.bf16.gmra.mrb[0].mxu0 %v1032
      %v4578 = vpop.f32.mrb[0].mxu0
      %v4579 = vadd.f32 %v4538, %v4578
      %v4580 = vpop.f32.mrb[0].mxu0
      %v4581 = vpop.f32.mrb[0].mxu0
      %v4582 = vadd.f32 %v4541, %v4581
      %v4583 = vpop.f32.mrb[0].mxu0
      %4584 = vdwg.mxu0
      %vm4585 = vcmask 408576
      %v4586 = vsel %vm4585, %v1315, 0.0
      %4587 = vadd.xlane.f32.xlu0 %v4586
      %v4588 = vpop.xlane.xlu0 %4587
      %v4589 = vsel %vm4585, %v1318, 0.0
      %4590 = vadd.xlane.f32.xlu0 %v4589
      %v4591 = vpop.xlane.xlu0 %4590
      %v4592 = vsel %vm4585, %v2403, 0.0
      %4593 = vadd.xlane.f32.xlu0 %v4592
      %v4594 = vpop.xlane.xlu0 %4593
      %v4595 = vsel %vm4585, %v2406, 0.0
      %4596 = vadd.xlane.f32.xlu0 %v4595
      %v4597 = vpop.xlane.xlu0 %4596
      %v4598 = vadd.f32 %v4588, %v4594
      %v4599 = vadd.f32 %v4591, %v4597
      %v4600 = vsel %vm4585, %v3491, 0.0
      %4601 = vadd.xlane.f32.xlu0 %v4600
      %v4602 = vpop.xlane.xlu0 %4601
      %v4603 = vsel %vm4585, %v3494, 0.0
      %4604 = vadd.xlane.f32.xlu0 %v4603
      %v4605 = vpop.xlane.xlu0 %4604
      %v4606 = vadd.f32 %v4598, %v4602
      %v4607 = vadd.f32 %v4599, %v4605
      %v4608 = vsel %vm4585, %v4579, 0.0
      %4609 = vadd.xlane.f32.xlu0 %v4608
      %v4610 = vpop.xlane.xlu0 %4609
      %v4611 = vsel %vm4585, %v4582, 0.0
      %4612 = vadd.xlane.f32.xlu0 %v4611
      %v4613 = vpop.xlane.xlu0 %4612
      %v4614 = vadd.f32 %v4606, %v4610
      %v4615 = vadd.f32 %v4607, %v4613
      %v4616 = vmul.f32 %v4614, 0.005
      %v4617 = vmul.f32 %v4615, 0.005
      %v4618 = vsub.f32 %v1315, %v4616
      %v4619 = vsub.f32 %v1318, %v4617
      %v4620 = vsub.f32 %v2403, %v4616
      %v4621 = vsub.f32 %v2406, %v4617
      %v4622 = vsub.f32 %v3491, %v4616
      %v4623 = vsub.f32 %v3494, %v4617
      %v4624 = vsub.f32 %v4579, %v4616
      %v4625 = vsub.f32 %v4582, %v4617
      %v4626 = vmul.f32 %v4618, %v4618
      %v4627 = vmul.f32 %v4619, %v4619
      %v4628 = vsel %vm4585, %v4626, 0.0
      %4629 = vadd.xlane.f32.xlu0 %v4628
      %v4630 = vpop.xlane.xlu0 %4629
      %v4631 = vsel %vm4585, %v4627, 0.0
      %4632 = vadd.xlane.f32.xlu0 %v4631
      %v4633 = vpop.xlane.xlu0 %4632
      %v4634 = vmul.f32 %v4620, %v4620
      %v4635 = vmul.f32 %v4621, %v4621
      %v4636 = vsel %vm4585, %v4634, 0.0
      %4637 = vadd.xlane.f32.xlu0 %v4636
      %v4638 = vpop.xlane.xlu0 %4637
      %v4639 = vsel %vm4585, %v4635, 0.0
      %4640 = vadd.xlane.f32.xlu0 %v4639
      %v4641 = vpop.xlane.xlu0 %4640
      %v4642 = vadd.f32 %v4630, %v4638
      %v4643 = vadd.f32 %v4633, %v4641
      %v4644 = vmul.f32 %v4622, %v4622
      %v4645 = vmul.f32 %v4623, %v4623
      %v4646 = vsel %vm4585, %v4644, 0.0
      %4647 = vadd.xlane.f32.xlu0 %v4646
      %v4648 = vpop.xlane.xlu0 %4647
      %v4649 = vsel %vm4585, %v4645, 0.0
      %4650 = vadd.xlane.f32.xlu0 %v4649
      %v4651 = vpop.xlane.xlu0 %4650
      %v4652 = vadd.f32 %v4642, %v4648
      %v4653 = vadd.f32 %v4643, %v4651
      %v4654 = vmul.f32 %v4624, %v4624
      %v4655 = vmul.f32 %v4625, %v4625
      %v4656 = vsel %vm4585, %v4654, 0.0
      %4657 = vadd.xlane.f32.xlu0 %v4656
      %v4658 = vpop.xlane.xlu0 %4657
      %v4659 = vsel %vm4585, %v4655, 0.0
      %4660 = vadd.xlane.f32.xlu0 %v4659
      %v4661 = vpop.xlane.xlu0 %4660
      %v4662 = vadd.f32 %v4652, %v4658
      %v4663 = vadd.f32 %v4653, %v4661
      %v4664 = vmul.f32 %v4662, 0.005
      %v4665 = vmul.f32 %v4663, 0.005
      %v4666 = vmax.f32 %v1315, %v2403
      %v4667 = vmax.f32 %v1318, %v2406
      %v4668 = vmax.f32 %v3491, %v4579
      %v4669 = vmax.f32 %v3494, %v4582
      %v4670 = vmax.f32 %v4666, %v4668
      %v4671 = vmax.f32 %v4667, %v4669
      %v4672 = vsub.f32 %v4670, %v4616
      %v4673 = vsub.f32 %v4671, %v4617
      %v4674 = vadd.f32 %v4664, 0.0001
      %v4675 = vadd.f32 %v4665, 0.0001
      %v4676 = vrsqrt.pop %v4674
      %v4677 = vrsqrt.pop %v4675
      %v4678 = vmul.f32 %v4672, %v4676
      %v4679 = vmul.f32 %v4673, %v4677
      %vm4680 = vcmp.ge.f32.partialorder %v4678, 0.0
      %vm4681 = vcmp.ge.f32.partialorder %v4679, 0.0
      %v4682 = vmul.f32 %v4678, 0.01
      %v4683 = vmul.f32 %v4679, 0.01
      %v4684 = vsel %vm4680, %v4678, %v4682
      %v4685 = vsel %vm4681, %v4679, %v4683
      %4686 = vst.msk [vmem:[%s148] sm:$0xff] %vm4585, %v4684
      %4687 = vst.msk [vmem:[%s148 + $0x8] sm:$0xff] %vm4585, %v4685
      %s4688 = smul.u32 2, %s13
      %p4689 = scmp.lt.s32.totalorder %s4688, 3
      %s4690 = scalar_select %p4689, %s4688, 3
      %s4691 = smul.addr %s4690, 8
      %s4692 = scalar_lea.vmem %s2, %s4691
      // Predicated region
      $region29: #{_lambda_.4} parent=27 // pred_check
        %p4693 = pneg %p78
      $region30: #{_lambda_.4} parent=27 // pred_check_branch
        %4695 = sbr.rel (%p4693) target = $region32
      $region31: #{_lambda_.4} parent=27 // pred_region
        %s4696 = smul.u32 2, %s13
      $region32: #{_lambda_.4} parent=27 // pred_fallthru
        _
    $region28: #{_lambda_.4} parent=5 // pred_fallthru
      _
    %p4697 = scmp.le.s32.totalorder 2, %s8
    // Predicated region
    $region33: #{_lambda_.4} parent=5 // pred_check
      %p4698 = pneg %p4697
    $region34: #{_lambda_.4} parent=5 // pred_check_branch
      %4700 = sbr.rel (%p4698) target = $region36
    $region35: #{_lambda_.4} parent=5 // pred_region
      %s4701 = ssub.s32 %s8, 2
      // Predicated region
      $region37: #{_lambda_.4} parent=35 // pred_check
        %p4702 = pneg %p84
      $region38: #{_lambda_.4} parent=35 // pred_check_branch
        %4704 = sbr.rel (%p4702) target = $region40
      $region39: #{_lambda_.4} parent=35 // pred_region
        %s4705 = smul.u32 2, %s14
        %p4706 = scmp.lt.s32.totalorder %s4705, 3
        %s4707 = scalar_select %p4706, %s4705, 3
        %s4708 = smul.addr %s4707, 8
        %s4709 = scalar_lea.vmem %s2, %s4708
      $region40: #{_lambda_.4} parent=35 // pred_fallthru
        _
    $region36: #{_lambda_.4} parent=5 // pred_fallthru
      _
  $region6: #{_lambda_.4} parent=0 // loop_footer
    %s12 = sadd.s32 1, %s8
  $region7: #{_lambda_.4} parent=0 // loop_footer_branch
    %7 = sbr.rel target = $region3
  $region8: #{_lambda_.4} parent=0 // loop_exit
    _

// kernel: _lambda_.5
$region0: #{_lambda_.5}
  #allocation0 [shape = 'u32[]', space=smem, size = 0x4, offset = 0x4, fixed_abs, tag = 'smem constant byte address 0x4 - core index']
  #allocation1 [shape = 'u32[144,128]{1,0:T(1,128)}', space=vmem, size = 0x12000, scoped, tag = 'internal scratch']
  %s0 = inlined_call_operand.vmem [shape: bf16[2,800], index: 0, kind: input, shape index: {}]
  %s1 = inlined_call_operand.vmem [shape: bf16[800,128], index: 1, kind: input, shape index: {}]
  %s2 = inlined_call_operand.vmem [shape: f32[1,128], index: 2, kind: input, shape index: {}]
  %s3 = inlined_call_operand.hbm [shape: f32[2,128], index: 3, kind: output, shape index: {}]
  %s4 = sld [smem:[#allocation0]]
  $region22: #{_lambda_.5} parent=0
    _
  %s6 = ssub.s32 1, %s4
  %s7 = scalar_select 0, %s6, %s4
  $region1: #{_lambda_.5} parent=0
    #allocation2 [shape = 'u8[1024]{0}', space=vmem, size = 0x400, scoped, tag = 'output window, operand 0, single buffered']
    #allocation3 [shape = 's32[1]{0}', space=sflag, size = 0x4, scoped, tag = 'scoped memory for _lambda_.5']
    %8 = vsyncpa [#allocation3], 0
    // Predicated region
    $region2: #{_lambda_.5} parent=1 // pred_check
      _
    $region3: #{_lambda_.5} parent=1 // pred_check_branch
      %10 = sbr.rel (0) target = $region5
    $region4: #{_lambda_.5} parent=1 // pred_region
      _
    $region5: #{_lambda_.5} parent=1 // pred_fallthru
      _
    // Predicated region
    $region6: #{_lambda_.5} parent=1 // pred_check
      _
    $region7: #{_lambda_.5} parent=1 // pred_check_branch
      %12 = sbr.rel (0) target = $region9
    $region8: #{_lambda_.5} parent=1 // pred_region
      _
    $region9: #{_lambda_.5} parent=1 // pred_fallthru
      _
    // Predicated region
    $region10: #{_lambda_.5} parent=1 // pred_check
      _
    $region11: #{_lambda_.5} parent=1 // pred_check_branch
      %14 = sbr.rel (0) target = $region13
    $region12: #{_lambda_.5} parent=1 // pred_region
      _
    $region13: #{_lambda_.5} parent=1 // pred_fallthru
      _
    %v16 = vld [vmem:[%s0] sm:$0x7f]
    %v17 = vld [vmem:[%s1] sm:$0xf]
    %v18 = vld [vmem:[%s1 + $0x4] sm:$0xf]
    %v19 = vld [vmem:[%s1 + $0x8] sm:$0xf]
    %v20 = vld [vmem:[%s1 + $0xc] sm:$0xf]
    %v21 = vld [vmem:[%s1 + $0x10] sm:$0xf]
    %v22 = vld [vmem:[%s1 + $0x14] sm:$0xf]
    %v23 = vld [vmem:[%s1 + $0x18] sm:$0xf]
    %v24 = vld [vmem:[%s1 + $0x1c] sm:$0xf]
    %v25 = vld [vmem:[%s1 + $0x20] sm:$0xf]
    %v26 = vld [vmem:[%s1 + $0x24] sm:$0xf]
    %v27 = vld [vmem:[%s1 + $0x28] sm:$0xf]
    %v28 = vld [vmem:[%s1 + $0x2c] sm:$0xf]
    %v29 = vld [vmem:[%s1 + $0x30] sm:$0xf]
    %v30 = vld [vmem:[%s1 + $0x34] sm:$0xf]
    %v31 = vld [vmem:[%s1 + $0x38] sm:$0xf]
    %v32 = vld [vmem:[%s1 + $0x3c] sm:$0xf]
    %v33 = vld [vmem:[%s1 + $0x40] sm:$0xf]
    %v34 = vld [vmem:[%s1 + $0x44] sm:$0xf]
    %v35 = vld [vmem:[%s1 + $0x48] sm:$0xf]
    %v36 = vld [vmem:[%s1 + $0x4c] sm:$0xf]
    %v37 = vld [vmem:[%s1 + $0x50] sm:$0xf]
    %v38 = vld [vmem:[%s1 + $0x54] sm:$0xf]
    %v39 = vld [vmem:[%s1 + $0x58] sm:$0xf]
    %v40 = vld [vmem:[%s1 + $0x5c] sm:$0xf]
    %v41 = vld [vmem:[%s1 + $0x60] sm:$0xf]
    %v42 = vld [vmem:[%s1 + $0x64] sm:$0xf]
    %v43 = vld [vmem:[%s1 + $0x68] sm:$0xf]
    %v44 = vld [vmem:[%s1 + $0x6c] sm:$0xf]
    %v45 = vld [vmem:[%s1 + $0x70] sm:$0xf]
    %v46 = vld [vmem:[%s1 + $0x74] sm:$0xf]
    %v47 = vld [vmem:[%s1 + $0x78] sm:$0xf]
    %v48 = vld [vmem:[%s1 + $0x7c] sm:$0xf]
    %v49 = vld [vmem:[%s1 + $0x80] sm:$0xf]
    %v50 = vld [vmem:[%s1 + $0x84] sm:$0xf]
    %v51 = vld [vmem:[%s1 + $0x88] sm:$0xf]
    %v52 = vld [vmem:[%s1 + $0x8c] sm:$0xf]
    %v53 = vld [vmem:[%s1 + $0x90] sm:$0xf]
    %v54 = vld [vmem:[%s1 + $0x94] sm:$0xf]
    %v55 = vld [vmem:[%s1 + $0x98] sm:$0xf]
    %v56 = vld [vmem:[%s1 + $0x9c] sm:$0xf]
    %v57 = vld [vmem:[%s1 + $0xa0] sm:$0xf]
    %v58 = vld [vmem:[%s1 + $0xa4] sm:$0xf]
    %v59 = vld [vmem:[%s1 + $0xa8] sm:$0xf]
    %v60 = vld [vmem:[%s1 + $0xac] sm:$0xf]
    %v61 = vld [vmem:[%s1 + $0xb0] sm:$0xf]
    %v62 = vld [vmem:[%s1 + $0xb4] sm:$0xf]
    %v63 = vld [vmem:[%s1 + $0xb8] sm:$0xf]
    %v64 = vld [vmem:[%s1 + $0xbc] sm:$0xf]
    %v65 = vld [vmem:[%s1 + $0xc0] sm:$0xf]
    %v66 = vld [vmem:[%s1 + $0xc4] sm:$0xf]
    %v67 = vld [vmem:[%s1 + $0xc8] sm:$0xf]
    %v68 = vld [vmem:[%s1 + $0xcc] sm:$0xf]
    %v69 = vld [vmem:[%s1 + $0xd0] sm:$0xf]
    %v70 = vld [vmem:[%s1 + $0xd4] sm:$0xf]
    %v71 = vld [vmem:[%s1 + $0xd8] sm:$0xf]
    %v72 = vld [vmem:[%s1 + $0xdc] sm:$0xf]
    %v73 = vld [vmem:[%s1 + $0xe0] sm:$0xf]
    %v74 = vld [vmem:[%s1 + $0xe4] sm:$0xf]
    %v75 = vld [vmem:[%s1 + $0xe8] sm:$0xf]
    %v76 = vld [vmem:[%s1 + $0xec] sm:$0xf]
    %v77 = vld [vmem:[%s1 + $0xf0] sm:$0xf]
    %v78 = vld [vmem:[%s1 + $0xf4] sm:$0xf]
    %v79 = vld [vmem:[%s1 + $0xf8] sm:$0xf]
    %v80 = vld [vmem:[%s1 + $0xfc] sm:$0xf]
    %v81 = vld [vmem:[%s1 + $0x100] sm:$0xf]
    %v82 = vld [vmem:[%s1 + $0x104] sm:$0xf]
    %v83 = vld [vmem:[%s1 + $0x108] sm:$0xf]
    %v84 = vld [vmem:[%s1 + $0x10c] sm:$0xf]
    %v85 = vld [vmem:[%s1 + $0x110] sm:$0xf]
    %v86 = vld [vmem:[%s1 + $0x114] sm:$0xf]
    %v87 = vld [vmem:[%s1 + $0x118] sm:$0xf]
    %v88 = vld [vmem:[%s1 + $0x11c] sm:$0xf]
    %v89 = vld [vmem:[%s1 + $0x120] sm:$0xf]
    %v90 = vld [vmem:[%s1 + $0x124] sm:$0xf]
    %v91 = vld [vmem:[%s1 + $0x128] sm:$0xf]
    %v92 = vld [vmem:[%s1 + $0x12c] sm:$0xf]
    %v93 = vld [vmem:[%s1 + $0x130] sm:$0xf]
    %v94 = vld [vmem:[%s1 + $0x134] sm:$0xf]
    %v95 = vld [vmem:[%s1 + $0x138] sm:$0xf]
    %v96 = vld [vmem:[%s1 + $0x13c] sm:$0xf]
    %v97 = vld [vmem:[%s1 + $0x140] sm:$0xf]
    %v98 = vld [vmem:[%s1 + $0x144] sm:$0xf]
    %v99 = vld [vmem:[%s1 + $0x148] sm:$0xf]
    %v100 = vld [vmem:[%s1 + $0x14c] sm:$0xf]
    %v101 = vld [vmem:[%s1 + $0x150] sm:$0xf]
    %v102 = vld [vmem:[%s1 + $0x154] sm:$0xf]
    %v103 = vld [vmem:[%s1 + $0x158] sm:$0xf]
    %v104 = vld [vmem:[%s1 + $0x15c] sm:$0xf]
    %v105 = vld [vmem:[%s1 + $0x160] sm:$0xf]
    %v106 = vld [vmem:[%s1 + $0x164] sm:$0xf]
    %v107 = vld [vmem:[%s1 + $0x168] sm:$0xf]
    %v108 = vld [vmem:[%s1 + $0x16c] sm:$0xf]
    %v109 = vld [vmem:[%s1 + $0x170] sm:$0xf]
    %v110 = vld [vmem:[%s1 + $0x174] sm:$0xf]
    %v111 = vld [vmem:[%s1 + $0x178] sm:$0xf]
    %v112 = vld [vmem:[%s1 + $0x17c] sm:$0xf]
    %v113 = vld [vmem:[%s1 + $0x180] sm:$0xf]
    %v114 = vld [vmem:[%s1 + $0x184] sm:$0xf]
    %v115 = vld [vmem:[%s1 + $0x188] sm:$0xf]
    %v116 = vld [vmem:[%s1 + $0x18c] sm:$0xf]
    %v117 = vld [vmem:[%s2] sm:$0x1]
    %v119 = vlaneseq
    %v120 = vshrl.u32 %v119, 7
    %v121 = vsub.s32 0, %v120
    %v122 = vrot.slane %v117, %v121
    %v125 = vcombine.high %v16, %v16
    %v127 = vunpack.c.l.s4 1966171168
    %v128 = vunpack.c.0.s8 %v127
    %v129 = vlaneseq
    %v130 = vshrl.u32 %v129, 7
    %v131 = vsub.s32 %v128, %v130
    %v132 = vrot.slane %v16, %v131
    %v134 = vunpack.c.l.s4 1966171168
    %v135 = vunpack.c.0.s8 %v134
    %v136 = vlaneseq
    %v137 = vshrl.u32 %v136, 7
    %v138 = vsub.s32 %v135, %v137
    %v139 = vrot.slane %v125, %v138
    %v140 = vcombine.high %v132, %v132
    %v141 = vcombine.high %v139, %v139
    %v143 = vunpack.c.l.s4 1966171168
    %v144 = vunpack.c.0.s8 %v143
    %v145 = vlaneseq
    %v146 = vshrl.u32 %v145, 7
    %v147 = vsub.s32 %v144, %v146
    %v148 = vrot.slane %v132, %v147
    %v150 = vunpack.c.l.s4 1966171168
    %v151 = vunpack.c.0.s8 %v150
    %v152 = vlaneseq
    %v153 = vshrl.u32 %v152, 7
    %v154 = vsub.s32 %v151, %v153
    %v155 = vrot.slane %v139, %v154
    %v157 = vunpack.c.l.s4 1966171168
    %v158 = vunpack.c.0.s8 %v157
    %v159 = vlaneseq
    %v160 = vshrl.u32 %v159, 7
    %v161 = vsub.s32 %v158, %v160
    %v162 = vrot.slane %v140, %v161
    %v164 = vunpack.c.l.s4 1966171168
    %v165 = vunpack.c.0.s8 %v164
    %v166 = vlaneseq
    %v167 = vshrl.u32 %v166, 7
    %v168 = vsub.s32 %v165, %v167
    %v169 = vrot.slane %v141, %v168
    %v170 = vcombine.high %v148, %v148
    %v171 = vcombine.high %v155, %v155
    %v172 = vcombine.high %v162, %v162
    %v279 = vunpack.c.l.b16 %v17
    %v280 = vunpack.c.l.b16 %v18
    %v281 = vunpack.c.l.b16 %v19
    %v282 = vunpack.c.l.b16 %v20
    %v283 = vunpack.c.l.b16 %v21
    %v284 = vunpack.c.l.b16 %v22
    %v285 = vunpack.c.l.b16 %v23
    %v286 = vunpack.c.l.b16 %v24
    %v287 = vunpack.c.l.b16 %v25
    %v288 = vunpack.c.l.b16 %v26
    %v289 = vunpack.c.l.b16 %v27
    %v290 = vunpack.c.l.b16 %v28
    %v291 = vunpack.c.l.b16 %v29
    %v292 = vunpack.c.l.b16 %v30
    %v293 = vunpack.c.l.b16 %v31
    %v294 = vunpack.c.l.b16 %v32
    %v295 = vunpack.c.l.b16 %v33
    %v296 = vunpack.c.l.b16 %v34
    %v297 = vunpack.c.l.b16 %v35
    %v298 = vunpack.c.l.b16 %v36
    %v299 = vunpack.c.l.b16 %v37
    %v300 = vunpack.c.l.b16 %v38
    %v301 = vunpack.c.l.b16 %v39
    %v302 = vunpack.c.l.b16 %v40
    %v303 = vunpack.c.l.b16 %v41
    %v304 = vunpack.c.l.b16 %v42
    %v305 = vunpack.c.l.b16 %v43
    %v306 = vunpack.c.l.b16 %v44
    %v307 = vunpack.c.l.b16 %v45
    %v308 = vunpack.c.l.b16 %v46
    %v309 = vunpack.c.l.b16 %v47
    %v310 = vunpack.c.l.b16 %v48
    %v311 = vunpack.c.l.b16 %v49
    %v312 = vunpack.c.l.b16 %v50
    %v313 = vunpack.c.l.b16 %v51
    %v314 = vunpack.c.l.b16 %v52
    %v315 = vunpack.c.l.b16 %v53
    %v316 = vunpack.c.l.b16 %v54
    %v317 = vunpack.c.l.b16 %v55
    %v318 = vunpack.c.l.b16 %v56
    %v319 = vunpack.c.l.b16 %v57
    %v320 = vunpack.c.l.b16 %v58
    %v321 = vunpack.c.l.b16 %v59
    %v322 = vunpack.c.l.b16 %v60
    %v323 = vunpack.c.l.b16 %v61
    %v324 = vunpack.c.l.b16 %v62
    %v325 = vunpack.c.l.b16 %v63
    %v326 = vunpack.c.l.b16 %v64
    %v327 = vunpack.c.l.b16 %v65
    %v328 = vunpack.c.l.b16 %v66
    %v329 = vunpack.c.l.b16 %v67
    %v330 = vunpack.c.l.b16 %v68
    %v331 = vunpack.c.l.b16 %v69
    %v332 = vunpack.c.l.b16 %v70
    %v333 = vunpack.c.l.b16 %v71
    %v334 = vunpack.c.l.b16 %v72
    %v335 = vunpack.c.l.b16 %v73
    %v336 = vunpack.c.l.b16 %v74
    %v337 = vunpack.c.l.b16 %v75
    %v338 = vunpack.c.l.b16 %v76
    %v339 = vunpack.c.l.b16 %v77
    %v340 = vunpack.c.l.b16 %v78
    %v341 = vunpack.c.l.b16 %v79
    %v342 = vunpack.c.l.b16 %v80
    %v343 = vunpack.c.l.b16 %v81
    %v344 = vunpack.c.l.b16 %v82
    %v345 = vunpack.c.l.b16 %v83
    %v346 = vunpack.c.l.b16 %v84
    %v347 = vunpack.c.l.b16 %v85
    %v348 = vunpack.c.l.b16 %v86
    %v349 = vunpack.c.l.b16 %v87
    %v350 = vunpack.c.l.b16 %v88
    %v351 = vunpack.c.l.b16 %v89
    %v352 = vunpack.c.l.b16 %v90
    %v353 = vunpack.c.l.b16 %v91
    %v354 = vunpack.c.l.b16 %v92
    %v355 = vunpack.c.l.b16 %v93
    %v356 = vunpack.c.l.b16 %v94
    %v357 = vunpack.c.l.b16 %v95
    %v358 = vunpack.c.l.b16 %v96
    %v359 = vunpack.c.l.b16 %v97
    %v360 = vunpack.c.l.b16 %v98
    %v361 = vunpack.c.l.b16 %v99
    %v362 = vunpack.c.l.b16 %v100
    %v363 = vunpack.c.l.b16 %v101
    %v364 = vunpack.c.l.b16 %v102
    %v365 = vunpack.c.l.b16 %v103
    %v366 = vunpack.c.l.b16 %v104
    %v367 = vunpack.c.l.b16 %v105
    %v368 = vunpack.c.l.b16 %v106
    %v369 = vunpack.c.l.b16 %v107
    %v370 = vunpack.c.l.b16 %v108
    %v371 = vunpack.c.l.b16 %v109
    %v372 = vunpack.c.l.b16 %v110
    %v373 = vunpack.c.l.b16 %v111
    %v374 = vunpack.c.l.b16 %v112
    %v375 = vunpack.c.l.b16 %v113
    %v376 = vunpack.c.l.b16 %v114
    %v377 = vunpack.c.l.b16 %v115
    %v378 = vunpack.c.l.b16 %v116
    %v379 = vpack.c.b16 %v280, %v279
    %v380 = vpack.c.b16 %v282, %v281
    %v381 = vpack.c.b16 %v284, %v283
    %v382 = vpack.c.b16 %v286, %v285
    %v383 = vpack.c.b16 %v288, %v287
    %v384 = vpack.c.b16 %v290, %v289
    %v385 = vpack.c.b16 %v292, %v291
    %v386 = vpack.c.b16 %v294, %v293
    %v387 = vpack.c.b16 %v296, %v295
    %v388 = vpack.c.b16 %v298, %v297
    %v389 = vpack.c.b16 %v300, %v299
    %v390 = vpack.c.b16 %v302, %v301
    %v391 = vpack.c.b16 %v304, %v303
    %v392 = vpack.c.b16 %v306, %v305
    %v393 = vpack.c.b16 %v308, %v307
    %v394 = vpack.c.b16 %v310, %v309
    %v395 = vpack.c.b16 %v312, %v311
    %v396 = vpack.c.b16 %v314, %v313
    %v397 = vpack.c.b16 %v316, %v315
    %v398 = vpack.c.b16 %v318, %v317
    %v399 = vpack.c.b16 %v320, %v319
    %v400 = vpack.c.b16 %v322, %v321
    %v401 = vpack.c.b16 %v324, %v323
    %v402 = vpack.c.b16 %v326, %v325
    %v403 = vpack.c.b16 %v328, %v327
    %v404 = vpack.c.b16 %v330, %v329
    %v405 = vpack.c.b16 %v332, %v331
    %v406 = vpack.c.b16 %v334, %v333
    %v407 = vpack.c.b16 %v336, %v335
    %v408 = vpack.c.b16 %v338, %v337
    %v409 = vpack.c.b16 %v340, %v339
    %v410 = vpack.c.b16 %v342, %v341
    %v411 = vpack.c.b16 %v344, %v343
    %v412 = vpack.c.b16 %v346, %v345
    %v413 = vpack.c.b16 %v348, %v347
    %v414 = vpack.c.b16 %v350, %v349
    %v415 = vpack.c.b16 %v352, %v351
    %v416 = vpack.c.b16 %v354, %v353
    %v417 = vpack.c.b16 %v356, %v355
    %v418 = vpack.c.b16 %v358, %v357
    %v419 = vpack.c.b16 %v360, %v359
    %v420 = vpack.c.b16 %v362, %v361
    %v421 = vpack.c.b16 %v364, %v363
    %v422 = vpack.c.b16 %v366, %v365
    %v423 = vpack.c.b16 %v368, %v367
    %v424 = vpack.c.b16 %v370, %v369
    %v425 = vpack.c.b16 %v372, %v371
    %v426 = vpack.c.b16 %v374, %v373
    %v427 = vpack.c.b16 %v376, %v375
    %v428 = vpack.c.b16 %v378, %v377
    %vm479 = vcmask 261120
    %v481 = vsel %vm479, %v171, 0
    %483 = vmatprep.subr.bf16.mxu0 0
    %484 = vmatpush1.bf16.msra.mxu0 %v379
    %485 = vmatprep.subr.bf16.mxu0 0
    %486 = vmatpush1.bf16.msra.mxu0 %v380
    %487 = vmatprep.subr.bf16.mxu0 0
    %488 = vmatpush1.bf16.msra.mxu0 %v381
    %489 = vmatprep.subr.bf16.mxu0 0
    %490 = vmatpush1.bf16.msra.mxu0 %v382
    %491 = vmatprep.subr.bf16.mxu0 0
    %492 = vmatpush1.bf16.msra.mxu0 %v383
    %493 = vmatprep.subr.bf16.mxu0 0
    %494 = vmatpush1.bf16.msra.mxu0 %v384
    %495 = vmatprep.subr.bf16.mxu0 0
    %496 = vmatpush1.bf16.msra.mxu0 %v385
    %497 = vmatprep.subr.bf16.mxu0 0
    %498 = vmatpush1.bf16.msra.mxu0 %v386
    %499 = vmatprep.subr.bf16.mxu0 0
    %500 = vmatpush1.bf16.msra.mxu0 %v387
    %501 = vmatprep.subr.bf16.mxu0 0
    %502 = vmatpush1.bf16.msra.mxu0 %v388
    %503 = vmatprep.subr.bf16.mxu0 0
    %504 = vmatpush1.bf16.msra.mxu0 %v389
    %505 = vmatprep.subr.bf16.mxu0 0
    %506 = vmatpush1.bf16.msra.mxu0 %v390
    %507 = vmatprep.subr.bf16.mxu0 0
    %508 = vmatpush1.bf16.msra.mxu0 %v391
    %509 = vmatprep.subr.bf16.mxu0 0
    %510 = vmatpush1.bf16.msra.mxu0 %v392
    %511 = vmatprep.subr.bf16.mxu0 0
    %512 = vmatpush1.bf16.msra.mxu0 %v393
    %513 = vmatprep.subr.bf16.mxu0 0
    %514 = vmatpush1.bf16.msra.mxu0 %v394
    %515 = vmatprep.mubr.bf16.mxu0 %v162
    %516 = vmatmul.mubr.bf16.gmra.mrb[0].mxu0 %v148
    %v517 = vpop.f32.mrb[0].mxu0
    %v518 = vadd.f32 %v122, %v517
    %v519 = vpop.f32.mrb[0].mxu0
    %v520 = vpop.f32.mrb[0].mxu0
    %v521 = vpop.f32.mrb[0].mxu0
    %522 = vdwg.mxu0
    %523 = vmatprep.subr.bf16.mxu0 0
    %524 = vmatpush1.bf16.msra.mxu0 %v395
    %525 = vmatprep.subr.bf16.mxu0 0
    %526 = vmatpush1.bf16.msra.mxu0 %v396
    %527 = vmatprep.subr.bf16.mxu0 0
    %528 = vmatpush1.bf16.msra.mxu0 %v397
    %529 = vmatprep.subr.bf16.mxu0 0
    %530 = vmatpush1.bf16.msra.mxu0 %v398
    %531 = vmatprep.subr.bf16.mxu0 0
    %532 = vmatpush1.bf16.msra.mxu0 %v399
    %533 = vmatprep.subr.bf16.mxu0 0
    %534 = vmatpush1.bf16.msra.mxu0 %v400
    %535 = vmatprep.subr.bf16.mxu0 0
    %536 = vmatpush1.bf16.msra.mxu0 %v401
    %537 = vmatprep.subr.bf16.mxu0 0
    %538 = vmatpush1.bf16.msra.mxu0 %v402
    %539 = vmatprep.subr.bf16.mxu0 0
    %540 = vmatpush1.bf16.msra.mxu0 %v403
    %541 = vmatprep.subr.bf16.mxu0 0
    %542 = vmatpush1.bf16.msra.mxu0 %v404
    %543 = vmatprep.subr.bf16.mxu0 0
    %544 = vmatpush1.bf16.msra.mxu0 %v405
    %545 = vmatprep.subr.bf16.mxu0 0
    %546 = vmatpush1.bf16.msra.mxu0 %v406
    %547 = vmatprep.subr.bf16.mxu0 0
    %548 = vmatpush1.bf16.msra.mxu0 %v407
    %549 = vmatprep.subr.bf16.mxu0 0
    %550 = vmatpush1.bf16.msra.mxu0 %v408
    %551 = vmatprep.subr.bf16.mxu0 0
    %552 = vmatpush1.bf16.msra.mxu0 %v409
    %553 = vmatprep.subr.bf16.mxu0 0
    %554 = vmatpush1.bf16.msra.mxu0 %v410
    %555 = vmatprep.mubr.bf16.mxu0 %v172
    %556 = vmatmul.mubr.bf16.gmra.mrb[0].mxu0 %v170
    %v557 = vpop.f32.mrb[0].mxu0
    %v558 = vadd.f32 %v518, %v557
    %v559 = vpop.f32.mrb[0].mxu0
    %v560 = vpop.f32.mrb[0].mxu0
    %v561 = vpop.f32.mrb[0].mxu0
    %562 = vdwg.mxu0
    %563 = vmatprep.subr.bf16.mxu0 0
    %564 = vmatpush1.bf16.msra.mxu0 %v411
    %565 = vmatprep.subr.bf16.mxu0 0
    %566 = vmatpush1.bf16.msra.mxu0 %v412
    %567 = vmatprep.subr.bf16.mxu0 0
    %568 = vmatpush1.bf16.msra.mxu0 %v413
    %569 = vmatprep.subr.bf16.mxu0 0
    %570 = vmatpush1.bf16.msra.mxu0 %v414
    %571 = vmatprep.subr.bf16.mxu0 0
    %572 = vmatpush1.bf16.msra.mxu0 %v415
    %573 = vmatprep.subr.bf16.mxu0 0
    %574 = vmatpush1.bf16.msra.mxu0 %v416
    %575 = vmatprep.subr.bf16.mxu0 0
    %576 = vmatpush1.bf16.msra.mxu0 %v417
    %577 = vmatprep.subr.bf16.mxu0 0
    %578 = vmatpush1.bf16.msra.mxu0 %v418
    %579 = vmatprep.subr.bf16.mxu0 0
    %580 = vmatpush1.bf16.msra.mxu0 %v419
    %581 = vmatprep.subr.bf16.mxu0 0
    %582 = vmatpush1.bf16.msra.mxu0 %v420
    %583 = vmatprep.subr.bf16.mxu0 0
    %584 = vmatpush1.bf16.msra.mxu0 %v421
    %585 = vmatprep.subr.bf16.mxu0 0
    %586 = vmatpush1.bf16.msra.mxu0 %v422
    %587 = vmatprep.subr.bf16.mxu0 0
    %588 = vmatpush1.bf16.msra.mxu0 %v423
    %589 = vmatprep.subr.bf16.mxu0 0
    %590 = vmatpush1.bf16.msra.mxu0 %v424
    %591 = vmatprep.subr.bf16.mxu0 0
    %592 = vmatpush1.bf16.msra.mxu0 %v425
    %593 = vmatprep.subr.bf16.mxu0 0
    %594 = vmatpush1.bf16.msra.mxu0 %v426
    %595 = vmatprep.mubr.bf16.mxu0 %v169
    %596 = vmatmul.mubr.bf16.gmra.mrb[0].mxu0 %v155
    %v597 = vpop.f32.mrb[0].mxu0
    %v598 = vadd.f32 %v558, %v597
    %v599 = vpop.f32.mrb[0].mxu0
    %v600 = vpop.f32.mrb[0].mxu0
    %v601 = vpop.f32.mrb[0].mxu0
    %602 = vdwg.mxu0
    %603 = vmatprep.subr.bf16.mxu0 0
    %604 = vmatpush1.bf16.msra.mxu0 %v427
    %605 = vmatprep.subr.bf16.mxu0 0
    %606 = vmatpush1.bf16.msra.mxu0 %v428
    %607 = vmatprep.subr.bf16.mxu0 0
    %608 = vmatpush1.bf16.msra.mxu0 0
    %609 = vmatprep.subr.bf16.mxu0 0
    %610 = vmatpush1.bf16.msra.mxu0 0
    %611 = vmatprep.subr.bf16.mxu0 0
    %612 = vmatpush1.bf16.msra.mxu0 0
    %613 = vmatprep.subr.bf16.mxu0 0
    %614 = vmatpush1.bf16.msra.mxu0 0
    %615 = vmatprep.subr.bf16.mxu0 0
    %616 = vmatpush1.bf16.msra.mxu0 0
    %617 = vmatprep.subr.bf16.mxu0 0
    %618 = vmatpush1.bf16.msra.mxu0 0
    %619 = vmatprep.subr.bf16.mxu0 0
    %620 = vmatpush1.bf16.msra.mxu0 0
    %621 = vmatprep.subr.bf16.mxu0 0
    %622 = vmatpush1.bf16.msra.mxu0 0
    %623 = vmatprep.subr.bf16.mxu0 0
    %624 = vmatpush1.bf16.msra.mxu0 0
    %625 = vmatprep.subr.bf16.mxu0 0
    %626 = vmatpush1.bf16.msra.mxu0 0
    %627 = vmatprep.subr.bf16.mxu0 0
    %628 = vmatpush1.bf16.msra.mxu0 0
    %629 = vmatprep.subr.bf16.mxu0 0
    %630 = vmatpush1.bf16.msra.mxu0 0
    %631 = vmatprep.subr.bf16.mxu0 0
    %632 = vmatpush1.bf16.msra.mxu0 0
    %633 = vmatprep.subr.bf16.mxu0 0
    %634 = vmatpush1.bf16.msra.mxu0 0
    %635 = vmatprep.mubr.bf16.mxu0 0
    %636 = vmatmul.mubr.bf16.gmra.mrb[0].mxu0 %v481
    %v637 = vpop.f32.mrb[0].mxu0
    %v638 = vadd.f32 %v598, %v637
    %v639 = vpop.f32.mrb[0].mxu0
    %v640 = vpop.f32.mrb[0].mxu0
    %v641 = vpop.f32.mrb[0].mxu0
    %642 = vdwg.mxu0
    %643 = vst [vmem:[#allocation2] sm:$0x3] %v638
    // Predicated region
    $region14: #{_lambda_.5} parent=1 // pred_check
      _
    $region15: #{_lambda_.5} parent=1 // pred_check_branch
      %645 = sbr.rel (0) target = $region17
    $region16: #{_lambda_.5} parent=1 // pred_region
      %s647 = ssub.s32 32, 32
      %648 = vsyncadd [#allocation3], %s647
      %s650 = sshll.u32 [#allocation2], 4
      %s651 = int_to_ptr.vmem [resolvable:$true] %s650
      %653 = dma.vmem_to_hbm [thread:$0]  %s651, 32, %s3, [#allocation3]
    $region17: #{_lambda_.5} parent=1 // pred_fallthru
      _
    // Predicated region
    $region18: #{_lambda_.5} parent=1 // pred_check
      _
    $region19: #{_lambda_.5} parent=1 // pred_check_branch
      %655 = sbr.rel (0) target = $region21
    $region20: #{_lambda_.5} parent=1 // pred_region
      %656 = dma.done [#allocation3], 32
    $region21: #{_lambda_.5} parent=1 // pred_fallthru
      _
    %657 = vsyncpa [#allocation3], 1

</llo_original>
